<compile_context>
chip_gen: v7x
topology: tpu7x:2x2x1
jax: 0.10.0
libtpu: 0.0.40
codegen_flags: <defaults>
</compile_context>

<pallas_src>
import functools

import jax
import jax.numpy as jnp
from jax.experimental import pallas as pl
from jax.experimental.pallas import tpu as pltpu


_LANE = 128                     # pad *interior* feature dims to multiples of this
_SUBLANE = 8                    # batch tiles are multiples of this
_MIN_GRID_STEPS = 4             # keep >= ~4 pipelined batch tiles when batch allows
_DEFAULT_VMEM_CAP = 64 << 20    # conservative (v7x-sized) fallback capacity


def _round_up(n, m):
    return ((n + m - 1) // m) * m


def _vmem_budget_bytes():
    """Generation-aware usable-VMEM budget (~75% of physical capacity)."""
    cap = _DEFAULT_VMEM_CAP
    try:
        info = pltpu.get_tpu_info()
        cap = getattr(info, "vmem_capacity_bytes", None) or cap
    except Exception:
        pass
    # ~96 MiB on v5e/v6e (128 MiB physical), ~48 MiB on v7x (64 MiB physical).
    return int(cap * 3 // 4)


def _mlp_kernel(*refs, num_layers):
    # refs = (x_ref, w0_ref, b0_ref, ..., w{L-1}_ref, b{L-1}_ref, o_ref)
    x_ref = refs[0]
    o_ref = refs[1 + 2 * num_layers]

    h = x_ref[...]
    for i in range(num_layers):                 # static unroll over layers
        w = refs[1 + 2 * i][...]
        b = refs[2 + 2 * i][...]
        # Cast to the weight dtype so bf16 params use the bf16 MXU path;
        # accumulation, bias add and ReLU stay in f32 (v5e VPU has no bf16).
        h = jnp.dot(h.astype(w.dtype), w, preferred_element_type=jnp.float32)
        h = h + b.astype(jnp.float32)
        if i < num_layers - 1:
            h = jnp.maximum(h, 0.0)             # ReLU between all but the last
    o_ref[...] = h.astype(o_ref.dtype)


def init_mlp_params(key, input_dim, dimensions, dtype=jnp.float32):
    """Deterministic params mirroring nn.Linear; weight stored as (din, dout)."""
    params = []
    dims = [input_dim] + list(dimensions)
    for din, dout in zip(dims[:-1], dims[1:]):
        kw, kb, key = jax.random.split(key, 3)
        bound = 1.0 / jnp.sqrt(jnp.asarray(din, dtype))
        w = jax.random.uniform(kw, (din, dout), dtype, -bound, bound)
        b = jax.random.uniform(kb, (dout,), dtype, -bound, bound)
        params.append((w, b))
    return params


def pad_mlp_params(params):
    """Zero-pad only the *interior* feature dims up to multiples of 128.

    The first layer keeps the true input_dim (x streams unpadded from HBM) and
    the last layer keeps the true out_dim (the kernel writes the narrow output
    directly).  Zero weight rows/cols + zero bias pad + relu(0)=0 keep the
    padding mathematically inert.
    """
    n = len(params)
    padded = []
    for i, (w, b) in enumerate(params):
        din, dout = w.shape
        dinp = din if i == 0 else _round_up(din, _LANE)
        doutp = dout if i == n - 1 else _round_up(dout, _LANE)
        wp = jnp.pad(w, ((0, dinp - din), (0, doutp - dout)))
        bp = jnp.pad(b.reshape(1, dout), ((0, 0), (0, doutp - dout)))
        padded.append((wp, bp))
    return padded


def _vmem_footprint_bytes(tb, din, out_dim, padded_params, x_itemsize, weight_bufs):
    """Conservative VMEM estimate: streamed tiles, resident params, live temps."""
    bytes_ = 2 * tb * din * x_itemsize           # double-buffered x tiles
    bytes_ += 2 * tb * out_dim * x_itemsize      # double-buffered output tiles
    widths = [din, out_dim]
    for wp, bp in padded_params:
        bytes_ += weight_bufs * (wp.size * wp.dtype.itemsize
                                 + bp.size * bp.dtype.itemsize)
        widths.append(wp.shape[1])
    bytes_ += 2 * tb * max(widths) * 4           # ~2 live f32 intermediates
    return bytes_


def mlp_forward_pallas(x, padded_params, *, block_batch=512,
                       single_buffer_weights=True,
                       activation="relu", dropout=0.0):
    """Fused MLP forward: one pallas_call for the whole layer stack."""
    # TODO(synk): dropout is a no-op (eval-mode semantics); only 'relu'
    # activation is implemented.
    assert activation == "relu"

    B, din = x.shape
    num_layers = len(padded_params)
    assert padded_params[0][0].shape[0] == din
    out_dim = padded_params[-1][0].shape[1]
    itemsize = jnp.dtype(x.dtype).itemsize
    budget = _vmem_budget_bytes()

    # Batch tile: as large as block_batch allows, but keep >= ~4 grid steps for
    # pipelining (and >= 2 per TensorCore on v7x), then shrink until the
    # working set fits the generation-aware VMEM budget.
    TB = min(block_batch, _round_up(B, _SUBLANE))
    if pl.cdiv(B, TB) < _MIN_GRID_STEPS:
        TB = min(TB, max(_SUBLANE,
                         _round_up(pl.cdiv(B, _MIN_GRID_STEPS), _SUBLANE)))
    weight_bufs = 1 if single_buffer_weights else 2
    while TB > _SUBLANE and _vmem_footprint_bytes(
            TB, din, out_dim, padded_params, itemsize, weight_bufs) > budget:
        TB = max(_SUBLANE, _round_up(TB // 2, _SUBLANE))
    vmem_bytes = _vmem_footprint_bytes(TB, din, out_dim, padded_params,
                                       itemsize, weight_bufs)
    if vmem_bytes > budget:
        # TODO(synk): add a (TM, TN, TK)-tiled fallback (f32 VMEM accumulator,
        # reduction axis last, 256-granule N/K on v6e/v7x) for layer widths
        # whose weights do not fit VMEM.
        raise ValueError(
            f"fused-MLP working set ~{vmem_bytes} B exceeds VMEM budget "
            f"{budget} B; layer widths too large for the single-shot kernel.")

    Bp = _round_up(B, TB)
    xp = x if Bp == B else jnp.pad(x, ((0, Bp - B), (0, 0)))
    grid = Bp // TB

    # Scoped-VMEM limit actually handed to Mosaic: footprint + headroom,
    # clamped to the physical budget (floor keeps it above any default need).
    vmem_limit = int(min(budget, max(vmem_bytes + (8 << 20), 32 << 20)))

    kernel = functools.partial(_mlp_kernel, num_layers=num_layers)

    def build_and_call(single_buffer):
        # Resident weights/biases: constant block index across all batch tiles;
        # single-buffer them so they don't waste double-buffer VMEM.
        res_kw = {"pipeline_mode": pl.Buffered(1)} if single_buffer else {}
        in_specs = [pl.BlockSpec((TB, din), lambda i: (i, 0))]
        operands = [xp]
        for wp, bp in padded_params:
            operands.append(wp)
            operands.append(bp)
            in_specs.append(pl.BlockSpec(wp.shape, lambda i: (0, 0), **res_kw))
            in_specs.append(pl.BlockSpec(bp.shape, lambda i: (0, 0), **res_kw))
        return pl.pallas_call(
            kernel,
            out_shape=jax.ShapeDtypeStruct((Bp, out_dim), x.dtype),
            grid_spec=pltpu.PrefetchScalarGridSpec(
                num_scalar_prefetch=0,
                grid=(grid,),
                in_specs=in_specs,
                # True out_dim width: no padded writeback, no post-kernel slice.
                out_specs=pl.BlockSpec((TB, out_dim), lambda i: (i, 0)),
            ),
            compiler_params=pltpu.CompilerParams(
                dimension_semantics=("parallel",),   # shard batch tiles (v7x 2 TCs)
                vmem_limit_bytes=vmem_limit,
            ),
        )(*operands)

    if single_buffer_weights:
        try:
            yp = jax.block_until_ready(build_and_call(True))
        except Exception:
            # TODO(synk): drop this fallback once pl.Buffered(1) single-buffering
            # is accepted by every deployed jax/Mosaic version.
            yp = build_and_call(False)
    else:
        yp = build_and_call(False)

    return yp if Bp == B else yp[:B]


def mlp_reference(x, params):
    n = len(params)
    for i, (w, b) in enumerate(params):
        x = x @ w + b
        if i < n - 1:
            x = jnp.maximum(x, 0.0)
    return x


if __name__ == "__main__":
    key = jax.random.PRNGKey(0)
    kx, kp = jax.random.split(key)

    batch = 2048                     # 4 pipelined 512-row batch tiles
    input_dim = 32
    dimensions = [64, 32, 16]        # MLP(input_dim=32, dimensions=[64, 32, 16])

    x = jax.random.normal(kx, (batch, input_dim), jnp.float32)
    params = init_mlp_params(kp, input_dim, dimensions)
    padded_params = pad_mlp_params(params)   # pad once at setup, not per call

    out = mlp_forward_pallas(x, padded_params, block_batch=512)
    out = jax.block_until_ready(out)

    ref = mlp_reference(x, params)
    assert out.shape == (batch, dimensions[-1])
    assert jnp.allclose(out, ref, atol=2e-5, rtol=2e-5), float(
        jnp.max(jnp.abs(out - ref)))

    print("KERNEL_OK")
</pallas_src>

<mosaic_0001>
module attributes {stable_mosaic.version = 11 : i64} {
  func.func @_mlp_kernel(%arg0: i32, %arg1: memref<512x32xf32, #tpu.memory_space<vmem>>, %arg2: memref<32x128xf32, #tpu.memory_space<vmem>>, %arg3: memref<1x128xf32, #tpu.memory_space<vmem>>, %arg4: memref<128x128xf32, #tpu.memory_space<vmem>>, %arg5: memref<1x128xf32, #tpu.memory_space<vmem>>, %arg6: memref<128x16xf32, #tpu.memory_space<vmem>>, %arg7: memref<1x16xf32, #tpu.memory_space<vmem>>, %arg8: memref<512x16xf32, #tpu.memory_space<vmem>>) attributes {dimension_semantics = [#tpu.dimension_semantics<parallel>], iteration_bounds = array<i64: 4>, scalar_prefetch = 0 : i64, scratch_operands = 0 : i64, tpu.core_type = #tpu.core_type<tc>, window_params = [{transform_indices = @transform_0, window_bounds = array<i64: 512, 32>}, {pipeline_mode = #tpu.pipeline_mode<synchronous>, transform_indices = @transform_1, window_bounds = array<i64: 32, 128>}, {pipeline_mode = #tpu.pipeline_mode<synchronous>, transform_indices = @transform_2, window_bounds = array<i64: 1, 128>}, {pipeline_mode = #tpu.pipeline_mode<synchronous>, transform_indices = @transform_3, window_bounds = array<i64: 128, 128>}, {pipeline_mode = #tpu.pipeline_mode<synchronous>, transform_indices = @transform_4, window_bounds = array<i64: 1, 128>}, {pipeline_mode = #tpu.pipeline_mode<synchronous>, transform_indices = @transform_5, window_bounds = array<i64: 128, 16>}, {pipeline_mode = #tpu.pipeline_mode<synchronous>, transform_indices = @transform_6, window_bounds = array<i64: 1, 16>}, {transform_indices = @transform_7, window_bounds = array<i64: 512, 16>}]} {
    %c0 = arith.constant 0 : index
    %c0_0 = arith.constant 0 : index
    %0 = vector.load %arg1[%c0, %c0_0] : memref<512x32xf32, #tpu.memory_space<vmem>>, vector<512x32xf32>
    %c0_1 = arith.constant 0 : index
    %c0_2 = arith.constant 0 : index
    %1 = vector.load %arg2[%c0_1, %c0_2] : memref<32x128xf32, #tpu.memory_space<vmem>>, vector<32x128xf32>
    %c0_3 = arith.constant 0 : index
    %c0_4 = arith.constant 0 : index
    %2 = vector.load %arg3[%c0_3, %c0_4] : memref<1x128xf32, #tpu.memory_space<vmem>>, vector<1x128xf32>
    %cst = arith.constant dense<0.000000e+00> : vector<512x128xf32>
    %3 = tpu.matmul %0, %1, %cst {dimension_numbers = #tpu.dot_dimension_numbers<[1], [0], [0], [1], [0, 0, 1, 1], [], []>} : vector<512x32xf32>, vector<32x128xf32>, vector<512x128xf32> -> vector<512x128xf32>
    %4 = vector.broadcast %2 : vector<1x128xf32> to vector<512x128xf32>
    %5 = arith.addf %3, %4 : vector<512x128xf32>
    %cst_5 = arith.constant 0.000000e+00 : f32
    %6 = vector.broadcast %cst_5 : f32 to vector<512x128xf32>
    %7 = arith.maximumf %5, %6 : vector<512x128xf32>
    %c0_6 = arith.constant 0 : index
    %c0_7 = arith.constant 0 : index
    %8 = vector.load %arg4[%c0_6, %c0_7] : memref<128x128xf32, #tpu.memory_space<vmem>>, vector<128x128xf32>
    %c0_8 = arith.constant 0 : index
    %c0_9 = arith.constant 0 : index
    %9 = vector.load %arg5[%c0_8, %c0_9] : memref<1x128xf32, #tpu.memory_space<vmem>>, vector<1x128xf32>
    %cst_10 = arith.constant dense<0.000000e+00> : vector<512x128xf32>
    %10 = tpu.matmul %7, %8, %cst_10 {dimension_numbers = #tpu.dot_dimension_numbers<[1], [0], [0], [1], [0, 0, 1, 1], [], []>} : vector<512x128xf32>, vector<128x128xf32>, vector<512x128xf32> -> vector<512x128xf32>
    %11 = vector.broadcast %9 : vector<1x128xf32> to vector<512x128xf32>
    %12 = arith.addf %10, %11 : vector<512x128xf32>
    %cst_11 = arith.constant 0.000000e+00 : f32
    %13 = vector.broadcast %cst_11 : f32 to vector<512x128xf32>
    %14 = arith.maximumf %12, %13 : vector<512x128xf32>
    %c0_12 = arith.constant 0 : index
    %c0_13 = arith.constant 0 : index
    %15 = vector.load %arg6[%c0_12, %c0_13] : memref<128x16xf32, #tpu.memory_space<vmem>>, vector<128x16xf32>
    %c0_14 = arith.constant 0 : index
    %c0_15 = arith.constant 0 : index
    %16 = vector.load %arg7[%c0_14, %c0_15] : memref<1x16xf32, #tpu.memory_space<vmem>>, vector<1x16xf32>
    %cst_16 = arith.constant dense<0.000000e+00> : vector<512x16xf32>
    %17 = tpu.matmul %14, %15, %cst_16 {dimension_numbers = #tpu.dot_dimension_numbers<[1], [0], [0], [1], [0, 0, 1, 1], [], []>} : vector<512x128xf32>, vector<128x16xf32>, vector<512x16xf32> -> vector<512x16xf32>
    %18 = vector.broadcast %16 : vector<1x16xf32> to vector<512x16xf32>
    %19 = arith.addf %17, %18 : vector<512x16xf32>
    %c0_17 = arith.constant 0 : index
    %c0_18 = arith.constant 0 : index
    %20 = vector.load %arg8[%c0_17, %c0_18] : memref<512x16xf32, #tpu.memory_space<vmem>>, vector<512x16xf32>
    tpu.vector_store %arg8[%c0_17, %c0_18], %19 {strides = array<i32>} : memref<512x16xf32, #tpu.memory_space<vmem>>, vector<512x16xf32>,
    return
  }
  func.func @transform_0(%arg0: i32) -> (i32, i32) {
    %c0_i32 = arith.constant 0 : i32
    %c0_i32_0 = arith.constant 0 : i32
    return %arg0, %c0_i32 : i32, i32
  }
  func.func @transform_1(%arg0: i32) -> (i32, i32) {
    %c0_i32 = arith.constant 0 : i32
    %c0_i32_0 = arith.constant 0 : i32
    %c0_i32_1 = arith.constant 0 : i32
    return %c0_i32, %c0_i32_0 : i32, i32
  }
  func.func @transform_2(%arg0: i32) -> (i32, i32) {
    %c0_i32 = arith.constant 0 : i32
    %c0_i32_0 = arith.constant 0 : i32
    %c0_i32_1 = arith.constant 0 : i32
    return %c0_i32, %c0_i32_0 : i32, i32
  }
  func.func @transform_3(%arg0: i32) -> (i32, i32) {
    %c0_i32 = arith.constant 0 : i32
    %c0_i32_0 = arith.constant 0 : i32
    %c0_i32_1 = arith.constant 0 : i32
    return %c0_i32, %c0_i32_0 : i32, i32
  }
  func.func @transform_4(%arg0: i32) -> (i32, i32) {
    %c0_i32 = arith.constant 0 : i32
    %c0_i32_0 = arith.constant 0 : i32
    %c0_i32_1 = arith.constant 0 : i32
    return %c0_i32, %c0_i32_0 : i32, i32
  }
  func.func @transform_5(%arg0: i32) -> (i32, i32) {
    %c0_i32 = arith.constant 0 : i32
    %c0_i32_0 = arith.constant 0 : i32
    %c0_i32_1 = arith.constant 0 : i32
    return %c0_i32, %c0_i32_0 : i32, i32
  }
  func.func @transform_6(%arg0: i32) -> (i32, i32) {
    %c0_i32 = arith.constant 0 : i32
    %c0_i32_0 = arith.constant 0 : i32
    %c0_i32_1 = arith.constant 0 : i32
    return %c0_i32, %c0_i32_0 : i32, i32
  }
  func.func @transform_7(%arg0: i32) -> (i32, i32) {
    %c0_i32 = arith.constant 0 : i32
    %c0_i32_0 = arith.constant 0 : i32
    return %arg0, %c0_i32 : i32, i32
  }
}

module attributes {stable_mosaic.version = 11 : i64} {
  func.func @_mlp_kernel(%arg0: i32, %arg1: memref<512x32xf32, #tpu.memory_space<vmem>>, %arg2: memref<32x128xf32, #tpu.memory_space<vmem>>, %arg3: memref<1x128xf32, #tpu.memory_space<vmem>>, %arg4: memref<128x128xf32, #tpu.memory_space<vmem>>, %arg5: memref<1x128xf32, #tpu.memory_space<vmem>>, %arg6: memref<128x16xf32, #tpu.memory_space<vmem>>, %arg7: memref<1x16xf32, #tpu.memory_space<vmem>>, %arg8: memref<512x16xf32, #tpu.memory_space<vmem>>) attributes {dimension_semantics = [#tpu.dimension_semantics<parallel>], iteration_bounds = array<i64: 4>, scalar_prefetch = 0 : i64, scratch_operands = 0 : i64, tpu.core_type = #tpu.core_type<tc>, window_params = [{transform_indices = @transform_0, window_bounds = array<i64: 512, 32>}, {pipeline_mode = #tpu.pipeline_mode<synchronous>, transform_indices = @transform_1, window_bounds = array<i64: 32, 128>}, {pipeline_mode = #tpu.pipeline_mode<synchronous>, transform_indices = @transform_2, window_bounds = array<i64: 1, 128>}, {pipeline_mode = #tpu.pipeline_mode<synchronous>, transform_indices = @transform_3, window_bounds = array<i64: 128, 128>}, {pipeline_mode = #tpu.pipeline_mode<synchronous>, transform_indices = @transform_4, window_bounds = array<i64: 1, 128>}, {pipeline_mode = #tpu.pipeline_mode<synchronous>, transform_indices = @transform_5, window_bounds = array<i64: 128, 16>}, {pipeline_mode = #tpu.pipeline_mode<synchronous>, transform_indices = @transform_6, window_bounds = array<i64: 1, 16>}, {transform_indices = @transform_7, window_bounds = array<i64: 512, 16>}]} {
    %c0 = arith.constant 0 : index
    %c0_0 = arith.constant 0 : index
    %0 = vector.load %arg1[%c0, %c0_0] : memref<512x32xf32, #tpu.memory_space<vmem>>, vector<512x32xf32>
    %c0_1 = arith.constant 0 : index
    %c0_2 = arith.constant 0 : index
    %1 = vector.load %arg2[%c0_1, %c0_2] : memref<32x128xf32, #tpu.memory_space<vmem>>, vector<32x128xf32>
    %c0_3 = arith.constant 0 : index
    %c0_4 = arith.constant 0 : index
    %2 = vector.load %arg3[%c0_3, %c0_4] : memref<1x128xf32, #tpu.memory_space<vmem>>, vector<1x128xf32>
    %cst = arith.constant dense<0.000000e+00> : vector<512x128xf32>
    %3 = tpu.matmul %0, %1, %cst {dimension_numbers = #tpu.dot_dimension_numbers<[1], [0], [0], [1], [0, 0, 1, 1], [], []>} : vector<512x32xf32>, vector<32x128xf32>, vector<512x128xf32> -> vector<512x128xf32>
    %4 = vector.broadcast %2 : vector<1x128xf32> to vector<512x128xf32>
    %5 = arith.addf %3, %4 : vector<512x128xf32>
    %cst_5 = arith.constant 0.000000e+00 : f32
    %6 = vector.broadcast %cst_5 : f32 to vector<512x128xf32>
    %7 = arith.maximumf %5, %6 : vector<512x128xf32>
    %c0_6 = arith.constant 0 : index
    %c0_7 = arith.constant 0 : index
    %8 = vector.load %arg4[%c0_6, %c0_7] : memref<128x128xf32, #tpu.memory_space<vmem>>, vector<128x128xf32>
    %c0_8 = arith.constant 0 : index
    %c0_9 = arith.constant 0 : index
    %9 = vector.load %arg5[%c0_8, %c0_9] : memref<1x128xf32, #tpu.memory_space<vmem>>, vector<1x128xf32>
    %cst_10 = arith.constant dense<0.000000e+00> : vector<512x128xf32>
    %10 = tpu.matmul %7, %8, %cst_10 {dimension_numbers = #tpu.dot_dimension_numbers<[1], [0], [0], [1], [0, 0, 1, 1], [], []>} : vector<512x128xf32>, vector<128x128xf32>, vector<512x128xf32> -> vector<512x128xf32>
    %11 = vector.broadcast %9 : vector<1x128xf32> to vector<512x128xf32>
    %12 = arith.addf %10, %11 : vector<512x128xf32>
    %cst_11 = arith.constant 0.000000e+00 : f32
    %13 = vector.broadcast %cst_11 : f32 to vector<512x128xf32>
    %14 = arith.maximumf %12, %13 : vector<512x128xf32>
    %c0_12 = arith.constant 0 : index
    %c0_13 = arith.constant 0 : index
    %15 = vector.load %arg6[%c0_12, %c0_13] : memref<128x16xf32, #tpu.memory_space<vmem>>, vector<128x16xf32>
    %c0_14 = arith.constant 0 : index
    %c0_15 = arith.constant 0 : index
    %16 = vector.load %arg7[%c0_14, %c0_15] : memref<1x16xf32, #tpu.memory_space<vmem>>, vector<1x16xf32>
    %cst_16 = arith.constant dense<0.000000e+00> : vector<512x16xf32>
    %17 = tpu.matmul %14, %15, %cst_16 {dimension_numbers = #tpu.dot_dimension_numbers<[1], [0], [0], [1], [0, 0, 1, 1], [], []>} : vector<512x128xf32>, vector<128x16xf32>, vector<512x16xf32> -> vector<512x16xf32>
    %18 = vector.broadcast %16 : vector<1x16xf32> to vector<512x16xf32>
    %19 = arith.addf %17, %18 : vector<512x16xf32>
    %c0_17 = arith.constant 0 : index
    %c0_18 = arith.constant 0 : index
    %20 = vector.load %arg8[%c0_17, %c0_18] : memref<512x16xf32, #tpu.memory_space<vmem>>, vector<512x16xf32>
    tpu.vector_store %arg8[%c0_17, %c0_18], %19 {strides = array<i32>} : memref<512x16xf32, #tpu.memory_space<vmem>>, vector<512x16xf32>,
    return
  }
  func.func @transform_0(%arg0: i32) -> (i32, i32) {
    %c0_i32 = arith.constant 0 : i32
    %c0_i32_0 = arith.constant 0 : i32
    return %arg0, %c0_i32 : i32, i32
  }
  func.func @transform_1(%arg0: i32) -> (i32, i32) {
    %c0_i32 = arith.constant 0 : i32
    %c0_i32_0 = arith.constant 0 : i32
    %c0_i32_1 = arith.constant 0 : i32
    return %c0_i32, %c0_i32_0 : i32, i32
  }
  func.func @transform_2(%arg0: i32) -> (i32, i32) {
    %c0_i32 = arith.constant 0 : i32
    %c0_i32_0 = arith.constant 0 : i32
    %c0_i32_1 = arith.constant 0 : i32
    return %c0_i32, %c0_i32_0 : i32, i32
  }
  func.func @transform_3(%arg0: i32) -> (i32, i32) {
    %c0_i32 = arith.constant 0 : i32
    %c0_i32_0 = arith.constant 0 : i32
    %c0_i32_1 = arith.constant 0 : i32
    return %c0_i32, %c0_i32_0 : i32, i32
  }
  func.func @transform_4(%arg0: i32) -> (i32, i32) {
    %c0_i32 = arith.constant 0 : i32
    %c0_i32_0 = arith.constant 0 : i32
    %c0_i32_1 = arith.constant 0 : i32
    return %c0_i32, %c0_i32_0 : i32, i32
  }
  func.func @transform_5(%arg0: i32) -> (i32, i32) {
    %c0_i32 = arith.constant 0 : i32
    %c0_i32_0 = arith.constant 0 : i32
    %c0_i32_1 = arith.constant 0 : i32
    return %c0_i32, %c0_i32_0 : i32, i32
  }
  func.func @transform_6(%arg0: i32) -> (i32, i32) {
    %c0_i32 = arith.constant 0 : i32
    %c0_i32_0 = arith.constant 0 : i32
    %c0_i32_1 = arith.constant 0 : i32
    return %c0_i32, %c0_i32_0 : i32, i32
  }
  func.func @transform_7(%arg0: i32) -> (i32, i32) {
    %c0_i32 = arith.constant 0 : i32
    %c0_i32_0 = arith.constant 0 : i32
    return %arg0, %c0_i32 : i32, i32
  }
}

</mosaic_0001>

<llo_original>
// kernel: tpu_custom_call.1
$region0: #{tpu_custom_call.1}
  #allocation0 [shape = 'u32[]', space=smem, size = 0x4, offset = 0x4, fixed_abs, tag = 'smem constant byte address 0x4 - core index']
  #allocation1 [shape = 'u32[144,128]{1,0:T(1,128)}', space=vmem, size = 0x12000, scoped, tag = 'internal scratch']
  %s0 = inlined_call_operand.vmem [shape: f32[2048,32], index: 0, kind: input, shape index: {}]
  %s1 = inlined_call_operand.vmem [shape: f32[32,128], index: 1, kind: input, shape index: {}]
  %s2 = inlined_call_operand.vmem [shape: f32[1,128], index: 2, kind: input, shape index: {}]
  %s3 = inlined_call_operand.vmem [shape: f32[128,128], index: 3, kind: input, shape index: {}]
  %s4 = inlined_call_operand.vmem [shape: f32[1,128], index: 4, kind: input, shape index: {}]
  %s5 = inlined_call_operand.vmem [shape: f32[128,16], index: 5, kind: input, shape index: {}]
  %s6 = inlined_call_operand.vmem [shape: f32[1,16], index: 6, kind: input, shape index: {}]
  %s7 = inlined_call_operand.vmem [shape: f32[2048,16], index: 7, kind: output, shape index: {}]
  %s8 = sld [smem:[#allocation0]]
  $region61: #{tpu_custom_call.1} parent=0
    _
  %s10 = ssub.s32 1, %s8
  %s11 = scalar_select 0, %s10, %s8
  loop: start=0, step=1, limit=6
  $region2: #{tpu_custom_call.1} parent=0 // loop_pre_header
    _
  $region3: #{tpu_custom_call.1} parent=0 // loop_header
    %s13 = sphi 0, %s17
    %p14 = scmp.ge.s32.totalorder %s13, 6
    %s23 = sphi 0, %s25
    %s26 = sphi 0, %s23
    %s27 = sphi 0, %s26
    %s43 = sphi 0, %s27
    %s47 = sphi 0, %s47
    %s49 = sphi 0, %s47
    %s50 = sphi 0, %s49
    %s64 = sphi 0, %s50
    %s68 = sphi 0, %s68
    %s70 = sphi 0, %s68
    %s71 = sphi 0, %s70
    %s85 = sphi 0, %s71
    %s89 = sphi 0, %s89
    %s91 = sphi 0, %s89
    %s92 = sphi 0, %s91
    %s106 = sphi 0, %s92
    %s110 = sphi 0, %s110
    %s112 = sphi 0, %s110
    %s113 = sphi 0, %s112
    %s127 = sphi 0, %s113
    %s131 = sphi 0, %s131
    %s133 = sphi 0, %s131
    %s134 = sphi 0, %s133
    %s148 = sphi 0, %s134
    %s152 = sphi 0, %s152
    %s154 = sphi 0, %s152
    %s155 = sphi 0, %s154
    %s169 = sphi 0, %s155
    %s175 = sphi 0, %s177
    %s178 = sphi 0, %s175
    %s179 = sphi 0, %s178
    %s195 = sphi 0, %s179
  $region4: #{tpu_custom_call.1} parent=0 // loop_header_branch
    %16 = sbr.rel (%p14) target = $region8
  $region5: #{tpu_custom_call.1} parent=0 // loop_body
    %s18 = ssub.s32 %s13, 1
    %s19 = ssub.s32 %s13, 2
    %s20 = sadd.s32 %s13, 1
    %s21 = ssub.s32 %s13, %s20
    %p22 = scmp.eq.s32.totalorder %s21, 0
    %s24 = sadd.s32 %s23, 1
    %s25 = scalar_select %p22, %s23, %s24
    %p28 = pneg %p22
    %p29 = scmp.eq.s32.totalorder %s13, 3
    %p30 = por %p28, %p29
    %p31 = scmp.ne.s32.totalorder %s23, %s26
    %p32 = scmp.eq.s32.totalorder %s13, 0
    %p33 = por %p31, %p32
    %p34 = scmp.ne.s32.totalorder %s23, %s26
    %p35 = scmp.eq.s32.totalorder %s18, 3
    %p36 = por %p34, %p35
    %p37 = scmp.ne.s32.totalorder %s26, %s27
    %p38 = scmp.eq.s32.totalorder %s18, 0
    %p39 = por %p37, %p38
    %p40 = scmp.ne.s32.totalorder %s26, %s27
    %p41 = scmp.eq.s32.totalorder %s19, 3
    %p42 = por %p40, %p41
    %p44 = scmp.ne.s32.totalorder %s27, %s43
    %p45 = scmp.eq.s32.totalorder %s19, 0
    %p46 = por %p44, %p45
    %s48 = sadd.s32 %s47, 1
    %p51 = scmp.eq.s32.totalorder %s13, 3
    %p52 = scmp.ne.s32.totalorder %s47, %s49
    %p53 = scmp.eq.s32.totalorder %s13, 0
    %p54 = por %p52, %p53
    %p55 = scmp.ne.s32.totalorder %s47, %s49
    %p56 = scmp.eq.s32.totalorder %s18, 3
    %p57 = por %p55, %p56
    %p58 = scmp.ne.s32.totalorder %s49, %s50
    %p59 = scmp.eq.s32.totalorder %s18, 0
    %p60 = por %p58, %p59
    %p61 = scmp.ne.s32.totalorder %s49, %s50
    %p62 = scmp.eq.s32.totalorder %s19, 3
    %p63 = por %p61, %p62
    %p65 = scmp.ne.s32.totalorder %s50, %s64
    %p66 = scmp.eq.s32.totalorder %s19, 0
    %p67 = por %p65, %p66
    %s69 = sadd.s32 %s68, 1
    %p72 = scmp.eq.s32.totalorder %s13, 3
    %p73 = scmp.ne.s32.totalorder %s68, %s70
    %p74 = scmp.eq.s32.totalorder %s13, 0
    %p75 = por %p73, %p74
    %p76 = scmp.ne.s32.totalorder %s68, %s70
    %p77 = scmp.eq.s32.totalorder %s18, 3
    %p78 = por %p76, %p77
    %p79 = scmp.ne.s32.totalorder %s70, %s71
    %p80 = scmp.eq.s32.totalorder %s18, 0
    %p81 = por %p79, %p80
    %p82 = scmp.ne.s32.totalorder %s70, %s71
    %p83 = scmp.eq.s32.totalorder %s19, 3
    %p84 = por %p82, %p83
    %p86 = scmp.ne.s32.totalorder %s71, %s85
    %p87 = scmp.eq.s32.totalorder %s19, 0
    %p88 = por %p86, %p87
    %s90 = sadd.s32 %s89, 1
    %p93 = scmp.eq.s32.totalorder %s13, 3
    %p94 = scmp.ne.s32.totalorder %s89, %s91
    %p95 = scmp.eq.s32.totalorder %s13, 0
    %p96 = por %p94, %p95
    %p97 = scmp.ne.s32.totalorder %s89, %s91
    %p98 = scmp.eq.s32.totalorder %s18, 3
    %p99 = por %p97, %p98
    %p100 = scmp.ne.s32.totalorder %s91, %s92
    %p101 = scmp.eq.s32.totalorder %s18, 0
    %p102 = por %p100, %p101
    %p103 = scmp.ne.s32.totalorder %s91, %s92
    %p104 = scmp.eq.s32.totalorder %s19, 3
    %p105 = por %p103, %p104
    %p107 = scmp.ne.s32.totalorder %s92, %s106
    %p108 = scmp.eq.s32.totalorder %s19, 0
    %p109 = por %p107, %p108
    %s111 = sadd.s32 %s110, 1
    %p114 = scmp.eq.s32.totalorder %s13, 3
    %p115 = scmp.ne.s32.totalorder %s110, %s112
    %p116 = scmp.eq.s32.totalorder %s13, 0
    %p117 = por %p115, %p116
    %p118 = scmp.ne.s32.totalorder %s110, %s112
    %p119 = scmp.eq.s32.totalorder %s18, 3
    %p120 = por %p118, %p119
    %p121 = scmp.ne.s32.totalorder %s112, %s113
    %p122 = scmp.eq.s32.totalorder %s18, 0
    %p123 = por %p121, %p122
    %p124 = scmp.ne.s32.totalorder %s112, %s113
    %p125 = scmp.eq.s32.totalorder %s19, 3
    %p126 = por %p124, %p125
    %p128 = scmp.ne.s32.totalorder %s113, %s127
    %p129 = scmp.eq.s32.totalorder %s19, 0
    %p130 = por %p128, %p129
    %s132 = sadd.s32 %s131, 1
    %p135 = scmp.eq.s32.totalorder %s13, 3
    %p136 = scmp.ne.s32.totalorder %s131, %s133
    %p137 = scmp.eq.s32.totalorder %s13, 0
    %p138 = por %p136, %p137
    %p139 = scmp.ne.s32.totalorder %s131, %s133
    %p140 = scmp.eq.s32.totalorder %s18, 3
    %p141 = por %p139, %p140
    %p142 = scmp.ne.s32.totalorder %s133, %s134
    %p143 = scmp.eq.s32.totalorder %s18, 0
    %p144 = por %p142, %p143
    %p145 = scmp.ne.s32.totalorder %s133, %s134
    %p146 = scmp.eq.s32.totalorder %s19, 3
    %p147 = por %p145, %p146
    %p149 = scmp.ne.s32.totalorder %s134, %s148
    %p150 = scmp.eq.s32.totalorder %s19, 0
    %p151 = por %p149, %p150
    %s153 = sadd.s32 %s152, 1
    %p156 = scmp.eq.s32.totalorder %s13, 3
    %p157 = scmp.ne.s32.totalorder %s152, %s154
    %p158 = scmp.eq.s32.totalorder %s13, 0
    %p159 = por %p157, %p158
    %p160 = scmp.ne.s32.totalorder %s152, %s154
    %p161 = scmp.eq.s32.totalorder %s18, 3
    %p162 = por %p160, %p161
    %p163 = scmp.ne.s32.totalorder %s154, %s155
    %p164 = scmp.eq.s32.totalorder %s18, 0
    %p165 = por %p163, %p164
    %p166 = scmp.ne.s32.totalorder %s154, %s155
    %p167 = scmp.eq.s32.totalorder %s19, 3
    %p168 = por %p166, %p167
    %p170 = scmp.ne.s32.totalorder %s155, %s169
    %p171 = scmp.eq.s32.totalorder %s19, 0
    %p172 = por %p170, %p171
    %s173 = ssub.s32 %s13, %s20
    %p174 = scmp.eq.s32.totalorder %s173, 0
    %s176 = sadd.s32 %s175, 1
    %s177 = scalar_select %p174, %s175, %s176
    %p180 = pneg %p174
    %p181 = scmp.eq.s32.totalorder %s13, 3
    %p182 = por %p180, %p181
    %p183 = scmp.ne.s32.totalorder %s175, %s178
    %p184 = scmp.eq.s32.totalorder %s13, 0
    %p185 = por %p183, %p184
    %p186 = scmp.ne.s32.totalorder %s175, %s178
    %p187 = scmp.eq.s32.totalorder %s18, 3
    %p188 = por %p186, %p187
    %p189 = scmp.ne.s32.totalorder %s178, %s179
    %p190 = scmp.eq.s32.totalorder %s18, 0
    %p191 = por %p189, %p190
    %p192 = scmp.ne.s32.totalorder %s178, %s179
    %p193 = scmp.eq.s32.totalorder %s19, 3
    %p194 = por %p192, %p193
    %p196 = scmp.ne.s32.totalorder %s179, %s195
    %p197 = scmp.eq.s32.totalorder %s19, 0
    %p198 = por %p196, %p197
    %p199 = scmp.le.s32.totalorder 1, %s13
    %p200 = scmp.lt.s32.totalorder %s13, 5
    %p201 = pnand %p199, %p200
    %p202 = pneg %p201
    // Predicated region
    $region9: #{tpu_custom_call.1} parent=5 // pred_check
      _
    $region10: #{tpu_custom_call.1} parent=5 // pred_check_branch
      %204 = sbr.rel (%p201) target = $region12
    $region11: #{tpu_custom_call.1} parent=5 // pred_region
      %s205 = ssub.s32 %s13, 1
      // Predicated region
      $region13: #{tpu_custom_call.1} parent=11 // pred_check
        %p206 = pneg %p60
      $region14: #{tpu_custom_call.1} parent=11 // pred_check_branch
        %208 = sbr.rel (%p206) target = $region16
      $region15: #{tpu_custom_call.1} parent=11 // pred_region
        _
      $region16: #{tpu_custom_call.1} parent=11 // pred_fallthru
        _
      // Predicated region
      $region17: #{tpu_custom_call.1} parent=11 // pred_check
        %p209 = pneg %p81
      $region18: #{tpu_custom_call.1} parent=11 // pred_check_branch
        %211 = sbr.rel (%p209) target = $region20
      $region19: #{tpu_custom_call.1} parent=11 // pred_region
        _
      $region20: #{tpu_custom_call.1} parent=11 // pred_fallthru
        _
      // Predicated region
      $region21: #{tpu_custom_call.1} parent=11 // pred_check
        %p212 = pneg %p102
      $region22: #{tpu_custom_call.1} parent=11 // pred_check_branch
        %214 = sbr.rel (%p212) target = $region24
      $region23: #{tpu_custom_call.1} parent=11 // pred_region
        _
      $region24: #{tpu_custom_call.1} parent=11 // pred_fallthru
        _
      // Predicated region
      $region25: #{tpu_custom_call.1} parent=11 // pred_check
        %p215 = pneg %p123
      $region26: #{tpu_custom_call.1} parent=11 // pred_check_branch
        %217 = sbr.rel (%p215) target = $region28
      $region27: #{tpu_custom_call.1} parent=11 // pred_region
        _
      $region28: #{tpu_custom_call.1} parent=11 // pred_fallthru
        _
      // Predicated region
      $region29: #{tpu_custom_call.1} parent=11 // pred_check
        %p218 = pneg %p144
      $region30: #{tpu_custom_call.1} parent=11 // pred_check_branch
        %220 = sbr.rel (%p218) target = $region32
      $region31: #{tpu_custom_call.1} parent=11 // pred_region
        _
      $region32: #{tpu_custom_call.1} parent=11 // pred_fallthru
        _
      // Predicated region
      $region33: #{tpu_custom_call.1} parent=11 // pred_check
        %p221 = pneg %p165
      $region34: #{tpu_custom_call.1} parent=11 // pred_check_branch
        %223 = sbr.rel (%p221) target = $region36
      $region35: #{tpu_custom_call.1} parent=11 // pred_region
        _
      $region36: #{tpu_custom_call.1} parent=11 // pred_fallthru
        _
    $region12: #{tpu_custom_call.1} parent=5 // pred_fallthru
      _
    %p224 = scmp.lt.s32.totalorder %s13, 4
    // Predicated region
    $region37: #{tpu_custom_call.1} parent=5 // pred_check
      %p225 = pneg %p224
    $region38: #{tpu_custom_call.1} parent=5 // pred_check_branch
      %227 = sbr.rel (%p225) target = $region40
    $region39: #{tpu_custom_call.1} parent=5 // pred_region
      // Predicated region
      $region41: #{tpu_custom_call.1} parent=39 // pred_check
        %p228 = pneg %p33
      $region42: #{tpu_custom_call.1} parent=39 // pred_check_branch
        %230 = sbr.rel (%p228) target = $region44
      $region43: #{tpu_custom_call.1} parent=39 // pred_region
        %s231 = smul.u32 64, %s13
        %p232 = scmp.lt.s32.totalorder %s231, 255
        %s233 = scalar_select %p232, %s231, 255
        %s234 = smul.addr %s233, 8
        %s235 = scalar_lea.vmem %s0, %s234
        %s236 = smul.u32 64, %s13
      $region44: #{tpu_custom_call.1} parent=39 // pred_fallthru
        _
    $region40: #{tpu_custom_call.1} parent=5 // pred_fallthru
      _
    %p237 = scmp.le.s32.totalorder 1, %s13
    %p238 = scmp.lt.s32.totalorder %s13, 5
    %p239 = pnand %p237, %p238
    %p240 = pneg %p239
    // Predicated region
    $region45: #{tpu_custom_call.1} parent=5 // pred_check
      _
    $region46: #{tpu_custom_call.1} parent=5 // pred_check_branch
      %242 = sbr.rel (%p239) target = $region48
    $region47: #{tpu_custom_call.1} parent=5 // pred_region
      %s243 = ssub.s32 %s13, 1
      %s244 = smul.u32 64, %s18
      %p245 = scmp.lt.s32.totalorder %s244, 255
      %s246 = scalar_select %p245, %s244, 255
      %s247 = smul.addr %s246, 8
      %s248 = scalar_lea.vmem %s0, %s247
      %p249 = pneg %p39
      %p250 = pneg %p36
      %p251 = pneg %p60
      %p252 = pneg %p57
      %p253 = pneg %p81
      %p254 = pneg %p78
      %p255 = pneg %p102
      %p256 = pneg %p99
      %p257 = pneg %p123
      %p258 = pneg %p120
      %p259 = pneg %p144
      %p260 = pneg %p141
      %p261 = pneg %p165
      %p262 = pneg %p162
      %p263 = pneg %p191
      %p264 = pneg %p188
      %s265 = smul.u32 64, %s18
      %p266 = scmp.lt.s32.totalorder %s265, 255
      %s267 = scalar_select %p266, %s265, 255
      %s268 = smul.addr %s267, 8
      %s269 = scalar_lea.vmem %s7, %s268
      %s270 = smul.u32 64, %s18
      %p271 = scmp.lt.s32.totalorder %s270, 255
      %s272 = scalar_select %p271, %s270, 255
      %s273 = smul.addr %s272, 8
      %s274 = scalar_lea.vmem %s0, %s273
      %s275 = smul.u32 64, %s18
      %s276 = smul.u32 64, %s18
      %p277 = scmp.lt.s32.totalorder %s276, 255
      %s278 = scalar_select %p277, %s276, 255
      %s279 = smul.addr %s278, 8
      %s280 = scalar_lea.vmem %s7, %s279
      %s281 = smul.u32 64, %s18
      %v282 = vld [vmem:[%s274] sm:$0xff]
      %v283 = vld [vmem:[%s274 + $0x8] sm:$0xff]
      %v284 = vld [vmem:[%s274 + $0x10] sm:$0xff]
      %v285 = vld [vmem:[%s274 + $0x18] sm:$0xff]
      %v286 = vld [vmem:[%s274 + $0x20] sm:$0xff]
      %v287 = vld [vmem:[%s274 + $0x28] sm:$0xff]
      %v288 = vld [vmem:[%s274 + $0x30] sm:$0xff]
      %v289 = vld [vmem:[%s274 + $0x38] sm:$0xff]
      %v290 = vld [vmem:[%s274 + $0x40] sm:$0xff]
      %v291 = vld [vmem:[%s274 + $0x48] sm:$0xff]
      %v292 = vld [vmem:[%s274 + $0x50] sm:$0xff]
      %v293 = vld [vmem:[%s274 + $0x58] sm:$0xff]
      %v294 = vld [vmem:[%s274 + $0x60] sm:$0xff]
      %v295 = vld [vmem:[%s274 + $0x68] sm:$0xff]
      %v296 = vld [vmem:[%s274 + $0x70] sm:$0xff]
      %v297 = vld [vmem:[%s274 + $0x78] sm:$0xff]
      %v298 = vld [vmem:[%s274 + $0x80] sm:$0xff]
      %v299 = vld [vmem:[%s274 + $0x88] sm:$0xff]
      %v300 = vld [vmem:[%s274 + $0x90] sm:$0xff]
      %v301 = vld [vmem:[%s274 + $0x98] sm:$0xff]
      %v302 = vld [vmem:[%s274 + $0xa0] sm:$0xff]
      %v303 = vld [vmem:[%s274 + $0xa8] sm:$0xff]
      %v304 = vld [vmem:[%s274 + $0xb0] sm:$0xff]
      %v305 = vld [vmem:[%s274 + $0xb8] sm:$0xff]
      %v306 = vld [vmem:[%s274 + $0xc0] sm:$0xff]
      %v307 = vld [vmem:[%s274 + $0xc8] sm:$0xff]
      %v308 = vld [vmem:[%s274 + $0xd0] sm:$0xff]
      %v309 = vld [vmem:[%s274 + $0xd8] sm:$0xff]
      %v310 = vld [vmem:[%s274 + $0xe0] sm:$0xff]
      %v311 = vld [vmem:[%s274 + $0xe8] sm:$0xff]
      %v312 = vld [vmem:[%s274 + $0xf0] sm:$0xff]
      %v313 = vld [vmem:[%s274 + $0xf8] sm:$0xff]
      %v314 = vld [vmem:[%s274 + $0x100] sm:$0xff]
      %v315 = vld [vmem:[%s274 + $0x108] sm:$0xff]
      %v316 = vld [vmem:[%s274 + $0x110] sm:$0xff]
      %v317 = vld [vmem:[%s274 + $0x118] sm:$0xff]
      %v318 = vld [vmem:[%s274 + $0x120] sm:$0xff]
      %v319 = vld [vmem:[%s274 + $0x128] sm:$0xff]
      %v320 = vld [vmem:[%s274 + $0x130] sm:$0xff]
      %v321 = vld [vmem:[%s274 + $0x138] sm:$0xff]
      %v322 = vld [vmem:[%s274 + $0x140] sm:$0xff]
      %v323 = vld [vmem:[%s274 + $0x148] sm:$0xff]
      %v324 = vld [vmem:[%s274 + $0x150] sm:$0xff]
      %v325 = vld [vmem:[%s274 + $0x158] sm:$0xff]
      %v326 = vld [vmem:[%s274 + $0x160] sm:$0xff]
      %v327 = vld [vmem:[%s274 + $0x168] sm:$0xff]
      %v328 = vld [vmem:[%s274 + $0x170] sm:$0xff]
      %v329 = vld [vmem:[%s274 + $0x178] sm:$0xff]
      %v330 = vld [vmem:[%s274 + $0x180] sm:$0xff]
      %v331 = vld [vmem:[%s274 + $0x188] sm:$0xff]
      %v332 = vld [vmem:[%s274 + $0x190] sm:$0xff]
      %v333 = vld [vmem:[%s274 + $0x198] sm:$0xff]
      %v334 = vld [vmem:[%s274 + $0x1a0] sm:$0xff]
      %v335 = vld [vmem:[%s274 + $0x1a8] sm:$0xff]
      %v336 = vld [vmem:[%s274 + $0x1b0] sm:$0xff]
      %v337 = vld [vmem:[%s274 + $0x1b8] sm:$0xff]
      %v338 = vld [vmem:[%s274 + $0x1c0] sm:$0xff]
      %v339 = vld [vmem:[%s274 + $0x1c8] sm:$0xff]
      %v340 = vld [vmem:[%s274 + $0x1d0] sm:$0xff]
      %v341 = vld [vmem:[%s274 + $0x1d8] sm:$0xff]
      %v342 = vld [vmem:[%s274 + $0x1e0] sm:$0xff]
      %v343 = vld [vmem:[%s274 + $0x1e8] sm:$0xff]
      %v344 = vld [vmem:[%s274 + $0x1f0] sm:$0xff]
      %v345 = vld [vmem:[%s274 + $0x1f8] sm:$0xff]
      %v346 = vld [vmem:[%s1] sm:$0xff]
      %v347 = vld [vmem:[%s1 + $0x8] sm:$0xff]
      %v348 = vld [vmem:[%s1 + $0x10] sm:$0xff]
      %v349 = vld [vmem:[%s1 + $0x18] sm:$0xff]
      %v350 = vld [vmem:[%s2] sm:$0x1]
      %v352 = vlaneseq
      %v353 = vshrl.u32 %v352, 7
      %v354 = vsub.s32 0, %v353
      %v355 = vrot.slane %v350, %v354
      %vm357 = vcmask 261120
      %v359 = vsel %vm357, %v282, 0
      %v362 = vsel %vm357, %v283, 0
      %v365 = vsel %vm357, %v284, 0
      %v368 = vsel %vm357, %v285, 0
      %v371 = vsel %vm357, %v286, 0
      %v374 = vsel %vm357, %v287, 0
      %v377 = vsel %vm357, %v288, 0
      %v380 = vsel %vm357, %v289, 0
      %v383 = vsel %vm357, %v290, 0
      %v386 = vsel %vm357, %v291, 0
      %v389 = vsel %vm357, %v292, 0
      %v392 = vsel %vm357, %v293, 0
      %v395 = vsel %vm357, %v294, 0
      %v398 = vsel %vm357, %v295, 0
      %v401 = vsel %vm357, %v296, 0
      %v404 = vsel %vm357, %v297, 0
      %v407 = vsel %vm357, %v298, 0
      %v410 = vsel %vm357, %v299, 0
      %v413 = vsel %vm357, %v300, 0
      %v416 = vsel %vm357, %v301, 0
      %v419 = vsel %vm357, %v302, 0
      %v422 = vsel %vm357, %v303, 0
      %v425 = vsel %vm357, %v304, 0
      %v428 = vsel %vm357, %v305, 0
      %v431 = vsel %vm357, %v306, 0
      %v434 = vsel %vm357, %v307, 0
      %v437 = vsel %vm357, %v308, 0
      %v440 = vsel %vm357, %v309, 0
      %v443 = vsel %vm357, %v310, 0
      %v446 = vsel %vm357, %v311, 0
      %v449 = vsel %vm357, %v312, 0
      %v452 = vsel %vm357, %v313, 0
      %v455 = vsel %vm357, %v314, 0
      %v458 = vsel %vm357, %v315, 0
      %v461 = vsel %vm357, %v316, 0
      %v464 = vsel %vm357, %v317, 0
      %v467 = vsel %vm357, %v318, 0
      %v470 = vsel %vm357, %v319, 0
      %v473 = vsel %vm357, %v320, 0
      %v476 = vsel %vm357, %v321, 0
      %v479 = vsel %vm357, %v322, 0
      %v482 = vsel %vm357, %v323, 0
      %v485 = vsel %vm357, %v324, 0
      %v488 = vsel %vm357, %v325, 0
      %v491 = vsel %vm357, %v326, 0
      %v494 = vsel %vm357, %v327, 0
      %v497 = vsel %vm357, %v328, 0
      %v500 = vsel %vm357, %v329, 0
      %v503 = vsel %vm357, %v330, 0
      %v506 = vsel %vm357, %v331, 0
      %v509 = vsel %vm357, %v332, 0
      %v512 = vsel %vm357, %v333, 0
      %v515 = vsel %vm357, %v334, 0
      %v518 = vsel %vm357, %v335, 0
      %v521 = vsel %vm357, %v336, 0
      %v524 = vsel %vm357, %v337, 0
      %v527 = vsel %vm357, %v338, 0
      %v530 = vsel %vm357, %v339, 0
      %v533 = vsel %vm357, %v340, 0
      %v536 = vsel %vm357, %v341, 0
      %v539 = vsel %vm357, %v342, 0
      %v542 = vsel %vm357, %v343, 0
      %v545 = vsel %vm357, %v344, 0
      %v548 = vsel %vm357, %v345, 0
      %550 = vmatprep.subr.mxu0 0.0
      %551 = vmatpush1.msra.mxu0 %v346
      %552 = vmatprep.subr.mxu0 0.0
      %553 = vmatpush1.msra.mxu0 %v347
      %554 = vmatprep.subr.mxu0 0.0
      %555 = vmatpush1.msra.mxu0 %v348
      %556 = vmatprep.subr.mxu0 0.0
      %557 = vmatpush1.msra.mxu0 %v349
      %558 = vmatprep.subr.mxu0 0.0
      %559 = vmatpush1.msra.mxu0 0.0
      %560 = vmatprep.subr.mxu0 0.0
      %561 = vmatpush1.msra.mxu0 0.0
      %562 = vmatprep.subr.mxu0 0.0
      %563 = vmatpush1.msra.mxu0 0.0
      %564 = vmatprep.subr.mxu0 0.0
      %565 = vmatpush1.msra.mxu0 0.0
      %566 = vmatprep.subr.mxu0 0.0
      %567 = vmatpush1.msra.mxu0 0.0
      %568 = vmatprep.subr.mxu0 0.0
      %569 = vmatpush1.msra.mxu0 0.0
      %570 = vmatprep.subr.mxu0 0.0
      %571 = vmatpush1.msra.mxu0 0.0
      %572 = vmatprep.subr.mxu0 0.0
      %573 = vmatpush1.msra.mxu0 0.0
      %574 = vmatprep.subr.mxu0 0.0
      %575 = vmatpush1.msra.mxu0 0.0
      %576 = vmatprep.subr.mxu0 0.0
      %577 = vmatpush1.msra.mxu0 0.0
      %578 = vmatprep.subr.mxu0 0.0
      %579 = vmatpush1.msra.mxu0 0.0
      %580 = vmatprep.subr.mxu0 0.0
      %581 = vmatpush1.msra.mxu0 0.0
      %582 = vmatprep.subr.mxu0 0.0
      %583 = vmatpush1.msra.mxu0 0.0
      %584 = vmatprep.subr.mxu0 0.0
      %585 = vmatpush1.msra.mxu0 0.0
      %586 = vmatprep.subr.mxu0 0.0
      %587 = vmatpush1.msra.mxu0 0.0
      %588 = vmatprep.subr.mxu0 0.0
      %589 = vmatpush1.msra.mxu0 0.0
      %590 = vmatprep.subr.mxu0 0.0
      %591 = vmatpush1.msra.mxu0 0.0
      %592 = vmatprep.subr.mxu0 0.0
      %593 = vmatpush1.msra.mxu0 0.0
      %594 = vmatprep.subr.mxu0 0.0
      %595 = vmatpush1.msra.mxu0 0.0
      %596 = vmatprep.subr.mxu0 0.0
      %597 = vmatpush1.msra.mxu0 0.0
      %598 = vmatprep.subr.mxu0 0.0
      %599 = vmatpush1.msra.mxu0 0.0
      %600 = vmatprep.subr.mxu0 0.0
      %601 = vmatpush1.msra.mxu0 0.0
      %602 = vmatprep.subr.mxu0 0.0
      %603 = vmatpush1.msra.mxu0 0.0
      %604 = vmatprep.subr.mxu0 0.0
      %605 = vmatpush1.msra.mxu0 0.0
      %606 = vmatprep.subr.mxu0 0.0
      %607 = vmatpush1.msra.mxu0 0.0
      %608 = vmatprep.subr.mxu0 0.0
      %609 = vmatpush1.msra.mxu0 0.0
      %610 = vmatprep.subr.mxu0 0.0
      %611 = vmatpush1.msra.mxu0 0.0
      %612 = vmatprep.subr.mxu0 0.0
      %613 = vmatpush1.msra.mxu0 0.0
      %614 = vmatprep.mubr.f32.mxu0 0.0
      %615 = vmatmul.mubr.f32.gmra.mrb[0].mxu0 %v359
      %v616 = vpop.f32.mrb[0].mxu0
      %v617 = vadd.f32 %v355, %v616
      %v618 = vpop.f32.mrb[0].mxu0
      %619 = vmatprep.mubr.f32.mxu0 0.0
      %620 = vmatmul.mubr.f32.gmra.mrb[0].mxu0 %v362
      %v621 = vpop.f32.mrb[0].mxu0
      %v622 = vadd.f32 %v355, %v621
      %v623 = vpop.f32.mrb[0].mxu0
      %624 = vmatprep.mubr.f32.mxu0 0.0
      %625 = vmatmul.mubr.f32.gmra.mrb[0].mxu0 %v365
      %v626 = vpop.f32.mrb[0].mxu0
      %v627 = vadd.f32 %v355, %v626
      %v628 = vpop.f32.mrb[0].mxu0
      %629 = vmatprep.mubr.f32.mxu0 0.0
      %630 = vmatmul.mubr.f32.gmra.mrb[0].mxu0 %v368
      %v631 = vpop.f32.mrb[0].mxu0
      %v632 = vadd.f32 %v355, %v631
      %v633 = vpop.f32.mrb[0].mxu0
      %634 = vmatprep.mubr.f32.mxu0 0.0
      %635 = vmatmul.mubr.f32.gmra.mrb[0].mxu0 %v371
      %v636 = vpop.f32.mrb[0].mxu0
      %v637 = vadd.f32 %v355, %v636
      %v638 = vpop.f32.mrb[0].mxu0
      %639 = vmatprep.mubr.f32.mxu0 0.0
      %640 = vmatmul.mubr.f32.gmra.mrb[0].mxu0 %v374
      %v641 = vpop.f32.mrb[0].mxu0
      %v642 = vadd.f32 %v355, %v641
      %v643 = vpop.f32.mrb[0].mxu0
      %644 = vmatprep.mubr.f32.mxu0 0.0
      %645 = vmatmul.mubr.f32.gmra.mrb[0].mxu0 %v377
      %v646 = vpop.f32.mrb[0].mxu0
      %v647 = vadd.f32 %v355, %v646
      %v648 = vpop.f32.mrb[0].mxu0
      %649 = vmatprep.mubr.f32.mxu0 0.0
      %650 = vmatmul.mubr.f32.gmra.mrb[0].mxu0 %v380
      %v651 = vpop.f32.mrb[0].mxu0
      %v652 = vadd.f32 %v355, %v651
      %v653 = vpop.f32.mrb[0].mxu0
      %654 = vmatprep.mubr.f32.mxu0 0.0
      %655 = vmatmul.mubr.f32.gmra.mrb[0].mxu0 %v383
      %v656 = vpop.f32.mrb[0].mxu0
      %v657 = vadd.f32 %v355, %v656
      %v658 = vpop.f32.mrb[0].mxu0
      %659 = vmatprep.mubr.f32.mxu0 0.0
      %660 = vmatmul.mubr.f32.gmra.mrb[0].mxu0 %v386
      %v661 = vpop.f32.mrb[0].mxu0
      %v662 = vadd.f32 %v355, %v661
      %v663 = vpop.f32.mrb[0].mxu0
      %664 = vmatprep.mubr.f32.mxu0 0.0
      %665 = vmatmul.mubr.f32.gmra.mrb[0].mxu0 %v389
      %v666 = vpop.f32.mrb[0].mxu0
      %v667 = vadd.f32 %v355, %v666
      %v668 = vpop.f32.mrb[0].mxu0
      %669 = vmatprep.mubr.f32.mxu0 0.0
      %670 = vmatmul.mubr.f32.gmra.mrb[0].mxu0 %v392
      %v671 = vpop.f32.mrb[0].mxu0
      %v672 = vadd.f32 %v355, %v671
      %v673 = vpop.f32.mrb[0].mxu0
      %674 = vmatprep.mubr.f32.mxu0 0.0
      %675 = vmatmul.mubr.f32.gmra.mrb[0].mxu0 %v395
      %v676 = vpop.f32.mrb[0].mxu0
      %v677 = vadd.f32 %v355, %v676
      %v678 = vpop.f32.mrb[0].mxu0
      %679 = vmatprep.mubr.f32.mxu0 0.0
      %680 = vmatmul.mubr.f32.gmra.mrb[0].mxu0 %v398
      %v681 = vpop.f32.mrb[0].mxu0
      %v682 = vadd.f32 %v355, %v681
      %v683 = vpop.f32.mrb[0].mxu0
      %684 = vmatprep.mubr.f32.mxu0 0.0
      %685 = vmatmul.mubr.f32.gmra.mrb[0].mxu0 %v401
      %v686 = vpop.f32.mrb[0].mxu0
      %v687 = vadd.f32 %v355, %v686
      %v688 = vpop.f32.mrb[0].mxu0
      %689 = vmatprep.mubr.f32.mxu0 0.0
      %690 = vmatmul.mubr.f32.gmra.mrb[0].mxu0 %v404
      %v691 = vpop.f32.mrb[0].mxu0
      %v692 = vadd.f32 %v355, %v691
      %v693 = vpop.f32.mrb[0].mxu0
      %694 = vmatprep.mubr.f32.mxu0 0.0
      %695 = vmatmul.mubr.f32.gmra.mrb[0].mxu0 %v407
      %v696 = vpop.f32.mrb[0].mxu0
      %v697 = vadd.f32 %v355, %v696
      %v698 = vpop.f32.mrb[0].mxu0
      %699 = vmatprep.mubr.f32.mxu0 0.0
      %700 = vmatmul.mubr.f32.gmra.mrb[0].mxu0 %v410
      %v701 = vpop.f32.mrb[0].mxu0
      %v702 = vadd.f32 %v355, %v701
      %v703 = vpop.f32.mrb[0].mxu0
      %704 = vmatprep.mubr.f32.mxu0 0.0
      %705 = vmatmul.mubr.f32.gmra.mrb[0].mxu0 %v413
      %v706 = vpop.f32.mrb[0].mxu0
      %v707 = vadd.f32 %v355, %v706
      %v708 = vpop.f32.mrb[0].mxu0
      %709 = vmatprep.mubr.f32.mxu0 0.0
      %710 = vmatmul.mubr.f32.gmra.mrb[0].mxu0 %v416
      %v711 = vpop.f32.mrb[0].mxu0
      %v712 = vadd.f32 %v355, %v711
      %v713 = vpop.f32.mrb[0].mxu0
      %714 = vmatprep.mubr.f32.mxu0 0.0
      %715 = vmatmul.mubr.f32.gmra.mrb[0].mxu0 %v419
      %v716 = vpop.f32.mrb[0].mxu0
      %v717 = vadd.f32 %v355, %v716
      %v718 = vpop.f32.mrb[0].mxu0
      %719 = vmatprep.mubr.f32.mxu0 0.0
      %720 = vmatmul.mubr.f32.gmra.mrb[0].mxu0 %v422
      %v721 = vpop.f32.mrb[0].mxu0
      %v722 = vadd.f32 %v355, %v721
      %v723 = vpop.f32.mrb[0].mxu0
      %724 = vmatprep.mubr.f32.mxu0 0.0
      %725 = vmatmul.mubr.f32.gmra.mrb[0].mxu0 %v425
      %v726 = vpop.f32.mrb[0].mxu0
      %v727 = vadd.f32 %v355, %v726
      %v728 = vpop.f32.mrb[0].mxu0
      %729 = vmatprep.mubr.f32.mxu0 0.0
      %730 = vmatmul.mubr.f32.gmra.mrb[0].mxu0 %v428
      %v731 = vpop.f32.mrb[0].mxu0
      %v732 = vadd.f32 %v355, %v731
      %v733 = vpop.f32.mrb[0].mxu0
      %734 = vmatprep.mubr.f32.mxu0 0.0
      %735 = vmatmul.mubr.f32.gmra.mrb[0].mxu0 %v431
      %v736 = vpop.f32.mrb[0].mxu0
      %v737 = vadd.f32 %v355, %v736
      %v738 = vpop.f32.mrb[0].mxu0
      %739 = vmatprep.mubr.f32.mxu0 0.0
      %740 = vmatmul.mubr.f32.gmra.mrb[0].mxu0 %v434
      %v741 = vpop.f32.mrb[0].mxu0
      %v742 = vadd.f32 %v355, %v741
      %v743 = vpop.f32.mrb[0].mxu0
      %744 = vmatprep.mubr.f32.mxu0 0.0
      %745 = vmatmul.mubr.f32.gmra.mrb[0].mxu0 %v437
      %v746 = vpop.f32.mrb[0].mxu0
      %v747 = vadd.f32 %v355, %v746
      %v748 = vpop.f32.mrb[0].mxu0
      %749 = vmatprep.mubr.f32.mxu0 0.0
      %750 = vmatmul.mubr.f32.gmra.mrb[0].mxu0 %v440
      %v751 = vpop.f32.mrb[0].mxu0
      %v752 = vadd.f32 %v355, %v751
      %v753 = vpop.f32.mrb[0].mxu0
      %754 = vmatprep.mubr.f32.mxu0 0.0
      %755 = vmatmul.mubr.f32.gmra.mrb[0].mxu0 %v443
      %v756 = vpop.f32.mrb[0].mxu0
      %v757 = vadd.f32 %v355, %v756
      %v758 = vpop.f32.mrb[0].mxu0
      %759 = vmatprep.mubr.f32.mxu0 0.0
      %760 = vmatmul.mubr.f32.gmra.mrb[0].mxu0 %v446
      %v761 = vpop.f32.mrb[0].mxu0
      %v762 = vadd.f32 %v355, %v761
      %v763 = vpop.f32.mrb[0].mxu0
      %764 = vmatprep.mubr.f32.mxu0 0.0
      %765 = vmatmul.mubr.f32.gmra.mrb[0].mxu0 %v449
      %v766 = vpop.f32.mrb[0].mxu0
      %v767 = vadd.f32 %v355, %v766
      %v768 = vpop.f32.mrb[0].mxu0
      %769 = vmatprep.mubr.f32.mxu0 0.0
      %770 = vmatmul.mubr.f32.gmra.mrb[0].mxu0 %v452
      %v771 = vpop.f32.mrb[0].mxu0
      %v772 = vadd.f32 %v355, %v771
      %v773 = vpop.f32.mrb[0].mxu0
      %774 = vmatprep.mubr.f32.mxu0 0.0
      %775 = vmatmul.mubr.f32.gmra.mrb[0].mxu0 %v455
      %v776 = vpop.f32.mrb[0].mxu0
      %v777 = vadd.f32 %v355, %v776
      %v778 = vpop.f32.mrb[0].mxu0
      %779 = vmatprep.mubr.f32.mxu0 0.0
      %780 = vmatmul.mubr.f32.gmra.mrb[0].mxu0 %v458
      %v781 = vpop.f32.mrb[0].mxu0
      %v782 = vadd.f32 %v355, %v781
      %v783 = vpop.f32.mrb[0].mxu0
      %784 = vmatprep.mubr.f32.mxu0 0.0
      %785 = vmatmul.mubr.f32.gmra.mrb[0].mxu0 %v461
      %v786 = vpop.f32.mrb[0].mxu0
      %v787 = vadd.f32 %v355, %v786
      %v788 = vpop.f32.mrb[0].mxu0
      %789 = vmatprep.mubr.f32.mxu0 0.0
      %790 = vmatmul.mubr.f32.gmra.mrb[0].mxu0 %v464
      %v791 = vpop.f32.mrb[0].mxu0
      %v792 = vadd.f32 %v355, %v791
      %v793 = vpop.f32.mrb[0].mxu0
      %794 = vmatprep.mubr.f32.mxu0 0.0
      %795 = vmatmul.mubr.f32.gmra.mrb[0].mxu0 %v467
      %v796 = vpop.f32.mrb[0].mxu0
      %v797 = vadd.f32 %v355, %v796
      %v798 = vpop.f32.mrb[0].mxu0
      %799 = vmatprep.mubr.f32.mxu0 0.0
      %800 = vmatmul.mubr.f32.gmra.mrb[0].mxu0 %v470
      %v801 = vpop.f32.mrb[0].mxu0
      %v802 = vadd.f32 %v355, %v801
      %v803 = vpop.f32.mrb[0].mxu0
      %804 = vmatprep.mubr.f32.mxu0 0.0
      %805 = vmatmul.mubr.f32.gmra.mrb[0].mxu0 %v473
      %v806 = vpop.f32.mrb[0].mxu0
      %v807 = vadd.f32 %v355, %v806
      %v808 = vpop.f32.mrb[0].mxu0
      %809 = vmatprep.mubr.f32.mxu0 0.0
      %810 = vmatmul.mubr.f32.gmra.mrb[0].mxu0 %v476
      %v811 = vpop.f32.mrb[0].mxu0
      %v812 = vadd.f32 %v355, %v811
      %v813 = vpop.f32.mrb[0].mxu0
      %814 = vmatprep.mubr.f32.mxu0 0.0
      %815 = vmatmul.mubr.f32.gmra.mrb[0].mxu0 %v479
      %v816 = vpop.f32.mrb[0].mxu0
      %v817 = vadd.f32 %v355, %v816
      %v818 = vpop.f32.mrb[0].mxu0
      %819 = vmatprep.mubr.f32.mxu0 0.0
      %820 = vmatmul.mubr.f32.gmra.mrb[0].mxu0 %v482
      %v821 = vpop.f32.mrb[0].mxu0
      %v822 = vadd.f32 %v355, %v821
      %v823 = vpop.f32.mrb[0].mxu0
      %824 = vmatprep.mubr.f32.mxu0 0.0
      %825 = vmatmul.mubr.f32.gmra.mrb[0].mxu0 %v485
      %v826 = vpop.f32.mrb[0].mxu0
      %v827 = vadd.f32 %v355, %v826
      %v828 = vpop.f32.mrb[0].mxu0
      %829 = vmatprep.mubr.f32.mxu0 0.0
      %830 = vmatmul.mubr.f32.gmra.mrb[0].mxu0 %v488
      %v831 = vpop.f32.mrb[0].mxu0
      %v832 = vadd.f32 %v355, %v831
      %v833 = vpop.f32.mrb[0].mxu0
      %834 = vmatprep.mubr.f32.mxu0 0.0
      %835 = vmatmul.mubr.f32.gmra.mrb[0].mxu0 %v491
      %v836 = vpop.f32.mrb[0].mxu0
      %v837 = vadd.f32 %v355, %v836
      %v838 = vpop.f32.mrb[0].mxu0
      %839 = vmatprep.mubr.f32.mxu0 0.0
      %840 = vmatmul.mubr.f32.gmra.mrb[0].mxu0 %v494
      %v841 = vpop.f32.mrb[0].mxu0
      %v842 = vadd.f32 %v355, %v841
      %v843 = vpop.f32.mrb[0].mxu0
      %844 = vmatprep.mubr.f32.mxu0 0.0
      %845 = vmatmul.mubr.f32.gmra.mrb[0].mxu0 %v497
      %v846 = vpop.f32.mrb[0].mxu0
      %v847 = vadd.f32 %v355, %v846
      %v848 = vpop.f32.mrb[0].mxu0
      %849 = vmatprep.mubr.f32.mxu0 0.0
      %850 = vmatmul.mubr.f32.gmra.mrb[0].mxu0 %v500
      %v851 = vpop.f32.mrb[0].mxu0
      %v852 = vadd.f32 %v355, %v851
      %v853 = vpop.f32.mrb[0].mxu0
      %854 = vmatprep.mubr.f32.mxu0 0.0
      %855 = vmatmul.mubr.f32.gmra.mrb[0].mxu0 %v503
      %v856 = vpop.f32.mrb[0].mxu0
      %v857 = vadd.f32 %v355, %v856
      %v858 = vpop.f32.mrb[0].mxu0
      %859 = vmatprep.mubr.f32.mxu0 0.0
      %860 = vmatmul.mubr.f32.gmra.mrb[0].mxu0 %v506
      %v861 = vpop.f32.mrb[0].mxu0
      %v862 = vadd.f32 %v355, %v861
      %v863 = vpop.f32.mrb[0].mxu0
      %864 = vmatprep.mubr.f32.mxu0 0.0
      %865 = vmatmul.mubr.f32.gmra.mrb[0].mxu0 %v509
      %v866 = vpop.f32.mrb[0].mxu0
      %v867 = vadd.f32 %v355, %v866
      %v868 = vpop.f32.mrb[0].mxu0
      %869 = vmatprep.mubr.f32.mxu0 0.0
      %870 = vmatmul.mubr.f32.gmra.mrb[0].mxu0 %v512
      %v871 = vpop.f32.mrb[0].mxu0
      %v872 = vadd.f32 %v355, %v871
      %v873 = vpop.f32.mrb[0].mxu0
      %874 = vmatprep.mubr.f32.mxu0 0.0
      %875 = vmatmul.mubr.f32.gmra.mrb[0].mxu0 %v515
      %v876 = vpop.f32.mrb[0].mxu0
      %v877 = vadd.f32 %v355, %v876
      %v878 = vpop.f32.mrb[0].mxu0
      %879 = vmatprep.mubr.f32.mxu0 0.0
      %880 = vmatmul.mubr.f32.gmra.mrb[0].mxu0 %v518
      %v881 = vpop.f32.mrb[0].mxu0
      %v882 = vadd.f32 %v355, %v881
      %v883 = vpop.f32.mrb[0].mxu0
      %884 = vmatprep.mubr.f32.mxu0 0.0
      %885 = vmatmul.mubr.f32.gmra.mrb[0].mxu0 %v521
      %v886 = vpop.f32.mrb[0].mxu0
      %v887 = vadd.f32 %v355, %v886
      %v888 = vpop.f32.mrb[0].mxu0
      %889 = vmatprep.mubr.f32.mxu0 0.0
      %890 = vmatmul.mubr.f32.gmra.mrb[0].mxu0 %v524
      %v891 = vpop.f32.mrb[0].mxu0
      %v892 = vadd.f32 %v355, %v891
      %v893 = vpop.f32.mrb[0].mxu0
      %894 = vmatprep.mubr.f32.mxu0 0.0
      %895 = vmatmul.mubr.f32.gmra.mrb[0].mxu0 %v527
      %v896 = vpop.f32.mrb[0].mxu0
      %v897 = vadd.f32 %v355, %v896
      %v898 = vpop.f32.mrb[0].mxu0
      %899 = vmatprep.mubr.f32.mxu0 0.0
      %900 = vmatmul.mubr.f32.gmra.mrb[0].mxu0 %v530
      %v901 = vpop.f32.mrb[0].mxu0
      %v902 = vadd.f32 %v355, %v901
      %v903 = vpop.f32.mrb[0].mxu0
      %904 = vmatprep.mubr.f32.mxu0 0.0
      %905 = vmatmul.mubr.f32.gmra.mrb[0].mxu0 %v533
      %v906 = vpop.f32.mrb[0].mxu0
      %v907 = vadd.f32 %v355, %v906
      %v908 = vpop.f32.mrb[0].mxu0
      %909 = vmatprep.mubr.f32.mxu0 0.0
      %910 = vmatmul.mubr.f32.gmra.mrb[0].mxu0 %v536
      %v911 = vpop.f32.mrb[0].mxu0
      %v912 = vadd.f32 %v355, %v911
      %v913 = vpop.f32.mrb[0].mxu0
      %914 = vmatprep.mubr.f32.mxu0 0.0
      %915 = vmatmul.mubr.f32.gmra.mrb[0].mxu0 %v539
      %v916 = vpop.f32.mrb[0].mxu0
      %v917 = vadd.f32 %v355, %v916
      %v918 = vpop.f32.mrb[0].mxu0
      %919 = vmatprep.mubr.f32.mxu0 0.0
      %920 = vmatmul.mubr.f32.gmra.mrb[0].mxu0 %v542
      %v921 = vpop.f32.mrb[0].mxu0
      %v922 = vadd.f32 %v355, %v921
      %v923 = vpop.f32.mrb[0].mxu0
      %924 = vmatprep.mubr.f32.mxu0 0.0
      %925 = vmatmul.mubr.f32.gmra.mrb[0].mxu0 %v545
      %v926 = vpop.f32.mrb[0].mxu0
      %v927 = vadd.f32 %v355, %v926
      %v928 = vpop.f32.mrb[0].mxu0
      %929 = vmatprep.mubr.f32.mxu0 0.0
      %930 = vmatmul.mubr.f32.gmra.mrb[0].mxu0 %v548
      %v931 = vpop.f32.mrb[0].mxu0
      %v932 = vadd.f32 %v355, %v931
      %v933 = vpop.f32.mrb[0].mxu0
      %934 = vdwg.mxu0
      %v935 = vmax.f32 %v617, 0.0
      %v936 = vmax.f32 %v622, 0.0
      %v937 = vmax.f32 %v627, 0.0
      %v938 = vmax.f32 %v632, 0.0
      %v939 = vmax.f32 %v637, 0.0
      %v940 = vmax.f32 %v642, 0.0
      %v941 = vmax.f32 %v647, 0.0
      %v942 = vmax.f32 %v652, 0.0
      %v943 = vmax.f32 %v657, 0.0
      %v944 = vmax.f32 %v662, 0.0
      %v945 = vmax.f32 %v667, 0.0
      %v946 = vmax.f32 %v672, 0.0
      %v947 = vmax.f32 %v677, 0.0
      %v948 = vmax.f32 %v682, 0.0
      %v949 = vmax.f32 %v687, 0.0
      %v950 = vmax.f32 %v692, 0.0
      %v951 = vmax.f32 %v697, 0.0
      %v952 = vmax.f32 %v702, 0.0
      %v953 = vmax.f32 %v707, 0.0
      %v954 = vmax.f32 %v712, 0.0
      %v955 = vmax.f32 %v717, 0.0
      %v956 = vmax.f32 %v722, 0.0
      %v957 = vmax.f32 %v727, 0.0
      %v958 = vmax.f32 %v732, 0.0
      %v959 = vmax.f32 %v737, 0.0
      %v960 = vmax.f32 %v742, 0.0
      %v961 = vmax.f32 %v747, 0.0
      %v962 = vmax.f32 %v752, 0.0
      %v963 = vmax.f32 %v757, 0.0
      %v964 = vmax.f32 %v762, 0.0
      %v965 = vmax.f32 %v767, 0.0
      %v966 = vmax.f32 %v772, 0.0
      %v967 = vmax.f32 %v777, 0.0
      %v968 = vmax.f32 %v782, 0.0
      %v969 = vmax.f32 %v787, 0.0
      %v970 = vmax.f32 %v792, 0.0
      %v971 = vmax.f32 %v797, 0.0
      %v972 = vmax.f32 %v802, 0.0
      %v973 = vmax.f32 %v807, 0.0
      %v974 = vmax.f32 %v812, 0.0
      %v975 = vmax.f32 %v817, 0.0
      %v976 = vmax.f32 %v822, 0.0
      %v977 = vmax.f32 %v827, 0.0
      %v978 = vmax.f32 %v832, 0.0
      %v979 = vmax.f32 %v837, 0.0
      %v980 = vmax.f32 %v842, 0.0
      %v981 = vmax.f32 %v847, 0.0
      %v982 = vmax.f32 %v852, 0.0
      %v983 = vmax.f32 %v857, 0.0
      %v984 = vmax.f32 %v862, 0.0
      %v985 = vmax.f32 %v867, 0.0
      %v986 = vmax.f32 %v872, 0.0
      %v987 = vmax.f32 %v877, 0.0
      %v988 = vmax.f32 %v882, 0.0
      %v989 = vmax.f32 %v887, 0.0
      %v990 = vmax.f32 %v892, 0.0
      %v991 = vmax.f32 %v897, 0.0
      %v992 = vmax.f32 %v902, 0.0
      %v993 = vmax.f32 %v907, 0.0
      %v994 = vmax.f32 %v912, 0.0
      %v995 = vmax.f32 %v917, 0.0
      %v996 = vmax.f32 %v922, 0.0
      %v997 = vmax.f32 %v927, 0.0
      %v998 = vmax.f32 %v932, 0.0
      %v999 = vld [vmem:[%s3] sm:$0xff]
      %v1000 = vld [vmem:[%s3 + $0x8] sm:$0xff]
      %v1001 = vld [vmem:[%s3 + $0x10] sm:$0xff]
      %v1002 = vld [vmem:[%s3 + $0x18] sm:$0xff]
      %v1003 = vld [vmem:[%s3 + $0x20] sm:$0xff]
      %v1004 = vld [vmem:[%s3 + $0x28] sm:$0xff]
      %v1005 = vld [vmem:[%s3 + $0x30] sm:$0xff]
      %v1006 = vld [vmem:[%s3 + $0x38] sm:$0xff]
      %v1007 = vld [vmem:[%s3 + $0x40] sm:$0xff]
      %v1008 = vld [vmem:[%s3 + $0x48] sm:$0xff]
      %v1009 = vld [vmem:[%s3 + $0x50] sm:$0xff]
      %v1010 = vld [vmem:[%s3 + $0x58] sm:$0xff]
      %v1011 = vld [vmem:[%s3 + $0x60] sm:$0xff]
      %v1012 = vld [vmem:[%s3 + $0x68] sm:$0xff]
      %v1013 = vld [vmem:[%s3 + $0x70] sm:$0xff]
      %v1014 = vld [vmem:[%s3 + $0x78] sm:$0xff]
      %v1015 = vld [vmem:[%s4] sm:$0x1]
      %v1017 = vlaneseq
      %v1018 = vshrl.u32 %v1017, 7
      %v1019 = vsub.s32 0, %v1018
      %v1020 = vrot.slane %v1015, %v1019
      %1022 = vmatprep.subr.mxu0 0.0
      %1023 = vmatpush1.msra.mxu0 %v999
      %1024 = vmatprep.subr.mxu0 0.0
      %1025 = vmatpush1.msra.mxu0 %v1000
      %1026 = vmatprep.subr.mxu0 0.0
      %1027 = vmatpush1.msra.mxu0 %v1001
      %1028 = vmatprep.subr.mxu0 0.0
      %1029 = vmatpush1.msra.mxu0 %v1002
      %1030 = vmatprep.subr.mxu0 0.0
      %1031 = vmatpush1.msra.mxu0 %v1003
      %1032 = vmatprep.subr.mxu0 0.0
      %1033 = vmatpush1.msra.mxu0 %v1004
      %1034 = vmatprep.subr.mxu0 0.0
      %1035 = vmatpush1.msra.mxu0 %v1005
      %1036 = vmatprep.subr.mxu0 0.0
      %1037 = vmatpush1.msra.mxu0 %v1006
      %1038 = vmatprep.subr.mxu0 0.0
      %1039 = vmatpush1.msra.mxu0 %v1007
      %1040 = vmatprep.subr.mxu0 0.0
      %1041 = vmatpush1.msra.mxu0 %v1008
      %1042 = vmatprep.subr.mxu0 0.0
      %1043 = vmatpush1.msra.mxu0 %v1009
      %1044 = vmatprep.subr.mxu0 0.0
      %1045 = vmatpush1.msra.mxu0 %v1010
      %1046 = vmatprep.subr.mxu0 0.0
      %1047 = vmatpush1.msra.mxu0 %v1011
      %1048 = vmatprep.subr.mxu0 0.0
      %1049 = vmatpush1.msra.mxu0 %v1012
      %1050 = vmatprep.subr.mxu0 0.0
      %1051 = vmatpush1.msra.mxu0 %v1013
      %1052 = vmatprep.subr.mxu0 0.0
      %1053 = vmatpush1.msra.mxu0 %v1014
      %1054 = vmatprep.subr.mxu0 0.0
      %1055 = vmatpush1.msra.mxu0 0.0
      %1056 = vmatprep.subr.mxu0 0.0
      %1057 = vmatpush1.msra.mxu0 0.0
      %1058 = vmatprep.subr.mxu0 0.0
      %1059 = vmatpush1.msra.mxu0 0.0
      %1060 = vmatprep.subr.mxu0 0.0
      %1061 = vmatpush1.msra.mxu0 0.0
      %1062 = vmatprep.subr.mxu0 0.0
      %1063 = vmatpush1.msra.mxu0 0.0
      %1064 = vmatprep.subr.mxu0 0.0
      %1065 = vmatpush1.msra.mxu0 0.0
      %1066 = vmatprep.subr.mxu0 0.0
      %1067 = vmatpush1.msra.mxu0 0.0
      %1068 = vmatprep.subr.mxu0 0.0
      %1069 = vmatpush1.msra.mxu0 0.0
      %1070 = vmatprep.subr.mxu0 0.0
      %1071 = vmatpush1.msra.mxu0 0.0
      %1072 = vmatprep.subr.mxu0 0.0
      %1073 = vmatpush1.msra.mxu0 0.0
      %1074 = vmatprep.subr.mxu0 0.0
      %1075 = vmatpush1.msra.mxu0 0.0
      %1076 = vmatprep.subr.mxu0 0.0
      %1077 = vmatpush1.msra.mxu0 0.0
      %1078 = vmatprep.subr.mxu0 0.0
      %1079 = vmatpush1.msra.mxu0 0.0
      %1080 = vmatprep.subr.mxu0 0.0
      %1081 = vmatpush1.msra.mxu0 0.0
      %1082 = vmatprep.subr.mxu0 0.0
      %1083 = vmatpush1.msra.mxu0 0.0
      %1084 = vmatprep.subr.mxu0 0.0
      %1085 = vmatpush1.msra.mxu0 0.0
      %1086 = vmatprep.mubr.f32.mxu0 0.0
      %1087 = vmatmul.mubr.f32.gmra.mrb[0].mxu0 %v935
      %v1088 = vpop.f32.mrb[0].mxu0
      %v1089 = vadd.f32 %v1020, %v1088
      %v1090 = vpop.f32.mrb[0].mxu0
      %1091 = vmatprep.mubr.f32.mxu0 0.0
      %1092 = vmatmul.mubr.f32.gmra.mrb[0].mxu0 %v936
      %v1093 = vpop.f32.mrb[0].mxu0
      %v1094 = vadd.f32 %v1020, %v1093
      %v1095 = vpop.f32.mrb[0].mxu0
      %1096 = vmatprep.mubr.f32.mxu0 0.0
      %1097 = vmatmul.mubr.f32.gmra.mrb[0].mxu0 %v937
      %v1098 = vpop.f32.mrb[0].mxu0
      %v1099 = vadd.f32 %v1020, %v1098
      %v1100 = vpop.f32.mrb[0].mxu0
      %1101 = vmatprep.mubr.f32.mxu0 0.0
      %1102 = vmatmul.mubr.f32.gmra.mrb[0].mxu0 %v938
      %v1103 = vpop.f32.mrb[0].mxu0
      %v1104 = vadd.f32 %v1020, %v1103
      %v1105 = vpop.f32.mrb[0].mxu0
      %1106 = vmatprep.mubr.f32.mxu0 0.0
      %1107 = vmatmul.mubr.f32.gmra.mrb[0].mxu0 %v939
      %v1108 = vpop.f32.mrb[0].mxu0
      %v1109 = vadd.f32 %v1020, %v1108
      %v1110 = vpop.f32.mrb[0].mxu0
      %1111 = vmatprep.mubr.f32.mxu0 0.0
      %1112 = vmatmul.mubr.f32.gmra.mrb[0].mxu0 %v940
      %v1113 = vpop.f32.mrb[0].mxu0
      %v1114 = vadd.f32 %v1020, %v1113
      %v1115 = vpop.f32.mrb[0].mxu0
      %1116 = vmatprep.mubr.f32.mxu0 0.0
      %1117 = vmatmul.mubr.f32.gmra.mrb[0].mxu0 %v941
      %v1118 = vpop.f32.mrb[0].mxu0
      %v1119 = vadd.f32 %v1020, %v1118
      %v1120 = vpop.f32.mrb[0].mxu0
      %1121 = vmatprep.mubr.f32.mxu0 0.0
      %1122 = vmatmul.mubr.f32.gmra.mrb[0].mxu0 %v942
      %v1123 = vpop.f32.mrb[0].mxu0
      %v1124 = vadd.f32 %v1020, %v1123
      %v1125 = vpop.f32.mrb[0].mxu0
      %1126 = vmatprep.mubr.f32.mxu0 0.0
      %1127 = vmatmul.mubr.f32.gmra.mrb[0].mxu0 %v943
      %v1128 = vpop.f32.mrb[0].mxu0
      %v1129 = vadd.f32 %v1020, %v1128
      %v1130 = vpop.f32.mrb[0].mxu0
      %1131 = vmatprep.mubr.f32.mxu0 0.0
      %1132 = vmatmul.mubr.f32.gmra.mrb[0].mxu0 %v944
      %v1133 = vpop.f32.mrb[0].mxu0
      %v1134 = vadd.f32 %v1020, %v1133
      %v1135 = vpop.f32.mrb[0].mxu0
      %1136 = vmatprep.mubr.f32.mxu0 0.0
      %1137 = vmatmul.mubr.f32.gmra.mrb[0].mxu0 %v945
      %v1138 = vpop.f32.mrb[0].mxu0
      %v1139 = vadd.f32 %v1020, %v1138
      %v1140 = vpop.f32.mrb[0].mxu0
      %1141 = vmatprep.mubr.f32.mxu0 0.0
      %1142 = vmatmul.mubr.f32.gmra.mrb[0].mxu0 %v946
      %v1143 = vpop.f32.mrb[0].mxu0
      %v1144 = vadd.f32 %v1020, %v1143
      %v1145 = vpop.f32.mrb[0].mxu0
      %1146 = vmatprep.mubr.f32.mxu0 0.0
      %1147 = vmatmul.mubr.f32.gmra.mrb[0].mxu0 %v947
      %v1148 = vpop.f32.mrb[0].mxu0
      %v1149 = vadd.f32 %v1020, %v1148
      %v1150 = vpop.f32.mrb[0].mxu0
      %1151 = vmatprep.mubr.f32.mxu0 0.0
      %1152 = vmatmul.mubr.f32.gmra.mrb[0].mxu0 %v948
      %v1153 = vpop.f32.mrb[0].mxu0
      %v1154 = vadd.f32 %v1020, %v1153
      %v1155 = vpop.f32.mrb[0].mxu0
      %1156 = vmatprep.mubr.f32.mxu0 0.0
      %1157 = vmatmul.mubr.f32.gmra.mrb[0].mxu0 %v949
      %v1158 = vpop.f32.mrb[0].mxu0
      %v1159 = vadd.f32 %v1020, %v1158
      %v1160 = vpop.f32.mrb[0].mxu0
      %1161 = vmatprep.mubr.f32.mxu0 0.0
      %1162 = vmatmul.mubr.f32.gmra.mrb[0].mxu0 %v950
      %v1163 = vpop.f32.mrb[0].mxu0
      %v1164 = vadd.f32 %v1020, %v1163
      %v1165 = vpop.f32.mrb[0].mxu0
      %1166 = vmatprep.mubr.f32.mxu0 0.0
      %1167 = vmatmul.mubr.f32.gmra.mrb[0].mxu0 %v951
      %v1168 = vpop.f32.mrb[0].mxu0
      %v1169 = vadd.f32 %v1020, %v1168
      %v1170 = vpop.f32.mrb[0].mxu0
      %1171 = vmatprep.mubr.f32.mxu0 0.0
      %1172 = vmatmul.mubr.f32.gmra.mrb[0].mxu0 %v952
      %v1173 = vpop.f32.mrb[0].mxu0
      %v1174 = vadd.f32 %v1020, %v1173
      %v1175 = vpop.f32.mrb[0].mxu0
      %1176 = vmatprep.mubr.f32.mxu0 0.0
      %1177 = vmatmul.mubr.f32.gmra.mrb[0].mxu0 %v953
      %v1178 = vpop.f32.mrb[0].mxu0
      %v1179 = vadd.f32 %v1020, %v1178
      %v1180 = vpop.f32.mrb[0].mxu0
      %1181 = vmatprep.mubr.f32.mxu0 0.0
      %1182 = vmatmul.mubr.f32.gmra.mrb[0].mxu0 %v954
      %v1183 = vpop.f32.mrb[0].mxu0
      %v1184 = vadd.f32 %v1020, %v1183
      %v1185 = vpop.f32.mrb[0].mxu0
      %1186 = vmatprep.mubr.f32.mxu0 0.0
      %1187 = vmatmul.mubr.f32.gmra.mrb[0].mxu0 %v955
      %v1188 = vpop.f32.mrb[0].mxu0
      %v1189 = vadd.f32 %v1020, %v1188
      %v1190 = vpop.f32.mrb[0].mxu0
      %1191 = vmatprep.mubr.f32.mxu0 0.0
      %1192 = vmatmul.mubr.f32.gmra.mrb[0].mxu0 %v956
      %v1193 = vpop.f32.mrb[0].mxu0
      %v1194 = vadd.f32 %v1020, %v1193
      %v1195 = vpop.f32.mrb[0].mxu0
      %1196 = vmatprep.mubr.f32.mxu0 0.0
      %1197 = vmatmul.mubr.f32.gmra.mrb[0].mxu0 %v957
      %v1198 = vpop.f32.mrb[0].mxu0
      %v1199 = vadd.f32 %v1020, %v1198
      %v1200 = vpop.f32.mrb[0].mxu0
      %1201 = vmatprep.mubr.f32.mxu0 0.0
      %1202 = vmatmul.mubr.f32.gmra.mrb[0].mxu0 %v958
      %v1203 = vpop.f32.mrb[0].mxu0
      %v1204 = vadd.f32 %v1020, %v1203
      %v1205 = vpop.f32.mrb[0].mxu0
      %1206 = vmatprep.mubr.f32.mxu0 0.0
      %1207 = vmatmul.mubr.f32.gmra.mrb[0].mxu0 %v959
      %v1208 = vpop.f32.mrb[0].mxu0
      %v1209 = vadd.f32 %v1020, %v1208
      %v1210 = vpop.f32.mrb[0].mxu0
      %1211 = vmatprep.mubr.f32.mxu0 0.0
      %1212 = vmatmul.mubr.f32.gmra.mrb[0].mxu0 %v960
      %v1213 = vpop.f32.mrb[0].mxu0
      %v1214 = vadd.f32 %v1020, %v1213
      %v1215 = vpop.f32.mrb[0].mxu0
      %1216 = vmatprep.mubr.f32.mxu0 0.0
      %1217 = vmatmul.mubr.f32.gmra.mrb[0].mxu0 %v961
      %v1218 = vpop.f32.mrb[0].mxu0
      %v1219 = vadd.f32 %v1020, %v1218
      %v1220 = vpop.f32.mrb[0].mxu0
      %1221 = vmatprep.mubr.f32.mxu0 0.0
      %1222 = vmatmul.mubr.f32.gmra.mrb[0].mxu0 %v962
      %v1223 = vpop.f32.mrb[0].mxu0
      %v1224 = vadd.f32 %v1020, %v1223
      %v1225 = vpop.f32.mrb[0].mxu0
      %1226 = vmatprep.mubr.f32.mxu0 0.0
      %1227 = vmatmul.mubr.f32.gmra.mrb[0].mxu0 %v963
      %v1228 = vpop.f32.mrb[0].mxu0
      %v1229 = vadd.f32 %v1020, %v1228
      %v1230 = vpop.f32.mrb[0].mxu0
      %1231 = vmatprep.mubr.f32.mxu0 0.0
      %1232 = vmatmul.mubr.f32.gmra.mrb[0].mxu0 %v964
      %v1233 = vpop.f32.mrb[0].mxu0
      %v1234 = vadd.f32 %v1020, %v1233
      %v1235 = vpop.f32.mrb[0].mxu0
      %1236 = vmatprep.mubr.f32.mxu0 0.0
      %1237 = vmatmul.mubr.f32.gmra.mrb[0].mxu0 %v965
      %v1238 = vpop.f32.mrb[0].mxu0
      %v1239 = vadd.f32 %v1020, %v1238
      %v1240 = vpop.f32.mrb[0].mxu0
      %1241 = vmatprep.mubr.f32.mxu0 0.0
      %1242 = vmatmul.mubr.f32.gmra.mrb[0].mxu0 %v966
      %v1243 = vpop.f32.mrb[0].mxu0
      %v1244 = vadd.f32 %v1020, %v1243
      %v1245 = vpop.f32.mrb[0].mxu0
      %1246 = vmatprep.mubr.f32.mxu0 0.0
      %1247 = vmatmul.mubr.f32.gmra.mrb[0].mxu0 %v967
      %v1248 = vpop.f32.mrb[0].mxu0
      %v1249 = vadd.f32 %v1020, %v1248
      %v1250 = vpop.f32.mrb[0].mxu0
      %1251 = vmatprep.mubr.f32.mxu0 0.0
      %1252 = vmatmul.mubr.f32.gmra.mrb[0].mxu0 %v968
      %v1253 = vpop.f32.mrb[0].mxu0
      %v1254 = vadd.f32 %v1020, %v1253
      %v1255 = vpop.f32.mrb[0].mxu0
      %1256 = vmatprep.mubr.f32.mxu0 0.0
      %1257 = vmatmul.mubr.f32.gmra.mrb[0].mxu0 %v969
      %v1258 = vpop.f32.mrb[0].mxu0
      %v1259 = vadd.f32 %v1020, %v1258
      %v1260 = vpop.f32.mrb[0].mxu0
      %1261 = vmatprep.mubr.f32.mxu0 0.0
      %1262 = vmatmul.mubr.f32.gmra.mrb[0].mxu0 %v970
      %v1263 = vpop.f32.mrb[0].mxu0
      %v1264 = vadd.f32 %v1020, %v1263
      %v1265 = vpop.f32.mrb[0].mxu0
      %1266 = vmatprep.mubr.f32.mxu0 0.0
      %1267 = vmatmul.mubr.f32.gmra.mrb[0].mxu0 %v971
      %v1268 = vpop.f32.mrb[0].mxu0
      %v1269 = vadd.f32 %v1020, %v1268
      %v1270 = vpop.f32.mrb[0].mxu0
      %1271 = vmatprep.mubr.f32.mxu0 0.0
      %1272 = vmatmul.mubr.f32.gmra.mrb[0].mxu0 %v972
      %v1273 = vpop.f32.mrb[0].mxu0
      %v1274 = vadd.f32 %v1020, %v1273
      %v1275 = vpop.f32.mrb[0].mxu0
      %1276 = vmatprep.mubr.f32.mxu0 0.0
      %1277 = vmatmul.mubr.f32.gmra.mrb[0].mxu0 %v973
      %v1278 = vpop.f32.mrb[0].mxu0
      %v1279 = vadd.f32 %v1020, %v1278
      %v1280 = vpop.f32.mrb[0].mxu0
      %1281 = vmatprep.mubr.f32.mxu0 0.0
      %1282 = vmatmul.mubr.f32.gmra.mrb[0].mxu0 %v974
      %v1283 = vpop.f32.mrb[0].mxu0
      %v1284 = vadd.f32 %v1020, %v1283
      %v1285 = vpop.f32.mrb[0].mxu0
      %1286 = vmatprep.mubr.f32.mxu0 0.0
      %1287 = vmatmul.mubr.f32.gmra.mrb[0].mxu0 %v975
      %v1288 = vpop.f32.mrb[0].mxu0
      %v1289 = vadd.f32 %v1020, %v1288
      %v1290 = vpop.f32.mrb[0].mxu0
      %1291 = vmatprep.mubr.f32.mxu0 0.0
      %1292 = vmatmul.mubr.f32.gmra.mrb[0].mxu0 %v976
      %v1293 = vpop.f32.mrb[0].mxu0
      %v1294 = vadd.f32 %v1020, %v1293
      %v1295 = vpop.f32.mrb[0].mxu0
      %1296 = vmatprep.mubr.f32.mxu0 0.0
      %1297 = vmatmul.mubr.f32.gmra.mrb[0].mxu0 %v977
      %v1298 = vpop.f32.mrb[0].mxu0
      %v1299 = vadd.f32 %v1020, %v1298
      %v1300 = vpop.f32.mrb[0].mxu0
      %1301 = vmatprep.mubr.f32.mxu0 0.0
      %1302 = vmatmul.mubr.f32.gmra.mrb[0].mxu0 %v978
      %v1303 = vpop.f32.mrb[0].mxu0
      %v1304 = vadd.f32 %v1020, %v1303
      %v1305 = vpop.f32.mrb[0].mxu0
      %1306 = vmatprep.mubr.f32.mxu0 0.0
      %1307 = vmatmul.mubr.f32.gmra.mrb[0].mxu0 %v979
      %v1308 = vpop.f32.mrb[0].mxu0
      %v1309 = vadd.f32 %v1020, %v1308
      %v1310 = vpop.f32.mrb[0].mxu0
      %1311 = vmatprep.mubr.f32.mxu0 0.0
      %1312 = vmatmul.mubr.f32.gmra.mrb[0].mxu0 %v980
      %v1313 = vpop.f32.mrb[0].mxu0
      %v1314 = vadd.f32 %v1020, %v1313
      %v1315 = vpop.f32.mrb[0].mxu0
      %1316 = vmatprep.mubr.f32.mxu0 0.0
      %1317 = vmatmul.mubr.f32.gmra.mrb[0].mxu0 %v981
      %v1318 = vpop.f32.mrb[0].mxu0
      %v1319 = vadd.f32 %v1020, %v1318
      %v1320 = vpop.f32.mrb[0].mxu0
      %1321 = vmatprep.mubr.f32.mxu0 0.0
      %1322 = vmatmul.mubr.f32.gmra.mrb[0].mxu0 %v982
      %v1323 = vpop.f32.mrb[0].mxu0
      %v1324 = vadd.f32 %v1020, %v1323
      %v1325 = vpop.f32.mrb[0].mxu0
      %1326 = vmatprep.mubr.f32.mxu0 0.0
      %1327 = vmatmul.mubr.f32.gmra.mrb[0].mxu0 %v983
      %v1328 = vpop.f32.mrb[0].mxu0
      %v1329 = vadd.f32 %v1020, %v1328
      %v1330 = vpop.f32.mrb[0].mxu0
      %1331 = vmatprep.mubr.f32.mxu0 0.0
      %1332 = vmatmul.mubr.f32.gmra.mrb[0].mxu0 %v984
      %v1333 = vpop.f32.mrb[0].mxu0
      %v1334 = vadd.f32 %v1020, %v1333
      %v1335 = vpop.f32.mrb[0].mxu0
      %1336 = vmatprep.mubr.f32.mxu0 0.0
      %1337 = vmatmul.mubr.f32.gmra.mrb[0].mxu0 %v985
      %v1338 = vpop.f32.mrb[0].mxu0
      %v1339 = vadd.f32 %v1020, %v1338
      %v1340 = vpop.f32.mrb[0].mxu0
      %1341 = vmatprep.mubr.f32.mxu0 0.0
      %1342 = vmatmul.mubr.f32.gmra.mrb[0].mxu0 %v986
      %v1343 = vpop.f32.mrb[0].mxu0
      %v1344 = vadd.f32 %v1020, %v1343
      %v1345 = vpop.f32.mrb[0].mxu0
      %1346 = vmatprep.mubr.f32.mxu0 0.0
      %1347 = vmatmul.mubr.f32.gmra.mrb[0].mxu0 %v987
      %v1348 = vpop.f32.mrb[0].mxu0
      %v1349 = vadd.f32 %v1020, %v1348
      %v1350 = vpop.f32.mrb[0].mxu0
      %1351 = vmatprep.mubr.f32.mxu0 0.0
      %1352 = vmatmul.mubr.f32.gmra.mrb[0].mxu0 %v988
      %v1353 = vpop.f32.mrb[0].mxu0
      %v1354 = vadd.f32 %v1020, %v1353
      %v1355 = vpop.f32.mrb[0].mxu0
      %1356 = vmatprep.mubr.f32.mxu0 0.0
      %1357 = vmatmul.mubr.f32.gmra.mrb[0].mxu0 %v989
      %v1358 = vpop.f32.mrb[0].mxu0
      %v1359 = vadd.f32 %v1020, %v1358
      %v1360 = vpop.f32.mrb[0].mxu0
      %1361 = vmatprep.mubr.f32.mxu0 0.0
      %1362 = vmatmul.mubr.f32.gmra.mrb[0].mxu0 %v990
      %v1363 = vpop.f32.mrb[0].mxu0
      %v1364 = vadd.f32 %v1020, %v1363
      %v1365 = vpop.f32.mrb[0].mxu0
      %1366 = vmatprep.mubr.f32.mxu0 0.0
      %1367 = vmatmul.mubr.f32.gmra.mrb[0].mxu0 %v991
      %v1368 = vpop.f32.mrb[0].mxu0
      %v1369 = vadd.f32 %v1020, %v1368
      %v1370 = vpop.f32.mrb[0].mxu0
      %1371 = vmatprep.mubr.f32.mxu0 0.0
      %1372 = vmatmul.mubr.f32.gmra.mrb[0].mxu0 %v992
      %v1373 = vpop.f32.mrb[0].mxu0
      %v1374 = vadd.f32 %v1020, %v1373
      %v1375 = vpop.f32.mrb[0].mxu0
      %1376 = vmatprep.mubr.f32.mxu0 0.0
      %1377 = vmatmul.mubr.f32.gmra.mrb[0].mxu0 %v993
      %v1378 = vpop.f32.mrb[0].mxu0
      %v1379 = vadd.f32 %v1020, %v1378
      %v1380 = vpop.f32.mrb[0].mxu0
      %1381 = vmatprep.mubr.f32.mxu0 0.0
      %1382 = vmatmul.mubr.f32.gmra.mrb[0].mxu0 %v994
      %v1383 = vpop.f32.mrb[0].mxu0
      %v1384 = vadd.f32 %v1020, %v1383
      %v1385 = vpop.f32.mrb[0].mxu0
      %1386 = vmatprep.mubr.f32.mxu0 0.0
      %1387 = vmatmul.mubr.f32.gmra.mrb[0].mxu0 %v995
      %v1388 = vpop.f32.mrb[0].mxu0
      %v1389 = vadd.f32 %v1020, %v1388
      %v1390 = vpop.f32.mrb[0].mxu0
      %1391 = vmatprep.mubr.f32.mxu0 0.0
      %1392 = vmatmul.mubr.f32.gmra.mrb[0].mxu0 %v996
      %v1393 = vpop.f32.mrb[0].mxu0
      %v1394 = vadd.f32 %v1020, %v1393
      %v1395 = vpop.f32.mrb[0].mxu0
      %1396 = vmatprep.mubr.f32.mxu0 0.0
      %1397 = vmatmul.mubr.f32.gmra.mrb[0].mxu0 %v997
      %v1398 = vpop.f32.mrb[0].mxu0
      %v1399 = vadd.f32 %v1020, %v1398
      %v1400 = vpop.f32.mrb[0].mxu0
      %1401 = vmatprep.mubr.f32.mxu0 0.0
      %1402 = vmatmul.mubr.f32.gmra.mrb[0].mxu0 %v998
      %v1403 = vpop.f32.mrb[0].mxu0
      %v1404 = vadd.f32 %v1020, %v1403
      %v1405 = vpop.f32.mrb[0].mxu0
      %1406 = vdwg.mxu0
      %v1407 = vmax.f32 %v1089, 0.0
      %v1408 = vmax.f32 %v1094, 0.0
      %v1409 = vmax.f32 %v1099, 0.0
      %v1410 = vmax.f32 %v1104, 0.0
      %v1411 = vmax.f32 %v1109, 0.0
      %v1412 = vmax.f32 %v1114, 0.0
      %v1413 = vmax.f32 %v1119, 0.0
      %v1414 = vmax.f32 %v1124, 0.0
      %v1415 = vmax.f32 %v1129, 0.0
      %v1416 = vmax.f32 %v1134, 0.0
      %v1417 = vmax.f32 %v1139, 0.0
      %v1418 = vmax.f32 %v1144, 0.0
      %v1419 = vmax.f32 %v1149, 0.0
      %v1420 = vmax.f32 %v1154, 0.0
      %v1421 = vmax.f32 %v1159, 0.0
      %v1422 = vmax.f32 %v1164, 0.0
      %v1423 = vmax.f32 %v1169, 0.0
      %v1424 = vmax.f32 %v1174, 0.0
      %v1425 = vmax.f32 %v1179, 0.0
      %v1426 = vmax.f32 %v1184, 0.0
      %v1427 = vmax.f32 %v1189, 0.0
      %v1428 = vmax.f32 %v1194, 0.0
      %v1429 = vmax.f32 %v1199, 0.0
      %v1430 = vmax.f32 %v1204, 0.0
      %v1431 = vmax.f32 %v1209, 0.0
      %v1432 = vmax.f32 %v1214, 0.0
      %v1433 = vmax.f32 %v1219, 0.0
      %v1434 = vmax.f32 %v1224, 0.0
      %v1435 = vmax.f32 %v1229, 0.0
      %v1436 = vmax.f32 %v1234, 0.0
      %v1437 = vmax.f32 %v1239, 0.0
      %v1438 = vmax.f32 %v1244, 0.0
      %v1439 = vmax.f32 %v1249, 0.0
      %v1440 = vmax.f32 %v1254, 0.0
      %v1441 = vmax.f32 %v1259, 0.0
      %v1442 = vmax.f32 %v1264, 0.0
      %v1443 = vmax.f32 %v1269, 0.0
      %v1444 = vmax.f32 %v1274, 0.0
      %v1445 = vmax.f32 %v1279, 0.0
      %v1446 = vmax.f32 %v1284, 0.0
      %v1447 = vmax.f32 %v1289, 0.0
      %v1448 = vmax.f32 %v1294, 0.0
      %v1449 = vmax.f32 %v1299, 0.0
      %v1450 = vmax.f32 %v1304, 0.0
      %v1451 = vmax.f32 %v1309, 0.0
      %v1452 = vmax.f32 %v1314, 0.0
      %v1453 = vmax.f32 %v1319, 0.0
      %v1454 = vmax.f32 %v1324, 0.0
      %v1455 = vmax.f32 %v1329, 0.0
      %v1456 = vmax.f32 %v1334, 0.0
      %v1457 = vmax.f32 %v1339, 0.0
      %v1458 = vmax.f32 %v1344, 0.0
      %v1459 = vmax.f32 %v1349, 0.0
      %v1460 = vmax.f32 %v1354, 0.0
      %v1461 = vmax.f32 %v1359, 0.0
      %v1462 = vmax.f32 %v1364, 0.0
      %v1463 = vmax.f32 %v1369, 0.0
      %v1464 = vmax.f32 %v1374, 0.0
      %v1465 = vmax.f32 %v1379, 0.0
      %v1466 = vmax.f32 %v1384, 0.0
      %v1467 = vmax.f32 %v1389, 0.0
      %v1468 = vmax.f32 %v1394, 0.0
      %v1469 = vmax.f32 %v1399, 0.0
      %v1470 = vmax.f32 %v1404, 0.0
      %v1471 = vld [vmem:[%s5] sm:$0xff]
      %v1472 = vld [vmem:[%s5 + $0x8] sm:$0xff]
      %v1473 = vld [vmem:[%s5 + $0x10] sm:$0xff]
      %v1474 = vld [vmem:[%s5 + $0x18] sm:$0xff]
      %v1475 = vld [vmem:[%s5 + $0x20] sm:$0xff]
      %v1476 = vld [vmem:[%s5 + $0x28] sm:$0xff]
      %v1477 = vld [vmem:[%s5 + $0x30] sm:$0xff]
      %v1478 = vld [vmem:[%s5 + $0x38] sm:$0xff]
      %v1479 = vld [vmem:[%s5 + $0x40] sm:$0xff]
      %v1480 = vld [vmem:[%s5 + $0x48] sm:$0xff]
      %v1481 = vld [vmem:[%s5 + $0x50] sm:$0xff]
      %v1482 = vld [vmem:[%s5 + $0x58] sm:$0xff]
      %v1483 = vld [vmem:[%s5 + $0x60] sm:$0xff]
      %v1484 = vld [vmem:[%s5 + $0x68] sm:$0xff]
      %v1485 = vld [vmem:[%s5 + $0x70] sm:$0xff]
      %v1486 = vld [vmem:[%s5 + $0x78] sm:$0xff]
      %v1487 = vld [vmem:[%s6] sm:$0x1]
      %v1489 = vlaneseq
      %v1490 = vshrl.u32 %v1489, 7
      %v1491 = vsub.s32 0, %v1490
      %v1492 = vrot.slane %v1487, %v1491
      %1494 = vmatprep.subr.mxu0 0.0
      %1495 = vmatpush1.msra.mxu0 %v1471
      %1496 = vmatprep.subr.mxu0 0.0
      %1497 = vmatpush1.msra.mxu0 %v1472
      %1498 = vmatprep.subr.mxu0 0.0
      %1499 = vmatpush1.msra.mxu0 %v1473
      %1500 = vmatprep.subr.mxu0 0.0
      %1501 = vmatpush1.msra.mxu0 %v1474
      %1502 = vmatprep.subr.mxu0 0.0
      %1503 = vmatpush1.msra.mxu0 %v1475
      %1504 = vmatprep.subr.mxu0 0.0
      %1505 = vmatpush1.msra.mxu0 %v1476
      %1506 = vmatprep.subr.mxu0 0.0
      %1507 = vmatpush1.msra.mxu0 %v1477
      %1508 = vmatprep.subr.mxu0 0.0
      %1509 = vmatpush1.msra.mxu0 %v1478
      %1510 = vmatprep.subr.mxu0 0.0
      %1511 = vmatpush1.msra.mxu0 %v1479
      %1512 = vmatprep.subr.mxu0 0.0
      %1513 = vmatpush1.msra.mxu0 %v1480
      %1514 = vmatprep.subr.mxu0 0.0
      %1515 = vmatpush1.msra.mxu0 %v1481
      %1516 = vmatprep.subr.mxu0 0.0
      %1517 = vmatpush1.msra.mxu0 %v1482
      %1518 = vmatprep.subr.mxu0 0.0
      %1519 = vmatpush1.msra.mxu0 %v1483
      %1520 = vmatprep.subr.mxu0 0.0
      %1521 = vmatpush1.msra.mxu0 %v1484
      %1522 = vmatprep.subr.mxu0 0.0
      %1523 = vmatpush1.msra.mxu0 %v1485
      %1524 = vmatprep.subr.mxu0 0.0
      %1525 = vmatpush1.msra.mxu0 %v1486
      %1526 = vmatprep.subr.mxu0 0.0
      %1527 = vmatpush1.msra.mxu0 0.0
      %1528 = vmatprep.subr.mxu0 0.0
      %1529 = vmatpush1.msra.mxu0 0.0
      %1530 = vmatprep.subr.mxu0 0.0
      %1531 = vmatpush1.msra.mxu0 0.0
      %1532 = vmatprep.subr.mxu0 0.0
      %1533 = vmatpush1.msra.mxu0 0.0
      %1534 = vmatprep.subr.mxu0 0.0
      %1535 = vmatpush1.msra.mxu0 0.0
      %1536 = vmatprep.subr.mxu0 0.0
      %1537 = vmatpush1.msra.mxu0 0.0
      %1538 = vmatprep.subr.mxu0 0.0
      %1539 = vmatpush1.msra.mxu0 0.0
      %1540 = vmatprep.subr.mxu0 0.0
      %1541 = vmatpush1.msra.mxu0 0.0
      %1542 = vmatprep.subr.mxu0 0.0
      %1543 = vmatpush1.msra.mxu0 0.0
      %1544 = vmatprep.subr.mxu0 0.0
      %1545 = vmatpush1.msra.mxu0 0.0
      %1546 = vmatprep.subr.mxu0 0.0
      %1547 = vmatpush1.msra.mxu0 0.0
      %1548 = vmatprep.subr.mxu0 0.0
      %1549 = vmatpush1.msra.mxu0 0.0
      %1550 = vmatprep.subr.mxu0 0.0
      %1551 = vmatpush1.msra.mxu0 0.0
      %1552 = vmatprep.subr.mxu0 0.0
      %1553 = vmatpush1.msra.mxu0 0.0
      %1554 = vmatprep.subr.mxu0 0.0
      %1555 = vmatpush1.msra.mxu0 0.0
      %1556 = vmatprep.subr.mxu0 0.0
      %1557 = vmatpush1.msra.mxu0 0.0
      %1558 = vmatprep.mubr.f32.mxu0 0.0
      %1559 = vmatmul.mubr.f32.gmra.mrb[0].mxu0 %v1407
      %v1560 = vpop.f32.mrb[0].mxu0
      %v1561 = vadd.f32 %v1492, %v1560
      %v1562 = vpop.f32.mrb[0].mxu0
      %1563 = vmatprep.mubr.f32.mxu0 0.0
      %1564 = vmatmul.mubr.f32.gmra.mrb[0].mxu0 %v1408
      %v1565 = vpop.f32.mrb[0].mxu0
      %v1566 = vadd.f32 %v1492, %v1565
      %v1567 = vpop.f32.mrb[0].mxu0
      %1568 = vmatprep.mubr.f32.mxu0 0.0
      %1569 = vmatmul.mubr.f32.gmra.mrb[0].mxu0 %v1409
      %v1570 = vpop.f32.mrb[0].mxu0
      %v1571 = vadd.f32 %v1492, %v1570
      %v1572 = vpop.f32.mrb[0].mxu0
      %1573 = vmatprep.mubr.f32.mxu0 0.0
      %1574 = vmatmul.mubr.f32.gmra.mrb[0].mxu0 %v1410
      %v1575 = vpop.f32.mrb[0].mxu0
      %v1576 = vadd.f32 %v1492, %v1575
      %v1577 = vpop.f32.mrb[0].mxu0
      %1578 = vmatprep.mubr.f32.mxu0 0.0
      %1579 = vmatmul.mubr.f32.gmra.mrb[0].mxu0 %v1411
      %v1580 = vpop.f32.mrb[0].mxu0
      %v1581 = vadd.f32 %v1492, %v1580
      %v1582 = vpop.f32.mrb[0].mxu0
      %1583 = vmatprep.mubr.f32.mxu0 0.0
      %1584 = vmatmul.mubr.f32.gmra.mrb[0].mxu0 %v1412
      %v1585 = vpop.f32.mrb[0].mxu0
      %v1586 = vadd.f32 %v1492, %v1585
      %v1587 = vpop.f32.mrb[0].mxu0
      %1588 = vmatprep.mubr.f32.mxu0 0.0
      %1589 = vmatmul.mubr.f32.gmra.mrb[0].mxu0 %v1413
      %v1590 = vpop.f32.mrb[0].mxu0
      %v1591 = vadd.f32 %v1492, %v1590
      %v1592 = vpop.f32.mrb[0].mxu0
      %1593 = vmatprep.mubr.f32.mxu0 0.0
      %1594 = vmatmul.mubr.f32.gmra.mrb[0].mxu0 %v1414
      %v1595 = vpop.f32.mrb[0].mxu0
      %v1596 = vadd.f32 %v1492, %v1595
      %v1597 = vpop.f32.mrb[0].mxu0
      %1598 = vmatprep.mubr.f32.mxu0 0.0
      %1599 = vmatmul.mubr.f32.gmra.mrb[0].mxu0 %v1415
      %v1600 = vpop.f32.mrb[0].mxu0
      %v1601 = vadd.f32 %v1492, %v1600
      %v1602 = vpop.f32.mrb[0].mxu0
      %1603 = vmatprep.mubr.f32.mxu0 0.0
      %1604 = vmatmul.mubr.f32.gmra.mrb[0].mxu0 %v1416
      %v1605 = vpop.f32.mrb[0].mxu0
      %v1606 = vadd.f32 %v1492, %v1605
      %v1607 = vpop.f32.mrb[0].mxu0
      %1608 = vmatprep.mubr.f32.mxu0 0.0
      %1609 = vmatmul.mubr.f32.gmra.mrb[0].mxu0 %v1417
      %v1610 = vpop.f32.mrb[0].mxu0
      %v1611 = vadd.f32 %v1492, %v1610
      %v1612 = vpop.f32.mrb[0].mxu0
      %1613 = vmatprep.mubr.f32.mxu0 0.0
      %1614 = vmatmul.mubr.f32.gmra.mrb[0].mxu0 %v1418
      %v1615 = vpop.f32.mrb[0].mxu0
      %v1616 = vadd.f32 %v1492, %v1615
      %v1617 = vpop.f32.mrb[0].mxu0
      %1618 = vmatprep.mubr.f32.mxu0 0.0
      %1619 = vmatmul.mubr.f32.gmra.mrb[0].mxu0 %v1419
      %v1620 = vpop.f32.mrb[0].mxu0
      %v1621 = vadd.f32 %v1492, %v1620
      %v1622 = vpop.f32.mrb[0].mxu0
      %1623 = vmatprep.mubr.f32.mxu0 0.0
      %1624 = vmatmul.mubr.f32.gmra.mrb[0].mxu0 %v1420
      %v1625 = vpop.f32.mrb[0].mxu0
      %v1626 = vadd.f32 %v1492, %v1625
      %v1627 = vpop.f32.mrb[0].mxu0
      %1628 = vmatprep.mubr.f32.mxu0 0.0
      %1629 = vmatmul.mubr.f32.gmra.mrb[0].mxu0 %v1421
      %v1630 = vpop.f32.mrb[0].mxu0
      %v1631 = vadd.f32 %v1492, %v1630
      %v1632 = vpop.f32.mrb[0].mxu0
      %1633 = vmatprep.mubr.f32.mxu0 0.0
      %1634 = vmatmul.mubr.f32.gmra.mrb[0].mxu0 %v1422
      %v1635 = vpop.f32.mrb[0].mxu0
      %v1636 = vadd.f32 %v1492, %v1635
      %v1637 = vpop.f32.mrb[0].mxu0
      %1638 = vmatprep.mubr.f32.mxu0 0.0
      %1639 = vmatmul.mubr.f32.gmra.mrb[0].mxu0 %v1423
      %v1640 = vpop.f32.mrb[0].mxu0
      %v1641 = vadd.f32 %v1492, %v1640
      %v1642 = vpop.f32.mrb[0].mxu0
      %1643 = vmatprep.mubr.f32.mxu0 0.0
      %1644 = vmatmul.mubr.f32.gmra.mrb[0].mxu0 %v1424
      %v1645 = vpop.f32.mrb[0].mxu0
      %v1646 = vadd.f32 %v1492, %v1645
      %v1647 = vpop.f32.mrb[0].mxu0
      %1648 = vmatprep.mubr.f32.mxu0 0.0
      %1649 = vmatmul.mubr.f32.gmra.mrb[0].mxu0 %v1425
      %v1650 = vpop.f32.mrb[0].mxu0
      %v1651 = vadd.f32 %v1492, %v1650
      %v1652 = vpop.f32.mrb[0].mxu0
      %1653 = vmatprep.mubr.f32.mxu0 0.0
      %1654 = vmatmul.mubr.f32.gmra.mrb[0].mxu0 %v1426
      %v1655 = vpop.f32.mrb[0].mxu0
      %v1656 = vadd.f32 %v1492, %v1655
      %v1657 = vpop.f32.mrb[0].mxu0
      %1658 = vmatprep.mubr.f32.mxu0 0.0
      %1659 = vmatmul.mubr.f32.gmra.mrb[0].mxu0 %v1427
      %v1660 = vpop.f32.mrb[0].mxu0
      %v1661 = vadd.f32 %v1492, %v1660
      %v1662 = vpop.f32.mrb[0].mxu0
      %1663 = vmatprep.mubr.f32.mxu0 0.0
      %1664 = vmatmul.mubr.f32.gmra.mrb[0].mxu0 %v1428
      %v1665 = vpop.f32.mrb[0].mxu0
      %v1666 = vadd.f32 %v1492, %v1665
      %v1667 = vpop.f32.mrb[0].mxu0
      %1668 = vmatprep.mubr.f32.mxu0 0.0
      %1669 = vmatmul.mubr.f32.gmra.mrb[0].mxu0 %v1429
      %v1670 = vpop.f32.mrb[0].mxu0
      %v1671 = vadd.f32 %v1492, %v1670
      %v1672 = vpop.f32.mrb[0].mxu0
      %1673 = vmatprep.mubr.f32.mxu0 0.0
      %1674 = vmatmul.mubr.f32.gmra.mrb[0].mxu0 %v1430
      %v1675 = vpop.f32.mrb[0].mxu0
      %v1676 = vadd.f32 %v1492, %v1675
      %v1677 = vpop.f32.mrb[0].mxu0
      %1678 = vmatprep.mubr.f32.mxu0 0.0
      %1679 = vmatmul.mubr.f32.gmra.mrb[0].mxu0 %v1431
      %v1680 = vpop.f32.mrb[0].mxu0
      %v1681 = vadd.f32 %v1492, %v1680
      %v1682 = vpop.f32.mrb[0].mxu0
      %1683 = vmatprep.mubr.f32.mxu0 0.0
      %1684 = vmatmul.mubr.f32.gmra.mrb[0].mxu0 %v1432
      %v1685 = vpop.f32.mrb[0].mxu0
      %v1686 = vadd.f32 %v1492, %v1685
      %v1687 = vpop.f32.mrb[0].mxu0
      %1688 = vmatprep.mubr.f32.mxu0 0.0
      %1689 = vmatmul.mubr.f32.gmra.mrb[0].mxu0 %v1433
      %v1690 = vpop.f32.mrb[0].mxu0
      %v1691 = vadd.f32 %v1492, %v1690
      %v1692 = vpop.f32.mrb[0].mxu0
      %1693 = vmatprep.mubr.f32.mxu0 0.0
      %1694 = vmatmul.mubr.f32.gmra.mrb[0].mxu0 %v1434
      %v1695 = vpop.f32.mrb[0].mxu0
      %v1696 = vadd.f32 %v1492, %v1695
      %v1697 = vpop.f32.mrb[0].mxu0
      %1698 = vmatprep.mubr.f32.mxu0 0.0
      %1699 = vmatmul.mubr.f32.gmra.mrb[0].mxu0 %v1435
      %v1700 = vpop.f32.mrb[0].mxu0
      %v1701 = vadd.f32 %v1492, %v1700
      %v1702 = vpop.f32.mrb[0].mxu0
      %1703 = vmatprep.mubr.f32.mxu0 0.0
      %1704 = vmatmul.mubr.f32.gmra.mrb[0].mxu0 %v1436
      %v1705 = vpop.f32.mrb[0].mxu0
      %v1706 = vadd.f32 %v1492, %v1705
      %v1707 = vpop.f32.mrb[0].mxu0
      %1708 = vmatprep.mubr.f32.mxu0 0.0
      %1709 = vmatmul.mubr.f32.gmra.mrb[0].mxu0 %v1437
      %v1710 = vpop.f32.mrb[0].mxu0
      %v1711 = vadd.f32 %v1492, %v1710
      %v1712 = vpop.f32.mrb[0].mxu0
      %1713 = vmatprep.mubr.f32.mxu0 0.0
      %1714 = vmatmul.mubr.f32.gmra.mrb[0].mxu0 %v1438
      %v1715 = vpop.f32.mrb[0].mxu0
      %v1716 = vadd.f32 %v1492, %v1715
      %v1717 = vpop.f32.mrb[0].mxu0
      %1718 = vmatprep.mubr.f32.mxu0 0.0
      %1719 = vmatmul.mubr.f32.gmra.mrb[0].mxu0 %v1439
      %v1720 = vpop.f32.mrb[0].mxu0
      %v1721 = vadd.f32 %v1492, %v1720
      %v1722 = vpop.f32.mrb[0].mxu0
      %1723 = vmatprep.mubr.f32.mxu0 0.0
      %1724 = vmatmul.mubr.f32.gmra.mrb[0].mxu0 %v1440
      %v1725 = vpop.f32.mrb[0].mxu0
      %v1726 = vadd.f32 %v1492, %v1725
      %v1727 = vpop.f32.mrb[0].mxu0
      %1728 = vmatprep.mubr.f32.mxu0 0.0
      %1729 = vmatmul.mubr.f32.gmra.mrb[0].mxu0 %v1441
      %v1730 = vpop.f32.mrb[0].mxu0
      %v1731 = vadd.f32 %v1492, %v1730
      %v1732 = vpop.f32.mrb[0].mxu0
      %1733 = vmatprep.mubr.f32.mxu0 0.0
      %1734 = vmatmul.mubr.f32.gmra.mrb[0].mxu0 %v1442
      %v1735 = vpop.f32.mrb[0].mxu0
      %v1736 = vadd.f32 %v1492, %v1735
      %v1737 = vpop.f32.mrb[0].mxu0
      %1738 = vmatprep.mubr.f32.mxu0 0.0
      %1739 = vmatmul.mubr.f32.gmra.mrb[0].mxu0 %v1443
      %v1740 = vpop.f32.mrb[0].mxu0
      %v1741 = vadd.f32 %v1492, %v1740
      %v1742 = vpop.f32.mrb[0].mxu0
      %1743 = vmatprep.mubr.f32.mxu0 0.0
      %1744 = vmatmul.mubr.f32.gmra.mrb[0].mxu0 %v1444
      %v1745 = vpop.f32.mrb[0].mxu0
      %v1746 = vadd.f32 %v1492, %v1745
      %v1747 = vpop.f32.mrb[0].mxu0
      %1748 = vmatprep.mubr.f32.mxu0 0.0
      %1749 = vmatmul.mubr.f32.gmra.mrb[0].mxu0 %v1445
      %v1750 = vpop.f32.mrb[0].mxu0
      %v1751 = vadd.f32 %v1492, %v1750
      %v1752 = vpop.f32.mrb[0].mxu0
      %1753 = vmatprep.mubr.f32.mxu0 0.0
      %1754 = vmatmul.mubr.f32.gmra.mrb[0].mxu0 %v1446
      %v1755 = vpop.f32.mrb[0].mxu0
      %v1756 = vadd.f32 %v1492, %v1755
      %v1757 = vpop.f32.mrb[0].mxu0
      %1758 = vmatprep.mubr.f32.mxu0 0.0
      %1759 = vmatmul.mubr.f32.gmra.mrb[0].mxu0 %v1447
      %v1760 = vpop.f32.mrb[0].mxu0
      %v1761 = vadd.f32 %v1492, %v1760
      %v1762 = vpop.f32.mrb[0].mxu0
      %1763 = vmatprep.mubr.f32.mxu0 0.0
      %1764 = vmatmul.mubr.f32.gmra.mrb[0].mxu0 %v1448
      %v1765 = vpop.f32.mrb[0].mxu0
      %v1766 = vadd.f32 %v1492, %v1765
      %v1767 = vpop.f32.mrb[0].mxu0
      %1768 = vmatprep.mubr.f32.mxu0 0.0
      %1769 = vmatmul.mubr.f32.gmra.mrb[0].mxu0 %v1449
      %v1770 = vpop.f32.mrb[0].mxu0
      %v1771 = vadd.f32 %v1492, %v1770
      %v1772 = vpop.f32.mrb[0].mxu0
      %1773 = vmatprep.mubr.f32.mxu0 0.0
      %1774 = vmatmul.mubr.f32.gmra.mrb[0].mxu0 %v1450
      %v1775 = vpop.f32.mrb[0].mxu0
      %v1776 = vadd.f32 %v1492, %v1775
      %v1777 = vpop.f32.mrb[0].mxu0
      %1778 = vmatprep.mubr.f32.mxu0 0.0
      %1779 = vmatmul.mubr.f32.gmra.mrb[0].mxu0 %v1451
      %v1780 = vpop.f32.mrb[0].mxu0
      %v1781 = vadd.f32 %v1492, %v1780
      %v1782 = vpop.f32.mrb[0].mxu0
      %1783 = vmatprep.mubr.f32.mxu0 0.0
      %1784 = vmatmul.mubr.f32.gmra.mrb[0].mxu0 %v1452
      %v1785 = vpop.f32.mrb[0].mxu0
      %v1786 = vadd.f32 %v1492, %v1785
      %v1787 = vpop.f32.mrb[0].mxu0
      %1788 = vmatprep.mubr.f32.mxu0 0.0
      %1789 = vmatmul.mubr.f32.gmra.mrb[0].mxu0 %v1453
      %v1790 = vpop.f32.mrb[0].mxu0
      %v1791 = vadd.f32 %v1492, %v1790
      %v1792 = vpop.f32.mrb[0].mxu0
      %1793 = vmatprep.mubr.f32.mxu0 0.0
      %1794 = vmatmul.mubr.f32.gmra.mrb[0].mxu0 %v1454
      %v1795 = vpop.f32.mrb[0].mxu0
      %v1796 = vadd.f32 %v1492, %v1795
      %v1797 = vpop.f32.mrb[0].mxu0
      %1798 = vmatprep.mubr.f32.mxu0 0.0
      %1799 = vmatmul.mubr.f32.gmra.mrb[0].mxu0 %v1455
      %v1800 = vpop.f32.mrb[0].mxu0
      %v1801 = vadd.f32 %v1492, %v1800
      %v1802 = vpop.f32.mrb[0].mxu0
      %1803 = vmatprep.mubr.f32.mxu0 0.0
      %1804 = vmatmul.mubr.f32.gmra.mrb[0].mxu0 %v1456
      %v1805 = vpop.f32.mrb[0].mxu0
      %v1806 = vadd.f32 %v1492, %v1805
      %v1807 = vpop.f32.mrb[0].mxu0
      %1808 = vmatprep.mubr.f32.mxu0 0.0
      %1809 = vmatmul.mubr.f32.gmra.mrb[0].mxu0 %v1457
      %v1810 = vpop.f32.mrb[0].mxu0
      %v1811 = vadd.f32 %v1492, %v1810
      %v1812 = vpop.f32.mrb[0].mxu0
      %1813 = vmatprep.mubr.f32.mxu0 0.0
      %1814 = vmatmul.mubr.f32.gmra.mrb[0].mxu0 %v1458
      %v1815 = vpop.f32.mrb[0].mxu0
      %v1816 = vadd.f32 %v1492, %v1815
      %v1817 = vpop.f32.mrb[0].mxu0
      %1818 = vmatprep.mubr.f32.mxu0 0.0
      %1819 = vmatmul.mubr.f32.gmra.mrb[0].mxu0 %v1459
      %v1820 = vpop.f32.mrb[0].mxu0
      %v1821 = vadd.f32 %v1492, %v1820
      %v1822 = vpop.f32.mrb[0].mxu0
      %1823 = vmatprep.mubr.f32.mxu0 0.0
      %1824 = vmatmul.mubr.f32.gmra.mrb[0].mxu0 %v1460
      %v1825 = vpop.f32.mrb[0].mxu0
      %v1826 = vadd.f32 %v1492, %v1825
      %v1827 = vpop.f32.mrb[0].mxu0
      %1828 = vmatprep.mubr.f32.mxu0 0.0
      %1829 = vmatmul.mubr.f32.gmra.mrb[0].mxu0 %v1461
      %v1830 = vpop.f32.mrb[0].mxu0
      %v1831 = vadd.f32 %v1492, %v1830
      %v1832 = vpop.f32.mrb[0].mxu0
      %1833 = vmatprep.mubr.f32.mxu0 0.0
      %1834 = vmatmul.mubr.f32.gmra.mrb[0].mxu0 %v1462
      %v1835 = vpop.f32.mrb[0].mxu0
      %v1836 = vadd.f32 %v1492, %v1835
      %v1837 = vpop.f32.mrb[0].mxu0
      %1838 = vmatprep.mubr.f32.mxu0 0.0
      %1839 = vmatmul.mubr.f32.gmra.mrb[0].mxu0 %v1463
      %v1840 = vpop.f32.mrb[0].mxu0
      %v1841 = vadd.f32 %v1492, %v1840
      %v1842 = vpop.f32.mrb[0].mxu0
      %1843 = vmatprep.mubr.f32.mxu0 0.0
      %1844 = vmatmul.mubr.f32.gmra.mrb[0].mxu0 %v1464
      %v1845 = vpop.f32.mrb[0].mxu0
      %v1846 = vadd.f32 %v1492, %v1845
      %v1847 = vpop.f32.mrb[0].mxu0
      %1848 = vmatprep.mubr.f32.mxu0 0.0
      %1849 = vmatmul.mubr.f32.gmra.mrb[0].mxu0 %v1465
      %v1850 = vpop.f32.mrb[0].mxu0
      %v1851 = vadd.f32 %v1492, %v1850
      %v1852 = vpop.f32.mrb[0].mxu0
      %1853 = vmatprep.mubr.f32.mxu0 0.0
      %1854 = vmatmul.mubr.f32.gmra.mrb[0].mxu0 %v1466
      %v1855 = vpop.f32.mrb[0].mxu0
      %v1856 = vadd.f32 %v1492, %v1855
      %v1857 = vpop.f32.mrb[0].mxu0
      %1858 = vmatprep.mubr.f32.mxu0 0.0
      %1859 = vmatmul.mubr.f32.gmra.mrb[0].mxu0 %v1467
      %v1860 = vpop.f32.mrb[0].mxu0
      %v1861 = vadd.f32 %v1492, %v1860
      %v1862 = vpop.f32.mrb[0].mxu0
      %1863 = vmatprep.mubr.f32.mxu0 0.0
      %1864 = vmatmul.mubr.f32.gmra.mrb[0].mxu0 %v1468
      %v1865 = vpop.f32.mrb[0].mxu0
      %v1866 = vadd.f32 %v1492, %v1865
      %v1867 = vpop.f32.mrb[0].mxu0
      %1868 = vmatprep.mubr.f32.mxu0 0.0
      %1869 = vmatmul.mubr.f32.gmra.mrb[0].mxu0 %v1469
      %v1870 = vpop.f32.mrb[0].mxu0
      %v1871 = vadd.f32 %v1492, %v1870
      %v1872 = vpop.f32.mrb[0].mxu0
      %1873 = vmatprep.mubr.f32.mxu0 0.0
      %1874 = vmatmul.mubr.f32.gmra.mrb[0].mxu0 %v1470
      %v1875 = vpop.f32.mrb[0].mxu0
      %v1876 = vadd.f32 %v1492, %v1875
      %v1877 = vpop.f32.mrb[0].mxu0
      %1878 = vdwg.mxu0
      %vm1879 = vcmask 130048
      %1880 = vst.msk [vmem:[%s280] sm:$0xff] %vm1879, %v1561
      %1881 = vst.msk [vmem:[%s280 + $0x8] sm:$0xff] %vm1879, %v1566
      %1882 = vst.msk [vmem:[%s280 + $0x10] sm:$0xff] %vm1879, %v1571
      %1883 = vst.msk [vmem:[%s280 + $0x18] sm:$0xff] %vm1879, %v1576
      %1884 = vst.msk [vmem:[%s280 + $0x20] sm:$0xff] %vm1879, %v1581
      %1885 = vst.msk [vmem:[%s280 + $0x28] sm:$0xff] %vm1879, %v1586
      %1886 = vst.msk [vmem:[%s280 + $0x30] sm:$0xff] %vm1879, %v1591
      %1887 = vst.msk [vmem:[%s280 + $0x38] sm:$0xff] %vm1879, %v1596
      %1888 = vst.msk [vmem:[%s280 + $0x40] sm:$0xff] %vm1879, %v1601
      %1889 = vst.msk [vmem:[%s280 + $0x48] sm:$0xff] %vm1879, %v1606
      %1890 = vst.msk [vmem:[%s280 + $0x50] sm:$0xff] %vm1879, %v1611
      %1891 = vst.msk [vmem:[%s280 + $0x58] sm:$0xff] %vm1879, %v1616
      %1892 = vst.msk [vmem:[%s280 + $0x60] sm:$0xff] %vm1879, %v1621
      %1893 = vst.msk [vmem:[%s280 + $0x68] sm:$0xff] %vm1879, %v1626
      %1894 = vst.msk [vmem:[%s280 + $0x70] sm:$0xff] %vm1879, %v1631
      %1895 = vst.msk [vmem:[%s280 + $0x78] sm:$0xff] %vm1879, %v1636
      %1896 = vst.msk [vmem:[%s280 + $0x80] sm:$0xff] %vm1879, %v1641
      %1897 = vst.msk [vmem:[%s280 + $0x88] sm:$0xff] %vm1879, %v1646
      %1898 = vst.msk [vmem:[%s280 + $0x90] sm:$0xff] %vm1879, %v1651
      %1899 = vst.msk [vmem:[%s280 + $0x98] sm:$0xff] %vm1879, %v1656
      %1900 = vst.msk [vmem:[%s280 + $0xa0] sm:$0xff] %vm1879, %v1661
      %1901 = vst.msk [vmem:[%s280 + $0xa8] sm:$0xff] %vm1879, %v1666
      %1902 = vst.msk [vmem:[%s280 + $0xb0] sm:$0xff] %vm1879, %v1671
      %1903 = vst.msk [vmem:[%s280 + $0xb8] sm:$0xff] %vm1879, %v1676
      %1904 = vst.msk [vmem:[%s280 + $0xc0] sm:$0xff] %vm1879, %v1681
      %1905 = vst.msk [vmem:[%s280 + $0xc8] sm:$0xff] %vm1879, %v1686
      %1906 = vst.msk [vmem:[%s280 + $0xd0] sm:$0xff] %vm1879, %v1691
      %1907 = vst.msk [vmem:[%s280 + $0xd8] sm:$0xff] %vm1879, %v1696
      %1908 = vst.msk [vmem:[%s280 + $0xe0] sm:$0xff] %vm1879, %v1701
      %1909 = vst.msk [vmem:[%s280 + $0xe8] sm:$0xff] %vm1879, %v1706
      %1910 = vst.msk [vmem:[%s280 + $0xf0] sm:$0xff] %vm1879, %v1711
      %1911 = vst.msk [vmem:[%s280 + $0xf8] sm:$0xff] %vm1879, %v1716
      %1912 = vst.msk [vmem:[%s280 + $0x100] sm:$0xff] %vm1879, %v1721
      %1913 = vst.msk [vmem:[%s280 + $0x108] sm:$0xff] %vm1879, %v1726
      %1914 = vst.msk [vmem:[%s280 + $0x110] sm:$0xff] %vm1879, %v1731
      %1915 = vst.msk [vmem:[%s280 + $0x118] sm:$0xff] %vm1879, %v1736
      %1916 = vst.msk [vmem:[%s280 + $0x120] sm:$0xff] %vm1879, %v1741
      %1917 = vst.msk [vmem:[%s280 + $0x128] sm:$0xff] %vm1879, %v1746
      %1918 = vst.msk [vmem:[%s280 + $0x130] sm:$0xff] %vm1879, %v1751
      %1919 = vst.msk [vmem:[%s280 + $0x138] sm:$0xff] %vm1879, %v1756
      %1920 = vst.msk [vmem:[%s280 + $0x140] sm:$0xff] %vm1879, %v1761
      %1921 = vst.msk [vmem:[%s280 + $0x148] sm:$0xff] %vm1879, %v1766
      %1922 = vst.msk [vmem:[%s280 + $0x150] sm:$0xff] %vm1879, %v1771
      %1923 = vst.msk [vmem:[%s280 + $0x158] sm:$0xff] %vm1879, %v1776
      %1924 = vst.msk [vmem:[%s280 + $0x160] sm:$0xff] %vm1879, %v1781
      %1925 = vst.msk [vmem:[%s280 + $0x168] sm:$0xff] %vm1879, %v1786
      %1926 = vst.msk [vmem:[%s280 + $0x170] sm:$0xff] %vm1879, %v1791
      %1927 = vst.msk [vmem:[%s280 + $0x178] sm:$0xff] %vm1879, %v1796
      %1928 = vst.msk [vmem:[%s280 + $0x180] sm:$0xff] %vm1879, %v1801
      %1929 = vst.msk [vmem:[%s280 + $0x188] sm:$0xff] %vm1879, %v1806
      %1930 = vst.msk [vmem:[%s280 + $0x190] sm:$0xff] %vm1879, %v1811
      %1931 = vst.msk [vmem:[%s280 + $0x198] sm:$0xff] %vm1879, %v1816
      %1932 = vst.msk [vmem:[%s280 + $0x1a0] sm:$0xff] %vm1879, %v1821
      %1933 = vst.msk [vmem:[%s280 + $0x1a8] sm:$0xff] %vm1879, %v1826
      %1934 = vst.msk [vmem:[%s280 + $0x1b0] sm:$0xff] %vm1879, %v1831
      %1935 = vst.msk [vmem:[%s280 + $0x1b8] sm:$0xff] %vm1879, %v1836
      %1936 = vst.msk [vmem:[%s280 + $0x1c0] sm:$0xff] %vm1879, %v1841
      %1937 = vst.msk [vmem:[%s280 + $0x1c8] sm:$0xff] %vm1879, %v1846
      %1938 = vst.msk [vmem:[%s280 + $0x1d0] sm:$0xff] %vm1879, %v1851
      %1939 = vst.msk [vmem:[%s280 + $0x1d8] sm:$0xff] %vm1879, %v1856
      %1940 = vst.msk [vmem:[%s280 + $0x1e0] sm:$0xff] %vm1879, %v1861
      %1941 = vst.msk [vmem:[%s280 + $0x1e8] sm:$0xff] %vm1879, %v1866
      %1942 = vst.msk [vmem:[%s280 + $0x1f0] sm:$0xff] %vm1879, %v1871
      %1943 = vst.msk [vmem:[%s280 + $0x1f8] sm:$0xff] %vm1879, %v1876
      %s1944 = smul.u32 64, %s18
      %p1945 = scmp.lt.s32.totalorder %s1944, 255
      %s1946 = scalar_select %p1945, %s1944, 255
      %s1947 = smul.addr %s1946, 8
      %s1948 = scalar_lea.vmem %s7, %s1947
      // Predicated region
      $region49: #{tpu_custom_call.1} parent=47 // pred_check
        %p1949 = pneg %p188
      $region50: #{tpu_custom_call.1} parent=47 // pred_check_branch
        %1951 = sbr.rel (%p1949) target = $region52
      $region51: #{tpu_custom_call.1} parent=47 // pred_region
        %s1952 = smul.u32 64, %s18
      $region52: #{tpu_custom_call.1} parent=47 // pred_fallthru
        _
    $region48: #{tpu_custom_call.1} parent=5 // pred_fallthru
      _
    %p1953 = scmp.le.s32.totalorder 2, %s13
    // Predicated region
    $region53: #{tpu_custom_call.1} parent=5 // pred_check
      %p1954 = pneg %p1953
    $region54: #{tpu_custom_call.1} parent=5 // pred_check_branch
      %1956 = sbr.rel (%p1954) target = $region56
    $region55: #{tpu_custom_call.1} parent=5 // pred_region
      %s1957 = ssub.s32 %s13, 2
      // Predicated region
      $region57: #{tpu_custom_call.1} parent=55 // pred_check
        %p1958 = pneg %p194
      $region58: #{tpu_custom_call.1} parent=55 // pred_check_branch
        %1960 = sbr.rel (%p1958) target = $region60
      $region59: #{tpu_custom_call.1} parent=55 // pred_region
        %s1961 = smul.u32 64, %s19
        %p1962 = scmp.lt.s32.totalorder %s1961, 255
        %s1963 = scalar_select %p1962, %s1961, 255
        %s1964 = smul.addr %s1963, 8
        %s1965 = scalar_lea.vmem %s7, %s1964
      $region60: #{tpu_custom_call.1} parent=55 // pred_fallthru
        _
    $region56: #{tpu_custom_call.1} parent=5 // pred_fallthru
      _
  $region6: #{tpu_custom_call.1} parent=0 // loop_footer
    %s17 = sadd.s32 1, %s13
  $region7: #{tpu_custom_call.1} parent=0 // loop_footer_branch
    %12 = sbr.rel target = $region3
  $region8: #{tpu_custom_call.1} parent=0 // loop_exit
    _

// kernel: tpu_custom_call.1
$region0: #{tpu_custom_call.1}
  #allocation0 [shape = 'u32[]', space=smem, size = 0x4, offset = 0x4, fixed_abs, tag = 'smem constant byte address 0x4 - core index']
  #allocation1 [shape = 'u32[144,128]{1,0:T(1,128)}', space=vmem, size = 0x12000, scoped, tag = 'internal scratch']
  %s0 = inlined_call_operand.vmem [shape: f32[2048,32], index: 0, kind: input, shape index: {}]
  %s1 = inlined_call_operand.vmem [shape: f32[32,128], index: 1, kind: input, shape index: {}]
  %s2 = inlined_call_operand.vmem [shape: f32[1,128], index: 2, kind: input, shape index: {}]
  %s3 = inlined_call_operand.vmem [shape: f32[128,128], index: 3, kind: input, shape index: {}]
  %s4 = inlined_call_operand.vmem [shape: f32[1,128], index: 4, kind: input, shape index: {}]
  %s5 = inlined_call_operand.vmem [shape: f32[128,16], index: 5, kind: input, shape index: {}]
  %s6 = inlined_call_operand.vmem [shape: f32[1,16], index: 6, kind: input, shape index: {}]
  %s7 = inlined_call_operand.vmem [shape: f32[2048,16], index: 7, kind: output, shape index: {}]
  %s8 = sld [smem:[#allocation0]]
  $region61: #{tpu_custom_call.1} parent=0
    _
  %s10 = ssub.s32 1, %s8
  %s11 = scalar_select 0, %s10, %s8
  loop: start=0, step=1, limit=6
  $region2: #{tpu_custom_call.1} parent=0 // loop_pre_header
    _
  $region3: #{tpu_custom_call.1} parent=0 // loop_header
    %s13 = sphi 0, %s17
    %p14 = scmp.ge.s32.totalorder %s13, 6
    %s23 = sphi 0, %s25
    %s26 = sphi 0, %s23
    %s27 = sphi 0, %s26
    %s43 = sphi 0, %s27
    %s47 = sphi 0, %s47
    %s49 = sphi 0, %s47
    %s50 = sphi 0, %s49
    %s64 = sphi 0, %s50
    %s68 = sphi 0, %s68
    %s70 = sphi 0, %s68
    %s71 = sphi 0, %s70
    %s85 = sphi 0, %s71
    %s89 = sphi 0, %s89
    %s91 = sphi 0, %s89
    %s92 = sphi 0, %s91
    %s106 = sphi 0, %s92
    %s110 = sphi 0, %s110
    %s112 = sphi 0, %s110
    %s113 = sphi 0, %s112
    %s127 = sphi 0, %s113
    %s131 = sphi 0, %s131
    %s133 = sphi 0, %s131
    %s134 = sphi 0, %s133
    %s148 = sphi 0, %s134
    %s152 = sphi 0, %s152
    %s154 = sphi 0, %s152
    %s155 = sphi 0, %s154
    %s169 = sphi 0, %s155
    %s175 = sphi 0, %s177
    %s178 = sphi 0, %s175
    %s179 = sphi 0, %s178
    %s195 = sphi 0, %s179
  $region4: #{tpu_custom_call.1} parent=0 // loop_header_branch
    %16 = sbr.rel (%p14) target = $region8
  $region5: #{tpu_custom_call.1} parent=0 // loop_body
    %s18 = ssub.s32 %s13, 1
    %s19 = ssub.s32 %s13, 2
    %s20 = sadd.s32 %s13, 1
    %s21 = ssub.s32 %s13, %s20
    %p22 = scmp.eq.s32.totalorder %s21, 0
    %s24 = sadd.s32 %s23, 1
    %s25 = scalar_select %p22, %s23, %s24
    %p28 = pneg %p22
    %p29 = scmp.eq.s32.totalorder %s13, 3
    %p30 = por %p28, %p29
    %p31 = scmp.ne.s32.totalorder %s23, %s26
    %p32 = scmp.eq.s32.totalorder %s13, 0
    %p33 = por %p31, %p32
    %p34 = scmp.ne.s32.totalorder %s23, %s26
    %p35 = scmp.eq.s32.totalorder %s18, 3
    %p36 = por %p34, %p35
    %p37 = scmp.ne.s32.totalorder %s26, %s27
    %p38 = scmp.eq.s32.totalorder %s18, 0
    %p39 = por %p37, %p38
    %p40 = scmp.ne.s32.totalorder %s26, %s27
    %p41 = scmp.eq.s32.totalorder %s19, 3
    %p42 = por %p40, %p41
    %p44 = scmp.ne.s32.totalorder %s27, %s43
    %p45 = scmp.eq.s32.totalorder %s19, 0
    %p46 = por %p44, %p45
    %s48 = sadd.s32 %s47, 1
    %p51 = scmp.eq.s32.totalorder %s13, 3
    %p52 = scmp.ne.s32.totalorder %s47, %s49
    %p53 = scmp.eq.s32.totalorder %s13, 0
    %p54 = por %p52, %p53
    %p55 = scmp.ne.s32.totalorder %s47, %s49
    %p56 = scmp.eq.s32.totalorder %s18, 3
    %p57 = por %p55, %p56
    %p58 = scmp.ne.s32.totalorder %s49, %s50
    %p59 = scmp.eq.s32.totalorder %s18, 0
    %p60 = por %p58, %p59
    %p61 = scmp.ne.s32.totalorder %s49, %s50
    %p62 = scmp.eq.s32.totalorder %s19, 3
    %p63 = por %p61, %p62
    %p65 = scmp.ne.s32.totalorder %s50, %s64
    %p66 = scmp.eq.s32.totalorder %s19, 0
    %p67 = por %p65, %p66
    %s69 = sadd.s32 %s68, 1
    %p72 = scmp.eq.s32.totalorder %s13, 3
    %p73 = scmp.ne.s32.totalorder %s68, %s70
    %p74 = scmp.eq.s32.totalorder %s13, 0
    %p75 = por %p73, %p74
    %p76 = scmp.ne.s32.totalorder %s68, %s70
    %p77 = scmp.eq.s32.totalorder %s18, 3
    %p78 = por %p76, %p77
    %p79 = scmp.ne.s32.totalorder %s70, %s71
    %p80 = scmp.eq.s32.totalorder %s18, 0
    %p81 = por %p79, %p80
    %p82 = scmp.ne.s32.totalorder %s70, %s71
    %p83 = scmp.eq.s32.totalorder %s19, 3
    %p84 = por %p82, %p83
    %p86 = scmp.ne.s32.totalorder %s71, %s85
    %p87 = scmp.eq.s32.totalorder %s19, 0
    %p88 = por %p86, %p87
    %s90 = sadd.s32 %s89, 1
    %p93 = scmp.eq.s32.totalorder %s13, 3
    %p94 = scmp.ne.s32.totalorder %s89, %s91
    %p95 = scmp.eq.s32.totalorder %s13, 0
    %p96 = por %p94, %p95
    %p97 = scmp.ne.s32.totalorder %s89, %s91
    %p98 = scmp.eq.s32.totalorder %s18, 3
    %p99 = por %p97, %p98
    %p100 = scmp.ne.s32.totalorder %s91, %s92
    %p101 = scmp.eq.s32.totalorder %s18, 0
    %p102 = por %p100, %p101
    %p103 = scmp.ne.s32.totalorder %s91, %s92
    %p104 = scmp.eq.s32.totalorder %s19, 3
    %p105 = por %p103, %p104
    %p107 = scmp.ne.s32.totalorder %s92, %s106
    %p108 = scmp.eq.s32.totalorder %s19, 0
    %p109 = por %p107, %p108
    %s111 = sadd.s32 %s110, 1
    %p114 = scmp.eq.s32.totalorder %s13, 3
    %p115 = scmp.ne.s32.totalorder %s110, %s112
    %p116 = scmp.eq.s32.totalorder %s13, 0
    %p117 = por %p115, %p116
    %p118 = scmp.ne.s32.totalorder %s110, %s112
    %p119 = scmp.eq.s32.totalorder %s18, 3
    %p120 = por %p118, %p119
    %p121 = scmp.ne.s32.totalorder %s112, %s113
    %p122 = scmp.eq.s32.totalorder %s18, 0
    %p123 = por %p121, %p122
    %p124 = scmp.ne.s32.totalorder %s112, %s113
    %p125 = scmp.eq.s32.totalorder %s19, 3
    %p126 = por %p124, %p125
    %p128 = scmp.ne.s32.totalorder %s113, %s127
    %p129 = scmp.eq.s32.totalorder %s19, 0
    %p130 = por %p128, %p129
    %s132 = sadd.s32 %s131, 1
    %p135 = scmp.eq.s32.totalorder %s13, 3
    %p136 = scmp.ne.s32.totalorder %s131, %s133
    %p137 = scmp.eq.s32.totalorder %s13, 0
    %p138 = por %p136, %p137
    %p139 = scmp.ne.s32.totalorder %s131, %s133
    %p140 = scmp.eq.s32.totalorder %s18, 3
    %p141 = por %p139, %p140
    %p142 = scmp.ne.s32.totalorder %s133, %s134
    %p143 = scmp.eq.s32.totalorder %s18, 0
    %p144 = por %p142, %p143
    %p145 = scmp.ne.s32.totalorder %s133, %s134
    %p146 = scmp.eq.s32.totalorder %s19, 3
    %p147 = por %p145, %p146
    %p149 = scmp.ne.s32.totalorder %s134, %s148
    %p150 = scmp.eq.s32.totalorder %s19, 0
    %p151 = por %p149, %p150
    %s153 = sadd.s32 %s152, 1
    %p156 = scmp.eq.s32.totalorder %s13, 3
    %p157 = scmp.ne.s32.totalorder %s152, %s154
    %p158 = scmp.eq.s32.totalorder %s13, 0
    %p159 = por %p157, %p158
    %p160 = scmp.ne.s32.totalorder %s152, %s154
    %p161 = scmp.eq.s32.totalorder %s18, 3
    %p162 = por %p160, %p161
    %p163 = scmp.ne.s32.totalorder %s154, %s155
    %p164 = scmp.eq.s32.totalorder %s18, 0
    %p165 = por %p163, %p164
    %p166 = scmp.ne.s32.totalorder %s154, %s155
    %p167 = scmp.eq.s32.totalorder %s19, 3
    %p168 = por %p166, %p167
    %p170 = scmp.ne.s32.totalorder %s155, %s169
    %p171 = scmp.eq.s32.totalorder %s19, 0
    %p172 = por %p170, %p171
    %s173 = ssub.s32 %s13, %s20
    %p174 = scmp.eq.s32.totalorder %s173, 0
    %s176 = sadd.s32 %s175, 1
    %s177 = scalar_select %p174, %s175, %s176
    %p180 = pneg %p174
    %p181 = scmp.eq.s32.totalorder %s13, 3
    %p182 = por %p180, %p181
    %p183 = scmp.ne.s32.totalorder %s175, %s178
    %p184 = scmp.eq.s32.totalorder %s13, 0
    %p185 = por %p183, %p184
    %p186 = scmp.ne.s32.totalorder %s175, %s178
    %p187 = scmp.eq.s32.totalorder %s18, 3
    %p188 = por %p186, %p187
    %p189 = scmp.ne.s32.totalorder %s178, %s179
    %p190 = scmp.eq.s32.totalorder %s18, 0
    %p191 = por %p189, %p190
    %p192 = scmp.ne.s32.totalorder %s178, %s179
    %p193 = scmp.eq.s32.totalorder %s19, 3
    %p194 = por %p192, %p193
    %p196 = scmp.ne.s32.totalorder %s179, %s195
    %p197 = scmp.eq.s32.totalorder %s19, 0
    %p198 = por %p196, %p197
    %p199 = scmp.le.s32.totalorder 1, %s13
    %p200 = scmp.lt.s32.totalorder %s13, 5
    %p201 = pnand %p199, %p200
    %p202 = pneg %p201
    // Predicated region
    $region9: #{tpu_custom_call.1} parent=5 // pred_check
      _
    $region10: #{tpu_custom_call.1} parent=5 // pred_check_branch
      %204 = sbr.rel (%p201) target = $region12
    $region11: #{tpu_custom_call.1} parent=5 // pred_region
      %s205 = ssub.s32 %s13, 1
      // Predicated region
      $region13: #{tpu_custom_call.1} parent=11 // pred_check
        %p206 = pneg %p60
      $region14: #{tpu_custom_call.1} parent=11 // pred_check_branch
        %208 = sbr.rel (%p206) target = $region16
      $region15: #{tpu_custom_call.1} parent=11 // pred_region
        _
      $region16: #{tpu_custom_call.1} parent=11 // pred_fallthru
        _
      // Predicated region
      $region17: #{tpu_custom_call.1} parent=11 // pred_check
        %p209 = pneg %p81
      $region18: #{tpu_custom_call.1} parent=11 // pred_check_branch
        %211 = sbr.rel (%p209) target = $region20
      $region19: #{tpu_custom_call.1} parent=11 // pred_region
        _
      $region20: #{tpu_custom_call.1} parent=11 // pred_fallthru
        _
      // Predicated region
      $region21: #{tpu_custom_call.1} parent=11 // pred_check
        %p212 = pneg %p102
      $region22: #{tpu_custom_call.1} parent=11 // pred_check_branch
        %214 = sbr.rel (%p212) target = $region24
      $region23: #{tpu_custom_call.1} parent=11 // pred_region
        _
      $region24: #{tpu_custom_call.1} parent=11 // pred_fallthru
        _
      // Predicated region
      $region25: #{tpu_custom_call.1} parent=11 // pred_check
        %p215 = pneg %p123
      $region26: #{tpu_custom_call.1} parent=11 // pred_check_branch
        %217 = sbr.rel (%p215) target = $region28
      $region27: #{tpu_custom_call.1} parent=11 // pred_region
        _
      $region28: #{tpu_custom_call.1} parent=11 // pred_fallthru
        _
      // Predicated region
      $region29: #{tpu_custom_call.1} parent=11 // pred_check
        %p218 = pneg %p144
      $region30: #{tpu_custom_call.1} parent=11 // pred_check_branch
        %220 = sbr.rel (%p218) target = $region32
      $region31: #{tpu_custom_call.1} parent=11 // pred_region
        _
      $region32: #{tpu_custom_call.1} parent=11 // pred_fallthru
        _
      // Predicated region
      $region33: #{tpu_custom_call.1} parent=11 // pred_check
        %p221 = pneg %p165
      $region34: #{tpu_custom_call.1} parent=11 // pred_check_branch
        %223 = sbr.rel (%p221) target = $region36
      $region35: #{tpu_custom_call.1} parent=11 // pred_region
        _
      $region36: #{tpu_custom_call.1} parent=11 // pred_fallthru
        _
    $region12: #{tpu_custom_call.1} parent=5 // pred_fallthru
      _
    %p224 = scmp.lt.s32.totalorder %s13, 4
    // Predicated region
    $region37: #{tpu_custom_call.1} parent=5 // pred_check
      %p225 = pneg %p224
    $region38: #{tpu_custom_call.1} parent=5 // pred_check_branch
      %227 = sbr.rel (%p225) target = $region40
    $region39: #{tpu_custom_call.1} parent=5 // pred_region
      // Predicated region
      $region41: #{tpu_custom_call.1} parent=39 // pred_check
        %p228 = pneg %p33
      $region42: #{tpu_custom_call.1} parent=39 // pred_check_branch
        %230 = sbr.rel (%p228) target = $region44
      $region43: #{tpu_custom_call.1} parent=39 // pred_region
        %s231 = smul.u32 64, %s13
        %p232 = scmp.lt.s32.totalorder %s231, 255
        %s233 = scalar_select %p232, %s231, 255
        %s234 = smul.addr %s233, 8
        %s235 = scalar_lea.vmem %s0, %s234
        %s236 = smul.u32 64, %s13
      $region44: #{tpu_custom_call.1} parent=39 // pred_fallthru
        _
    $region40: #{tpu_custom_call.1} parent=5 // pred_fallthru
      _
    %p237 = scmp.le.s32.totalorder 1, %s13
    %p238 = scmp.lt.s32.totalorder %s13, 5
    %p239 = pnand %p237, %p238
    %p240 = pneg %p239
    // Predicated region
    $region45: #{tpu_custom_call.1} parent=5 // pred_check
      _
    $region46: #{tpu_custom_call.1} parent=5 // pred_check_branch
      %242 = sbr.rel (%p239) target = $region48
    $region47: #{tpu_custom_call.1} parent=5 // pred_region
      %s243 = ssub.s32 %s13, 1
      %s244 = smul.u32 64, %s18
      %p245 = scmp.lt.s32.totalorder %s244, 255
      %s246 = scalar_select %p245, %s244, 255
      %s247 = smul.addr %s246, 8
      %s248 = scalar_lea.vmem %s0, %s247
      %p249 = pneg %p39
      %p250 = pneg %p36
      %p251 = pneg %p60
      %p252 = pneg %p57
      %p253 = pneg %p81
      %p254 = pneg %p78
      %p255 = pneg %p102
      %p256 = pneg %p99
      %p257 = pneg %p123
      %p258 = pneg %p120
      %p259 = pneg %p144
      %p260 = pneg %p141
      %p261 = pneg %p165
      %p262 = pneg %p162
      %p263 = pneg %p191
      %p264 = pneg %p188
      %s265 = smul.u32 64, %s18
      %p266 = scmp.lt.s32.totalorder %s265, 255
      %s267 = scalar_select %p266, %s265, 255
      %s268 = smul.addr %s267, 8
      %s269 = scalar_lea.vmem %s7, %s268
      %s270 = smul.u32 64, %s18
      %p271 = scmp.lt.s32.totalorder %s270, 255
      %s272 = scalar_select %p271, %s270, 255
      %s273 = smul.addr %s272, 8
      %s274 = scalar_lea.vmem %s0, %s273
      %s275 = smul.u32 64, %s18
      %s276 = smul.u32 64, %s18
      %p277 = scmp.lt.s32.totalorder %s276, 255
      %s278 = scalar_select %p277, %s276, 255
      %s279 = smul.addr %s278, 8
      %s280 = scalar_lea.vmem %s7, %s279
      %s281 = smul.u32 64, %s18
      %v282 = vld [vmem:[%s274] sm:$0xff]
      %v283 = vld [vmem:[%s274 + $0x8] sm:$0xff]
      %v284 = vld [vmem:[%s274 + $0x10] sm:$0xff]
      %v285 = vld [vmem:[%s274 + $0x18] sm:$0xff]
      %v286 = vld [vmem:[%s274 + $0x20] sm:$0xff]
      %v287 = vld [vmem:[%s274 + $0x28] sm:$0xff]
      %v288 = vld [vmem:[%s274 + $0x30] sm:$0xff]
      %v289 = vld [vmem:[%s274 + $0x38] sm:$0xff]
      %v290 = vld [vmem:[%s274 + $0x40] sm:$0xff]
      %v291 = vld [vmem:[%s274 + $0x48] sm:$0xff]
      %v292 = vld [vmem:[%s274 + $0x50] sm:$0xff]
      %v293 = vld [vmem:[%s274 + $0x58] sm:$0xff]
      %v294 = vld [vmem:[%s274 + $0x60] sm:$0xff]
      %v295 = vld [vmem:[%s274 + $0x68] sm:$0xff]
      %v296 = vld [vmem:[%s274 + $0x70] sm:$0xff]
      %v297 = vld [vmem:[%s274 + $0x78] sm:$0xff]
      %v298 = vld [vmem:[%s274 + $0x80] sm:$0xff]
      %v299 = vld [vmem:[%s274 + $0x88] sm:$0xff]
      %v300 = vld [vmem:[%s274 + $0x90] sm:$0xff]
      %v301 = vld [vmem:[%s274 + $0x98] sm:$0xff]
      %v302 = vld [vmem:[%s274 + $0xa0] sm:$0xff]
      %v303 = vld [vmem:[%s274 + $0xa8] sm:$0xff]
      %v304 = vld [vmem:[%s274 + $0xb0] sm:$0xff]
      %v305 = vld [vmem:[%s274 + $0xb8] sm:$0xff]
      %v306 = vld [vmem:[%s274 + $0xc0] sm:$0xff]
      %v307 = vld [vmem:[%s274 + $0xc8] sm:$0xff]
      %v308 = vld [vmem:[%s274 + $0xd0] sm:$0xff]
      %v309 = vld [vmem:[%s274 + $0xd8] sm:$0xff]
      %v310 = vld [vmem:[%s274 + $0xe0] sm:$0xff]
      %v311 = vld [vmem:[%s274 + $0xe8] sm:$0xff]
      %v312 = vld [vmem:[%s274 + $0xf0] sm:$0xff]
      %v313 = vld [vmem:[%s274 + $0xf8] sm:$0xff]
      %v314 = vld [vmem:[%s274 + $0x100] sm:$0xff]
      %v315 = vld [vmem:[%s274 + $0x108] sm:$0xff]
      %v316 = vld [vmem:[%s274 + $0x110] sm:$0xff]
      %v317 = vld [vmem:[%s274 + $0x118] sm:$0xff]
      %v318 = vld [vmem:[%s274 + $0x120] sm:$0xff]
      %v319 = vld [vmem:[%s274 + $0x128] sm:$0xff]
      %v320 = vld [vmem:[%s274 + $0x130] sm:$0xff]
      %v321 = vld [vmem:[%s274 + $0x138] sm:$0xff]
      %v322 = vld [vmem:[%s274 + $0x140] sm:$0xff]
      %v323 = vld [vmem:[%s274 + $0x148] sm:$0xff]
      %v324 = vld [vmem:[%s274 + $0x150] sm:$0xff]
      %v325 = vld [vmem:[%s274 + $0x158] sm:$0xff]
      %v326 = vld [vmem:[%s274 + $0x160] sm:$0xff]
      %v327 = vld [vmem:[%s274 + $0x168] sm:$0xff]
      %v328 = vld [vmem:[%s274 + $0x170] sm:$0xff]
      %v329 = vld [vmem:[%s274 + $0x178] sm:$0xff]
      %v330 = vld [vmem:[%s274 + $0x180] sm:$0xff]
      %v331 = vld [vmem:[%s274 + $0x188] sm:$0xff]
      %v332 = vld [vmem:[%s274 + $0x190] sm:$0xff]
      %v333 = vld [vmem:[%s274 + $0x198] sm:$0xff]
      %v334 = vld [vmem:[%s274 + $0x1a0] sm:$0xff]
      %v335 = vld [vmem:[%s274 + $0x1a8] sm:$0xff]
      %v336 = vld [vmem:[%s274 + $0x1b0] sm:$0xff]
      %v337 = vld [vmem:[%s274 + $0x1b8] sm:$0xff]
      %v338 = vld [vmem:[%s274 + $0x1c0] sm:$0xff]
      %v339 = vld [vmem:[%s274 + $0x1c8] sm:$0xff]
      %v340 = vld [vmem:[%s274 + $0x1d0] sm:$0xff]
      %v341 = vld [vmem:[%s274 + $0x1d8] sm:$0xff]
      %v342 = vld [vmem:[%s274 + $0x1e0] sm:$0xff]
      %v343 = vld [vmem:[%s274 + $0x1e8] sm:$0xff]
      %v344 = vld [vmem:[%s274 + $0x1f0] sm:$0xff]
      %v345 = vld [vmem:[%s274 + $0x1f8] sm:$0xff]
      %v346 = vld [vmem:[%s1] sm:$0xff]
      %v347 = vld [vmem:[%s1 + $0x8] sm:$0xff]
      %v348 = vld [vmem:[%s1 + $0x10] sm:$0xff]
      %v349 = vld [vmem:[%s1 + $0x18] sm:$0xff]
      %v350 = vld [vmem:[%s2] sm:$0x1]
      %v352 = vlaneseq
      %v353 = vshrl.u32 %v352, 7
      %v354 = vsub.s32 0, %v353
      %v355 = vrot.slane %v350, %v354
      %vm357 = vcmask 261120
      %v359 = vsel %vm357, %v282, 0
      %v362 = vsel %vm357, %v283, 0
      %v365 = vsel %vm357, %v284, 0
      %v368 = vsel %vm357, %v285, 0
      %v371 = vsel %vm357, %v286, 0
      %v374 = vsel %vm357, %v287, 0
      %v377 = vsel %vm357, %v288, 0
      %v380 = vsel %vm357, %v289, 0
      %v383 = vsel %vm357, %v290, 0
      %v386 = vsel %vm357, %v291, 0
      %v389 = vsel %vm357, %v292, 0
      %v392 = vsel %vm357, %v293, 0
      %v395 = vsel %vm357, %v294, 0
      %v398 = vsel %vm357, %v295, 0
      %v401 = vsel %vm357, %v296, 0
      %v404 = vsel %vm357, %v297, 0
      %v407 = vsel %vm357, %v298, 0
      %v410 = vsel %vm357, %v299, 0
      %v413 = vsel %vm357, %v300, 0
      %v416 = vsel %vm357, %v301, 0
      %v419 = vsel %vm357, %v302, 0
      %v422 = vsel %vm357, %v303, 0
      %v425 = vsel %vm357, %v304, 0
      %v428 = vsel %vm357, %v305, 0
      %v431 = vsel %vm357, %v306, 0
      %v434 = vsel %vm357, %v307, 0
      %v437 = vsel %vm357, %v308, 0
      %v440 = vsel %vm357, %v309, 0
      %v443 = vsel %vm357, %v310, 0
      %v446 = vsel %vm357, %v311, 0
      %v449 = vsel %vm357, %v312, 0
      %v452 = vsel %vm357, %v313, 0
      %v455 = vsel %vm357, %v314, 0
      %v458 = vsel %vm357, %v315, 0
      %v461 = vsel %vm357, %v316, 0
      %v464 = vsel %vm357, %v317, 0
      %v467 = vsel %vm357, %v318, 0
      %v470 = vsel %vm357, %v319, 0
      %v473 = vsel %vm357, %v320, 0
      %v476 = vsel %vm357, %v321, 0
      %v479 = vsel %vm357, %v322, 0
      %v482 = vsel %vm357, %v323, 0
      %v485 = vsel %vm357, %v324, 0
      %v488 = vsel %vm357, %v325, 0
      %v491 = vsel %vm357, %v326, 0
      %v494 = vsel %vm357, %v327, 0
      %v497 = vsel %vm357, %v328, 0
      %v500 = vsel %vm357, %v329, 0
      %v503 = vsel %vm357, %v330, 0
      %v506 = vsel %vm357, %v331, 0
      %v509 = vsel %vm357, %v332, 0
      %v512 = vsel %vm357, %v333, 0
      %v515 = vsel %vm357, %v334, 0
      %v518 = vsel %vm357, %v335, 0
      %v521 = vsel %vm357, %v336, 0
      %v524 = vsel %vm357, %v337, 0
      %v527 = vsel %vm357, %v338, 0
      %v530 = vsel %vm357, %v339, 0
      %v533 = vsel %vm357, %v340, 0
      %v536 = vsel %vm357, %v341, 0
      %v539 = vsel %vm357, %v342, 0
      %v542 = vsel %vm357, %v343, 0
      %v545 = vsel %vm357, %v344, 0
      %v548 = vsel %vm357, %v345, 0
      %550 = vmatprep.subr.mxu0 0.0
      %551 = vmatpush1.msra.mxu0 %v346
      %552 = vmatprep.subr.mxu0 0.0
      %553 = vmatpush1.msra.mxu0 %v347
      %554 = vmatprep.subr.mxu0 0.0
      %555 = vmatpush1.msra.mxu0 %v348
      %556 = vmatprep.subr.mxu0 0.0
      %557 = vmatpush1.msra.mxu0 %v349
      %558 = vmatprep.subr.mxu0 0.0
      %559 = vmatpush1.msra.mxu0 0.0
      %560 = vmatprep.subr.mxu0 0.0
      %561 = vmatpush1.msra.mxu0 0.0
      %562 = vmatprep.subr.mxu0 0.0
      %563 = vmatpush1.msra.mxu0 0.0
      %564 = vmatprep.subr.mxu0 0.0
      %565 = vmatpush1.msra.mxu0 0.0
      %566 = vmatprep.subr.mxu0 0.0
      %567 = vmatpush1.msra.mxu0 0.0
      %568 = vmatprep.subr.mxu0 0.0
      %569 = vmatpush1.msra.mxu0 0.0
      %570 = vmatprep.subr.mxu0 0.0
      %571 = vmatpush1.msra.mxu0 0.0
      %572 = vmatprep.subr.mxu0 0.0
      %573 = vmatpush1.msra.mxu0 0.0
      %574 = vmatprep.subr.mxu0 0.0
      %575 = vmatpush1.msra.mxu0 0.0
      %576 = vmatprep.subr.mxu0 0.0
      %577 = vmatpush1.msra.mxu0 0.0
      %578 = vmatprep.subr.mxu0 0.0
      %579 = vmatpush1.msra.mxu0 0.0
      %580 = vmatprep.subr.mxu0 0.0
      %581 = vmatpush1.msra.mxu0 0.0
      %582 = vmatprep.subr.mxu0 0.0
      %583 = vmatpush1.msra.mxu0 0.0
      %584 = vmatprep.subr.mxu0 0.0
      %585 = vmatpush1.msra.mxu0 0.0
      %586 = vmatprep.subr.mxu0 0.0
      %587 = vmatpush1.msra.mxu0 0.0
      %588 = vmatprep.subr.mxu0 0.0
      %589 = vmatpush1.msra.mxu0 0.0
      %590 = vmatprep.subr.mxu0 0.0
      %591 = vmatpush1.msra.mxu0 0.0
      %592 = vmatprep.subr.mxu0 0.0
      %593 = vmatpush1.msra.mxu0 0.0
      %594 = vmatprep.subr.mxu0 0.0
      %595 = vmatpush1.msra.mxu0 0.0
      %596 = vmatprep.subr.mxu0 0.0
      %597 = vmatpush1.msra.mxu0 0.0
      %598 = vmatprep.subr.mxu0 0.0
      %599 = vmatpush1.msra.mxu0 0.0
      %600 = vmatprep.subr.mxu0 0.0
      %601 = vmatpush1.msra.mxu0 0.0
      %602 = vmatprep.subr.mxu0 0.0
      %603 = vmatpush1.msra.mxu0 0.0
      %604 = vmatprep.subr.mxu0 0.0
      %605 = vmatpush1.msra.mxu0 0.0
      %606 = vmatprep.subr.mxu0 0.0
      %607 = vmatpush1.msra.mxu0 0.0
      %608 = vmatprep.subr.mxu0 0.0
      %609 = vmatpush1.msra.mxu0 0.0
      %610 = vmatprep.subr.mxu0 0.0
      %611 = vmatpush1.msra.mxu0 0.0
      %612 = vmatprep.subr.mxu0 0.0
      %613 = vmatpush1.msra.mxu0 0.0
      %614 = vmatprep.mubr.f32.mxu0 0.0
      %615 = vmatmul.mubr.f32.gmra.mrb[0].mxu0 %v359
      %v616 = vpop.f32.mrb[0].mxu0
      %v617 = vadd.f32 %v355, %v616
      %v618 = vpop.f32.mrb[0].mxu0
      %619 = vmatprep.mubr.f32.mxu0 0.0
      %620 = vmatmul.mubr.f32.gmra.mrb[0].mxu0 %v362
      %v621 = vpop.f32.mrb[0].mxu0
      %v622 = vadd.f32 %v355, %v621
      %v623 = vpop.f32.mrb[0].mxu0
      %624 = vmatprep.mubr.f32.mxu0 0.0
      %625 = vmatmul.mubr.f32.gmra.mrb[0].mxu0 %v365
      %v626 = vpop.f32.mrb[0].mxu0
      %v627 = vadd.f32 %v355, %v626
      %v628 = vpop.f32.mrb[0].mxu0
      %629 = vmatprep.mubr.f32.mxu0 0.0
      %630 = vmatmul.mubr.f32.gmra.mrb[0].mxu0 %v368
      %v631 = vpop.f32.mrb[0].mxu0
      %v632 = vadd.f32 %v355, %v631
      %v633 = vpop.f32.mrb[0].mxu0
      %634 = vmatprep.mubr.f32.mxu0 0.0
      %635 = vmatmul.mubr.f32.gmra.mrb[0].mxu0 %v371
      %v636 = vpop.f32.mrb[0].mxu0
      %v637 = vadd.f32 %v355, %v636
      %v638 = vpop.f32.mrb[0].mxu0
      %639 = vmatprep.mubr.f32.mxu0 0.0
      %640 = vmatmul.mubr.f32.gmra.mrb[0].mxu0 %v374
      %v641 = vpop.f32.mrb[0].mxu0
      %v642 = vadd.f32 %v355, %v641
      %v643 = vpop.f32.mrb[0].mxu0
      %644 = vmatprep.mubr.f32.mxu0 0.0
      %645 = vmatmul.mubr.f32.gmra.mrb[0].mxu0 %v377
      %v646 = vpop.f32.mrb[0].mxu0
      %v647 = vadd.f32 %v355, %v646
      %v648 = vpop.f32.mrb[0].mxu0
      %649 = vmatprep.mubr.f32.mxu0 0.0
      %650 = vmatmul.mubr.f32.gmra.mrb[0].mxu0 %v380
      %v651 = vpop.f32.mrb[0].mxu0
      %v652 = vadd.f32 %v355, %v651
      %v653 = vpop.f32.mrb[0].mxu0
      %654 = vmatprep.mubr.f32.mxu0 0.0
      %655 = vmatmul.mubr.f32.gmra.mrb[0].mxu0 %v383
      %v656 = vpop.f32.mrb[0].mxu0
      %v657 = vadd.f32 %v355, %v656
      %v658 = vpop.f32.mrb[0].mxu0
      %659 = vmatprep.mubr.f32.mxu0 0.0
      %660 = vmatmul.mubr.f32.gmra.mrb[0].mxu0 %v386
      %v661 = vpop.f32.mrb[0].mxu0
      %v662 = vadd.f32 %v355, %v661
      %v663 = vpop.f32.mrb[0].mxu0
      %664 = vmatprep.mubr.f32.mxu0 0.0
      %665 = vmatmul.mubr.f32.gmra.mrb[0].mxu0 %v389
      %v666 = vpop.f32.mrb[0].mxu0
      %v667 = vadd.f32 %v355, %v666
      %v668 = vpop.f32.mrb[0].mxu0
      %669 = vmatprep.mubr.f32.mxu0 0.0
      %670 = vmatmul.mubr.f32.gmra.mrb[0].mxu0 %v392
      %v671 = vpop.f32.mrb[0].mxu0
      %v672 = vadd.f32 %v355, %v671
      %v673 = vpop.f32.mrb[0].mxu0
      %674 = vmatprep.mubr.f32.mxu0 0.0
      %675 = vmatmul.mubr.f32.gmra.mrb[0].mxu0 %v395
      %v676 = vpop.f32.mrb[0].mxu0
      %v677 = vadd.f32 %v355, %v676
      %v678 = vpop.f32.mrb[0].mxu0
      %679 = vmatprep.mubr.f32.mxu0 0.0
      %680 = vmatmul.mubr.f32.gmra.mrb[0].mxu0 %v398
      %v681 = vpop.f32.mrb[0].mxu0
      %v682 = vadd.f32 %v355, %v681
      %v683 = vpop.f32.mrb[0].mxu0
      %684 = vmatprep.mubr.f32.mxu0 0.0
      %685 = vmatmul.mubr.f32.gmra.mrb[0].mxu0 %v401
      %v686 = vpop.f32.mrb[0].mxu0
      %v687 = vadd.f32 %v355, %v686
      %v688 = vpop.f32.mrb[0].mxu0
      %689 = vmatprep.mubr.f32.mxu0 0.0
      %690 = vmatmul.mubr.f32.gmra.mrb[0].mxu0 %v404
      %v691 = vpop.f32.mrb[0].mxu0
      %v692 = vadd.f32 %v355, %v691
      %v693 = vpop.f32.mrb[0].mxu0
      %694 = vmatprep.mubr.f32.mxu0 0.0
      %695 = vmatmul.mubr.f32.gmra.mrb[0].mxu0 %v407
      %v696 = vpop.f32.mrb[0].mxu0
      %v697 = vadd.f32 %v355, %v696
      %v698 = vpop.f32.mrb[0].mxu0
      %699 = vmatprep.mubr.f32.mxu0 0.0
      %700 = vmatmul.mubr.f32.gmra.mrb[0].mxu0 %v410
      %v701 = vpop.f32.mrb[0].mxu0
      %v702 = vadd.f32 %v355, %v701
      %v703 = vpop.f32.mrb[0].mxu0
      %704 = vmatprep.mubr.f32.mxu0 0.0
      %705 = vmatmul.mubr.f32.gmra.mrb[0].mxu0 %v413
      %v706 = vpop.f32.mrb[0].mxu0
      %v707 = vadd.f32 %v355, %v706
      %v708 = vpop.f32.mrb[0].mxu0
      %709 = vmatprep.mubr.f32.mxu0 0.0
      %710 = vmatmul.mubr.f32.gmra.mrb[0].mxu0 %v416
      %v711 = vpop.f32.mrb[0].mxu0
      %v712 = vadd.f32 %v355, %v711
      %v713 = vpop.f32.mrb[0].mxu0
      %714 = vmatprep.mubr.f32.mxu0 0.0
      %715 = vmatmul.mubr.f32.gmra.mrb[0].mxu0 %v419
      %v716 = vpop.f32.mrb[0].mxu0
      %v717 = vadd.f32 %v355, %v716
      %v718 = vpop.f32.mrb[0].mxu0
      %719 = vmatprep.mubr.f32.mxu0 0.0
      %720 = vmatmul.mubr.f32.gmra.mrb[0].mxu0 %v422
      %v721 = vpop.f32.mrb[0].mxu0
      %v722 = vadd.f32 %v355, %v721
      %v723 = vpop.f32.mrb[0].mxu0
      %724 = vmatprep.mubr.f32.mxu0 0.0
      %725 = vmatmul.mubr.f32.gmra.mrb[0].mxu0 %v425
      %v726 = vpop.f32.mrb[0].mxu0
      %v727 = vadd.f32 %v355, %v726
      %v728 = vpop.f32.mrb[0].mxu0
      %729 = vmatprep.mubr.f32.mxu0 0.0
      %730 = vmatmul.mubr.f32.gmra.mrb[0].mxu0 %v428
      %v731 = vpop.f32.mrb[0].mxu0
      %v732 = vadd.f32 %v355, %v731
      %v733 = vpop.f32.mrb[0].mxu0
      %734 = vmatprep.mubr.f32.mxu0 0.0
      %735 = vmatmul.mubr.f32.gmra.mrb[0].mxu0 %v431
      %v736 = vpop.f32.mrb[0].mxu0
      %v737 = vadd.f32 %v355, %v736
      %v738 = vpop.f32.mrb[0].mxu0
      %739 = vmatprep.mubr.f32.mxu0 0.0
      %740 = vmatmul.mubr.f32.gmra.mrb[0].mxu0 %v434
      %v741 = vpop.f32.mrb[0].mxu0
      %v742 = vadd.f32 %v355, %v741
      %v743 = vpop.f32.mrb[0].mxu0
      %744 = vmatprep.mubr.f32.mxu0 0.0
      %745 = vmatmul.mubr.f32.gmra.mrb[0].mxu0 %v437
      %v746 = vpop.f32.mrb[0].mxu0
      %v747 = vadd.f32 %v355, %v746
      %v748 = vpop.f32.mrb[0].mxu0
      %749 = vmatprep.mubr.f32.mxu0 0.0
      %750 = vmatmul.mubr.f32.gmra.mrb[0].mxu0 %v440
      %v751 = vpop.f32.mrb[0].mxu0
      %v752 = vadd.f32 %v355, %v751
      %v753 = vpop.f32.mrb[0].mxu0
      %754 = vmatprep.mubr.f32.mxu0 0.0
      %755 = vmatmul.mubr.f32.gmra.mrb[0].mxu0 %v443
      %v756 = vpop.f32.mrb[0].mxu0
      %v757 = vadd.f32 %v355, %v756
      %v758 = vpop.f32.mrb[0].mxu0
      %759 = vmatprep.mubr.f32.mxu0 0.0
      %760 = vmatmul.mubr.f32.gmra.mrb[0].mxu0 %v446
      %v761 = vpop.f32.mrb[0].mxu0
      %v762 = vadd.f32 %v355, %v761
      %v763 = vpop.f32.mrb[0].mxu0
      %764 = vmatprep.mubr.f32.mxu0 0.0
      %765 = vmatmul.mubr.f32.gmra.mrb[0].mxu0 %v449
      %v766 = vpop.f32.mrb[0].mxu0
      %v767 = vadd.f32 %v355, %v766
      %v768 = vpop.f32.mrb[0].mxu0
      %769 = vmatprep.mubr.f32.mxu0 0.0
      %770 = vmatmul.mubr.f32.gmra.mrb[0].mxu0 %v452
      %v771 = vpop.f32.mrb[0].mxu0
      %v772 = vadd.f32 %v355, %v771
      %v773 = vpop.f32.mrb[0].mxu0
      %774 = vmatprep.mubr.f32.mxu0 0.0
      %775 = vmatmul.mubr.f32.gmra.mrb[0].mxu0 %v455
      %v776 = vpop.f32.mrb[0].mxu0
      %v777 = vadd.f32 %v355, %v776
      %v778 = vpop.f32.mrb[0].mxu0
      %779 = vmatprep.mubr.f32.mxu0 0.0
      %780 = vmatmul.mubr.f32.gmra.mrb[0].mxu0 %v458
      %v781 = vpop.f32.mrb[0].mxu0
      %v782 = vadd.f32 %v355, %v781
      %v783 = vpop.f32.mrb[0].mxu0
      %784 = vmatprep.mubr.f32.mxu0 0.0
      %785 = vmatmul.mubr.f32.gmra.mrb[0].mxu0 %v461
      %v786 = vpop.f32.mrb[0].mxu0
      %v787 = vadd.f32 %v355, %v786
      %v788 = vpop.f32.mrb[0].mxu0
      %789 = vmatprep.mubr.f32.mxu0 0.0
      %790 = vmatmul.mubr.f32.gmra.mrb[0].mxu0 %v464
      %v791 = vpop.f32.mrb[0].mxu0
      %v792 = vadd.f32 %v355, %v791
      %v793 = vpop.f32.mrb[0].mxu0
      %794 = vmatprep.mubr.f32.mxu0 0.0
      %795 = vmatmul.mubr.f32.gmra.mrb[0].mxu0 %v467
      %v796 = vpop.f32.mrb[0].mxu0
      %v797 = vadd.f32 %v355, %v796
      %v798 = vpop.f32.mrb[0].mxu0
      %799 = vmatprep.mubr.f32.mxu0 0.0
      %800 = vmatmul.mubr.f32.gmra.mrb[0].mxu0 %v470
      %v801 = vpop.f32.mrb[0].mxu0
      %v802 = vadd.f32 %v355, %v801
      %v803 = vpop.f32.mrb[0].mxu0
      %804 = vmatprep.mubr.f32.mxu0 0.0
      %805 = vmatmul.mubr.f32.gmra.mrb[0].mxu0 %v473
      %v806 = vpop.f32.mrb[0].mxu0
      %v807 = vadd.f32 %v355, %v806
      %v808 = vpop.f32.mrb[0].mxu0
      %809 = vmatprep.mubr.f32.mxu0 0.0
      %810 = vmatmul.mubr.f32.gmra.mrb[0].mxu0 %v476
      %v811 = vpop.f32.mrb[0].mxu0
      %v812 = vadd.f32 %v355, %v811
      %v813 = vpop.f32.mrb[0].mxu0
      %814 = vmatprep.mubr.f32.mxu0 0.0
      %815 = vmatmul.mubr.f32.gmra.mrb[0].mxu0 %v479
      %v816 = vpop.f32.mrb[0].mxu0
      %v817 = vadd.f32 %v355, %v816
      %v818 = vpop.f32.mrb[0].mxu0
      %819 = vmatprep.mubr.f32.mxu0 0.0
      %820 = vmatmul.mubr.f32.gmra.mrb[0].mxu0 %v482
      %v821 = vpop.f32.mrb[0].mxu0
      %v822 = vadd.f32 %v355, %v821
      %v823 = vpop.f32.mrb[0].mxu0
      %824 = vmatprep.mubr.f32.mxu0 0.0
      %825 = vmatmul.mubr.f32.gmra.mrb[0].mxu0 %v485
      %v826 = vpop.f32.mrb[0].mxu0
      %v827 = vadd.f32 %v355, %v826
      %v828 = vpop.f32.mrb[0].mxu0
      %829 = vmatprep.mubr.f32.mxu0 0.0
      %830 = vmatmul.mubr.f32.gmra.mrb[0].mxu0 %v488
      %v831 = vpop.f32.mrb[0].mxu0
      %v832 = vadd.f32 %v355, %v831
      %v833 = vpop.f32.mrb[0].mxu0
      %834 = vmatprep.mubr.f32.mxu0 0.0
      %835 = vmatmul.mubr.f32.gmra.mrb[0].mxu0 %v491
      %v836 = vpop.f32.mrb[0].mxu0
      %v837 = vadd.f32 %v355, %v836
      %v838 = vpop.f32.mrb[0].mxu0
      %839 = vmatprep.mubr.f32.mxu0 0.0
      %840 = vmatmul.mubr.f32.gmra.mrb[0].mxu0 %v494
      %v841 = vpop.f32.mrb[0].mxu0
      %v842 = vadd.f32 %v355, %v841
      %v843 = vpop.f32.mrb[0].mxu0
      %844 = vmatprep.mubr.f32.mxu0 0.0
      %845 = vmatmul.mubr.f32.gmra.mrb[0].mxu0 %v497
      %v846 = vpop.f32.mrb[0].mxu0
      %v847 = vadd.f32 %v355, %v846
      %v848 = vpop.f32.mrb[0].mxu0
      %849 = vmatprep.mubr.f32.mxu0 0.0
      %850 = vmatmul.mubr.f32.gmra.mrb[0].mxu0 %v500
      %v851 = vpop.f32.mrb[0].mxu0
      %v852 = vadd.f32 %v355, %v851
      %v853 = vpop.f32.mrb[0].mxu0
      %854 = vmatprep.mubr.f32.mxu0 0.0
      %855 = vmatmul.mubr.f32.gmra.mrb[0].mxu0 %v503
      %v856 = vpop.f32.mrb[0].mxu0
      %v857 = vadd.f32 %v355, %v856
      %v858 = vpop.f32.mrb[0].mxu0
      %859 = vmatprep.mubr.f32.mxu0 0.0
      %860 = vmatmul.mubr.f32.gmra.mrb[0].mxu0 %v506
      %v861 = vpop.f32.mrb[0].mxu0
      %v862 = vadd.f32 %v355, %v861
      %v863 = vpop.f32.mrb[0].mxu0
      %864 = vmatprep.mubr.f32.mxu0 0.0
      %865 = vmatmul.mubr.f32.gmra.mrb[0].mxu0 %v509
      %v866 = vpop.f32.mrb[0].mxu0
      %v867 = vadd.f32 %v355, %v866
      %v868 = vpop.f32.mrb[0].mxu0
      %869 = vmatprep.mubr.f32.mxu0 0.0
      %870 = vmatmul.mubr.f32.gmra.mrb[0].mxu0 %v512
      %v871 = vpop.f32.mrb[0].mxu0
      %v872 = vadd.f32 %v355, %v871
      %v873 = vpop.f32.mrb[0].mxu0
      %874 = vmatprep.mubr.f32.mxu0 0.0
      %875 = vmatmul.mubr.f32.gmra.mrb[0].mxu0 %v515
      %v876 = vpop.f32.mrb[0].mxu0
      %v877 = vadd.f32 %v355, %v876
      %v878 = vpop.f32.mrb[0].mxu0
      %879 = vmatprep.mubr.f32.mxu0 0.0
      %880 = vmatmul.mubr.f32.gmra.mrb[0].mxu0 %v518
      %v881 = vpop.f32.mrb[0].mxu0
      %v882 = vadd.f32 %v355, %v881
      %v883 = vpop.f32.mrb[0].mxu0
      %884 = vmatprep.mubr.f32.mxu0 0.0
      %885 = vmatmul.mubr.f32.gmra.mrb[0].mxu0 %v521
      %v886 = vpop.f32.mrb[0].mxu0
      %v887 = vadd.f32 %v355, %v886
      %v888 = vpop.f32.mrb[0].mxu0
      %889 = vmatprep.mubr.f32.mxu0 0.0
      %890 = vmatmul.mubr.f32.gmra.mrb[0].mxu0 %v524
      %v891 = vpop.f32.mrb[0].mxu0
      %v892 = vadd.f32 %v355, %v891
      %v893 = vpop.f32.mrb[0].mxu0
      %894 = vmatprep.mubr.f32.mxu0 0.0
      %895 = vmatmul.mubr.f32.gmra.mrb[0].mxu0 %v527
      %v896 = vpop.f32.mrb[0].mxu0
      %v897 = vadd.f32 %v355, %v896
      %v898 = vpop.f32.mrb[0].mxu0
      %899 = vmatprep.mubr.f32.mxu0 0.0
      %900 = vmatmul.mubr.f32.gmra.mrb[0].mxu0 %v530
      %v901 = vpop.f32.mrb[0].mxu0
      %v902 = vadd.f32 %v355, %v901
      %v903 = vpop.f32.mrb[0].mxu0
      %904 = vmatprep.mubr.f32.mxu0 0.0
      %905 = vmatmul.mubr.f32.gmra.mrb[0].mxu0 %v533
      %v906 = vpop.f32.mrb[0].mxu0
      %v907 = vadd.f32 %v355, %v906
      %v908 = vpop.f32.mrb[0].mxu0
      %909 = vmatprep.mubr.f32.mxu0 0.0
      %910 = vmatmul.mubr.f32.gmra.mrb[0].mxu0 %v536
      %v911 = vpop.f32.mrb[0].mxu0
      %v912 = vadd.f32 %v355, %v911
      %v913 = vpop.f32.mrb[0].mxu0
      %914 = vmatprep.mubr.f32.mxu0 0.0
      %915 = vmatmul.mubr.f32.gmra.mrb[0].mxu0 %v539
      %v916 = vpop.f32.mrb[0].mxu0
      %v917 = vadd.f32 %v355, %v916
      %v918 = vpop.f32.mrb[0].mxu0
      %919 = vmatprep.mubr.f32.mxu0 0.0
      %920 = vmatmul.mubr.f32.gmra.mrb[0].mxu0 %v542
      %v921 = vpop.f32.mrb[0].mxu0
      %v922 = vadd.f32 %v355, %v921
      %v923 = vpop.f32.mrb[0].mxu0
      %924 = vmatprep.mubr.f32.mxu0 0.0
      %925 = vmatmul.mubr.f32.gmra.mrb[0].mxu0 %v545
      %v926 = vpop.f32.mrb[0].mxu0
      %v927 = vadd.f32 %v355, %v926
      %v928 = vpop.f32.mrb[0].mxu0
      %929 = vmatprep.mubr.f32.mxu0 0.0
      %930 = vmatmul.mubr.f32.gmra.mrb[0].mxu0 %v548
      %v931 = vpop.f32.mrb[0].mxu0
      %v932 = vadd.f32 %v355, %v931
      %v933 = vpop.f32.mrb[0].mxu0
      %934 = vdwg.mxu0
      %v935 = vmax.f32 %v617, 0.0
      %v936 = vmax.f32 %v622, 0.0
      %v937 = vmax.f32 %v627, 0.0
      %v938 = vmax.f32 %v632, 0.0
      %v939 = vmax.f32 %v637, 0.0
      %v940 = vmax.f32 %v642, 0.0
      %v941 = vmax.f32 %v647, 0.0
      %v942 = vmax.f32 %v652, 0.0
      %v943 = vmax.f32 %v657, 0.0
      %v944 = vmax.f32 %v662, 0.0
      %v945 = vmax.f32 %v667, 0.0
      %v946 = vmax.f32 %v672, 0.0
      %v947 = vmax.f32 %v677, 0.0
      %v948 = vmax.f32 %v682, 0.0
      %v949 = vmax.f32 %v687, 0.0
      %v950 = vmax.f32 %v692, 0.0
      %v951 = vmax.f32 %v697, 0.0
      %v952 = vmax.f32 %v702, 0.0
      %v953 = vmax.f32 %v707, 0.0
      %v954 = vmax.f32 %v712, 0.0
      %v955 = vmax.f32 %v717, 0.0
      %v956 = vmax.f32 %v722, 0.0
      %v957 = vmax.f32 %v727, 0.0
      %v958 = vmax.f32 %v732, 0.0
      %v959 = vmax.f32 %v737, 0.0
      %v960 = vmax.f32 %v742, 0.0
      %v961 = vmax.f32 %v747, 0.0
      %v962 = vmax.f32 %v752, 0.0
      %v963 = vmax.f32 %v757, 0.0
      %v964 = vmax.f32 %v762, 0.0
      %v965 = vmax.f32 %v767, 0.0
      %v966 = vmax.f32 %v772, 0.0
      %v967 = vmax.f32 %v777, 0.0
      %v968 = vmax.f32 %v782, 0.0
      %v969 = vmax.f32 %v787, 0.0
      %v970 = vmax.f32 %v792, 0.0
      %v971 = vmax.f32 %v797, 0.0
      %v972 = vmax.f32 %v802, 0.0
      %v973 = vmax.f32 %v807, 0.0
      %v974 = vmax.f32 %v812, 0.0
      %v975 = vmax.f32 %v817, 0.0
      %v976 = vmax.f32 %v822, 0.0
      %v977 = vmax.f32 %v827, 0.0
      %v978 = vmax.f32 %v832, 0.0
      %v979 = vmax.f32 %v837, 0.0
      %v980 = vmax.f32 %v842, 0.0
      %v981 = vmax.f32 %v847, 0.0
      %v982 = vmax.f32 %v852, 0.0
      %v983 = vmax.f32 %v857, 0.0
      %v984 = vmax.f32 %v862, 0.0
      %v985 = vmax.f32 %v867, 0.0
      %v986 = vmax.f32 %v872, 0.0
      %v987 = vmax.f32 %v877, 0.0
      %v988 = vmax.f32 %v882, 0.0
      %v989 = vmax.f32 %v887, 0.0
      %v990 = vmax.f32 %v892, 0.0
      %v991 = vmax.f32 %v897, 0.0
      %v992 = vmax.f32 %v902, 0.0
      %v993 = vmax.f32 %v907, 0.0
      %v994 = vmax.f32 %v912, 0.0
      %v995 = vmax.f32 %v917, 0.0
      %v996 = vmax.f32 %v922, 0.0
      %v997 = vmax.f32 %v927, 0.0
      %v998 = vmax.f32 %v932, 0.0
      %v999 = vld [vmem:[%s3] sm:$0xff]
      %v1000 = vld [vmem:[%s3 + $0x8] sm:$0xff]
      %v1001 = vld [vmem:[%s3 + $0x10] sm:$0xff]
      %v1002 = vld [vmem:[%s3 + $0x18] sm:$0xff]
      %v1003 = vld [vmem:[%s3 + $0x20] sm:$0xff]
      %v1004 = vld [vmem:[%s3 + $0x28] sm:$0xff]
      %v1005 = vld [vmem:[%s3 + $0x30] sm:$0xff]
      %v1006 = vld [vmem:[%s3 + $0x38] sm:$0xff]
      %v1007 = vld [vmem:[%s3 + $0x40] sm:$0xff]
      %v1008 = vld [vmem:[%s3 + $0x48] sm:$0xff]
      %v1009 = vld [vmem:[%s3 + $0x50] sm:$0xff]
      %v1010 = vld [vmem:[%s3 + $0x58] sm:$0xff]
      %v1011 = vld [vmem:[%s3 + $0x60] sm:$0xff]
      %v1012 = vld [vmem:[%s3 + $0x68] sm:$0xff]
      %v1013 = vld [vmem:[%s3 + $0x70] sm:$0xff]
      %v1014 = vld [vmem:[%s3 + $0x78] sm:$0xff]
      %v1015 = vld [vmem:[%s4] sm:$0x1]
      %v1017 = vlaneseq
      %v1018 = vshrl.u32 %v1017, 7
      %v1019 = vsub.s32 0, %v1018
      %v1020 = vrot.slane %v1015, %v1019
      %1022 = vmatprep.subr.mxu0 0.0
      %1023 = vmatpush1.msra.mxu0 %v999
      %1024 = vmatprep.subr.mxu0 0.0
      %1025 = vmatpush1.msra.mxu0 %v1000
      %1026 = vmatprep.subr.mxu0 0.0
      %1027 = vmatpush1.msra.mxu0 %v1001
      %1028 = vmatprep.subr.mxu0 0.0
      %1029 = vmatpush1.msra.mxu0 %v1002
      %1030 = vmatprep.subr.mxu0 0.0
      %1031 = vmatpush1.msra.mxu0 %v1003
      %1032 = vmatprep.subr.mxu0 0.0
      %1033 = vmatpush1.msra.mxu0 %v1004
      %1034 = vmatprep.subr.mxu0 0.0
      %1035 = vmatpush1.msra.mxu0 %v1005
      %1036 = vmatprep.subr.mxu0 0.0
      %1037 = vmatpush1.msra.mxu0 %v1006
      %1038 = vmatprep.subr.mxu0 0.0
      %1039 = vmatpush1.msra.mxu0 %v1007
      %1040 = vmatprep.subr.mxu0 0.0
      %1041 = vmatpush1.msra.mxu0 %v1008
      %1042 = vmatprep.subr.mxu0 0.0
      %1043 = vmatpush1.msra.mxu0 %v1009
      %1044 = vmatprep.subr.mxu0 0.0
      %1045 = vmatpush1.msra.mxu0 %v1010
      %1046 = vmatprep.subr.mxu0 0.0
      %1047 = vmatpush1.msra.mxu0 %v1011
      %1048 = vmatprep.subr.mxu0 0.0
      %1049 = vmatpush1.msra.mxu0 %v1012
      %1050 = vmatprep.subr.mxu0 0.0
      %1051 = vmatpush1.msra.mxu0 %v1013
      %1052 = vmatprep.subr.mxu0 0.0
      %1053 = vmatpush1.msra.mxu0 %v1014
      %1054 = vmatprep.subr.mxu0 0.0
      %1055 = vmatpush1.msra.mxu0 0.0
      %1056 = vmatprep.subr.mxu0 0.0
      %1057 = vmatpush1.msra.mxu0 0.0
      %1058 = vmatprep.subr.mxu0 0.0
      %1059 = vmatpush1.msra.mxu0 0.0
      %1060 = vmatprep.subr.mxu0 0.0
      %1061 = vmatpush1.msra.mxu0 0.0
      %1062 = vmatprep.subr.mxu0 0.0
      %1063 = vmatpush1.msra.mxu0 0.0
      %1064 = vmatprep.subr.mxu0 0.0
      %1065 = vmatpush1.msra.mxu0 0.0
      %1066 = vmatprep.subr.mxu0 0.0
      %1067 = vmatpush1.msra.mxu0 0.0
      %1068 = vmatprep.subr.mxu0 0.0
      %1069 = vmatpush1.msra.mxu0 0.0
      %1070 = vmatprep.subr.mxu0 0.0
      %1071 = vmatpush1.msra.mxu0 0.0
      %1072 = vmatprep.subr.mxu0 0.0
      %1073 = vmatpush1.msra.mxu0 0.0
      %1074 = vmatprep.subr.mxu0 0.0
      %1075 = vmatpush1.msra.mxu0 0.0
      %1076 = vmatprep.subr.mxu0 0.0
      %1077 = vmatpush1.msra.mxu0 0.0
      %1078 = vmatprep.subr.mxu0 0.0
      %1079 = vmatpush1.msra.mxu0 0.0
      %1080 = vmatprep.subr.mxu0 0.0
      %1081 = vmatpush1.msra.mxu0 0.0
      %1082 = vmatprep.subr.mxu0 0.0
      %1083 = vmatpush1.msra.mxu0 0.0
      %1084 = vmatprep.subr.mxu0 0.0
      %1085 = vmatpush1.msra.mxu0 0.0
      %1086 = vmatprep.mubr.f32.mxu0 0.0
      %1087 = vmatmul.mubr.f32.gmra.mrb[0].mxu0 %v935
      %v1088 = vpop.f32.mrb[0].mxu0
      %v1089 = vadd.f32 %v1020, %v1088
      %v1090 = vpop.f32.mrb[0].mxu0
      %1091 = vmatprep.mubr.f32.mxu0 0.0
      %1092 = vmatmul.mubr.f32.gmra.mrb[0].mxu0 %v936
      %v1093 = vpop.f32.mrb[0].mxu0
      %v1094 = vadd.f32 %v1020, %v1093
      %v1095 = vpop.f32.mrb[0].mxu0
      %1096 = vmatprep.mubr.f32.mxu0 0.0
      %1097 = vmatmul.mubr.f32.gmra.mrb[0].mxu0 %v937
      %v1098 = vpop.f32.mrb[0].mxu0
      %v1099 = vadd.f32 %v1020, %v1098
      %v1100 = vpop.f32.mrb[0].mxu0
      %1101 = vmatprep.mubr.f32.mxu0 0.0
      %1102 = vmatmul.mubr.f32.gmra.mrb[0].mxu0 %v938
      %v1103 = vpop.f32.mrb[0].mxu0
      %v1104 = vadd.f32 %v1020, %v1103
      %v1105 = vpop.f32.mrb[0].mxu0
      %1106 = vmatprep.mubr.f32.mxu0 0.0
      %1107 = vmatmul.mubr.f32.gmra.mrb[0].mxu0 %v939
      %v1108 = vpop.f32.mrb[0].mxu0
      %v1109 = vadd.f32 %v1020, %v1108
      %v1110 = vpop.f32.mrb[0].mxu0
      %1111 = vmatprep.mubr.f32.mxu0 0.0
      %1112 = vmatmul.mubr.f32.gmra.mrb[0].mxu0 %v940
      %v1113 = vpop.f32.mrb[0].mxu0
      %v1114 = vadd.f32 %v1020, %v1113
      %v1115 = vpop.f32.mrb[0].mxu0
      %1116 = vmatprep.mubr.f32.mxu0 0.0
      %1117 = vmatmul.mubr.f32.gmra.mrb[0].mxu0 %v941
      %v1118 = vpop.f32.mrb[0].mxu0
      %v1119 = vadd.f32 %v1020, %v1118
      %v1120 = vpop.f32.mrb[0].mxu0
      %1121 = vmatprep.mubr.f32.mxu0 0.0
      %1122 = vmatmul.mubr.f32.gmra.mrb[0].mxu0 %v942
      %v1123 = vpop.f32.mrb[0].mxu0
      %v1124 = vadd.f32 %v1020, %v1123
      %v1125 = vpop.f32.mrb[0].mxu0
      %1126 = vmatprep.mubr.f32.mxu0 0.0
      %1127 = vmatmul.mubr.f32.gmra.mrb[0].mxu0 %v943
      %v1128 = vpop.f32.mrb[0].mxu0
      %v1129 = vadd.f32 %v1020, %v1128
      %v1130 = vpop.f32.mrb[0].mxu0
      %1131 = vmatprep.mubr.f32.mxu0 0.0
      %1132 = vmatmul.mubr.f32.gmra.mrb[0].mxu0 %v944
      %v1133 = vpop.f32.mrb[0].mxu0
      %v1134 = vadd.f32 %v1020, %v1133
      %v1135 = vpop.f32.mrb[0].mxu0
      %1136 = vmatprep.mubr.f32.mxu0 0.0
      %1137 = vmatmul.mubr.f32.gmra.mrb[0].mxu0 %v945
      %v1138 = vpop.f32.mrb[0].mxu0
      %v1139 = vadd.f32 %v1020, %v1138
      %v1140 = vpop.f32.mrb[0].mxu0
      %1141 = vmatprep.mubr.f32.mxu0 0.0
      %1142 = vmatmul.mubr.f32.gmra.mrb[0].mxu0 %v946
      %v1143 = vpop.f32.mrb[0].mxu0
      %v1144 = vadd.f32 %v1020, %v1143
      %v1145 = vpop.f32.mrb[0].mxu0
      %1146 = vmatprep.mubr.f32.mxu0 0.0
      %1147 = vmatmul.mubr.f32.gmra.mrb[0].mxu0 %v947
      %v1148 = vpop.f32.mrb[0].mxu0
      %v1149 = vadd.f32 %v1020, %v1148
      %v1150 = vpop.f32.mrb[0].mxu0
      %1151 = vmatprep.mubr.f32.mxu0 0.0
      %1152 = vmatmul.mubr.f32.gmra.mrb[0].mxu0 %v948
      %v1153 = vpop.f32.mrb[0].mxu0
      %v1154 = vadd.f32 %v1020, %v1153
      %v1155 = vpop.f32.mrb[0].mxu0
      %1156 = vmatprep.mubr.f32.mxu0 0.0
      %1157 = vmatmul.mubr.f32.gmra.mrb[0].mxu0 %v949
      %v1158 = vpop.f32.mrb[0].mxu0
      %v1159 = vadd.f32 %v1020, %v1158
      %v1160 = vpop.f32.mrb[0].mxu0
      %1161 = vmatprep.mubr.f32.mxu0 0.0
      %1162 = vmatmul.mubr.f32.gmra.mrb[0].mxu0 %v950
      %v1163 = vpop.f32.mrb[0].mxu0
      %v1164 = vadd.f32 %v1020, %v1163
      %v1165 = vpop.f32.mrb[0].mxu0
      %1166 = vmatprep.mubr.f32.mxu0 0.0
      %1167 = vmatmul.mubr.f32.gmra.mrb[0].mxu0 %v951
      %v1168 = vpop.f32.mrb[0].mxu0
      %v1169 = vadd.f32 %v1020, %v1168
      %v1170 = vpop.f32.mrb[0].mxu0
      %1171 = vmatprep.mubr.f32.mxu0 0.0
      %1172 = vmatmul.mubr.f32.gmra.mrb[0].mxu0 %v952
      %v1173 = vpop.f32.mrb[0].mxu0
      %v1174 = vadd.f32 %v1020, %v1173
      %v1175 = vpop.f32.mrb[0].mxu0
      %1176 = vmatprep.mubr.f32.mxu0 0.0
      %1177 = vmatmul.mubr.f32.gmra.mrb[0].mxu0 %v953
      %v1178 = vpop.f32.mrb[0].mxu0
      %v1179 = vadd.f32 %v1020, %v1178
      %v1180 = vpop.f32.mrb[0].mxu0
      %1181 = vmatprep.mubr.f32.mxu0 0.0
      %1182 = vmatmul.mubr.f32.gmra.mrb[0].mxu0 %v954
      %v1183 = vpop.f32.mrb[0].mxu0
      %v1184 = vadd.f32 %v1020, %v1183
      %v1185 = vpop.f32.mrb[0].mxu0
      %1186 = vmatprep.mubr.f32.mxu0 0.0
      %1187 = vmatmul.mubr.f32.gmra.mrb[0].mxu0 %v955
      %v1188 = vpop.f32.mrb[0].mxu0
      %v1189 = vadd.f32 %v1020, %v1188
      %v1190 = vpop.f32.mrb[0].mxu0
      %1191 = vmatprep.mubr.f32.mxu0 0.0
      %1192 = vmatmul.mubr.f32.gmra.mrb[0].mxu0 %v956
      %v1193 = vpop.f32.mrb[0].mxu0
      %v1194 = vadd.f32 %v1020, %v1193
      %v1195 = vpop.f32.mrb[0].mxu0
      %1196 = vmatprep.mubr.f32.mxu0 0.0
      %1197 = vmatmul.mubr.f32.gmra.mrb[0].mxu0 %v957
      %v1198 = vpop.f32.mrb[0].mxu0
      %v1199 = vadd.f32 %v1020, %v1198
      %v1200 = vpop.f32.mrb[0].mxu0
      %1201 = vmatprep.mubr.f32.mxu0 0.0
      %1202 = vmatmul.mubr.f32.gmra.mrb[0].mxu0 %v958
      %v1203 = vpop.f32.mrb[0].mxu0
      %v1204 = vadd.f32 %v1020, %v1203
      %v1205 = vpop.f32.mrb[0].mxu0
      %1206 = vmatprep.mubr.f32.mxu0 0.0
      %1207 = vmatmul.mubr.f32.gmra.mrb[0].mxu0 %v959
      %v1208 = vpop.f32.mrb[0].mxu0
      %v1209 = vadd.f32 %v1020, %v1208
      %v1210 = vpop.f32.mrb[0].mxu0
      %1211 = vmatprep.mubr.f32.mxu0 0.0
      %1212 = vmatmul.mubr.f32.gmra.mrb[0].mxu0 %v960
      %v1213 = vpop.f32.mrb[0].mxu0
      %v1214 = vadd.f32 %v1020, %v1213
      %v1215 = vpop.f32.mrb[0].mxu0
      %1216 = vmatprep.mubr.f32.mxu0 0.0
      %1217 = vmatmul.mubr.f32.gmra.mrb[0].mxu0 %v961
      %v1218 = vpop.f32.mrb[0].mxu0
      %v1219 = vadd.f32 %v1020, %v1218
      %v1220 = vpop.f32.mrb[0].mxu0
      %1221 = vmatprep.mubr.f32.mxu0 0.0
      %1222 = vmatmul.mubr.f32.gmra.mrb[0].mxu0 %v962
      %v1223 = vpop.f32.mrb[0].mxu0
      %v1224 = vadd.f32 %v1020, %v1223
      %v1225 = vpop.f32.mrb[0].mxu0
      %1226 = vmatprep.mubr.f32.mxu0 0.0
      %1227 = vmatmul.mubr.f32.gmra.mrb[0].mxu0 %v963
      %v1228 = vpop.f32.mrb[0].mxu0
      %v1229 = vadd.f32 %v1020, %v1228
      %v1230 = vpop.f32.mrb[0].mxu0
      %1231 = vmatprep.mubr.f32.mxu0 0.0
      %1232 = vmatmul.mubr.f32.gmra.mrb[0].mxu0 %v964
      %v1233 = vpop.f32.mrb[0].mxu0
      %v1234 = vadd.f32 %v1020, %v1233
      %v1235 = vpop.f32.mrb[0].mxu0
      %1236 = vmatprep.mubr.f32.mxu0 0.0
      %1237 = vmatmul.mubr.f32.gmra.mrb[0].mxu0 %v965
      %v1238 = vpop.f32.mrb[0].mxu0
      %v1239 = vadd.f32 %v1020, %v1238
      %v1240 = vpop.f32.mrb[0].mxu0
      %1241 = vmatprep.mubr.f32.mxu0 0.0
      %1242 = vmatmul.mubr.f32.gmra.mrb[0].mxu0 %v966
      %v1243 = vpop.f32.mrb[0].mxu0
      %v1244 = vadd.f32 %v1020, %v1243
      %v1245 = vpop.f32.mrb[0].mxu0
      %1246 = vmatprep.mubr.f32.mxu0 0.0
      %1247 = vmatmul.mubr.f32.gmra.mrb[0].mxu0 %v967
      %v1248 = vpop.f32.mrb[0].mxu0
      %v1249 = vadd.f32 %v1020, %v1248
      %v1250 = vpop.f32.mrb[0].mxu0
      %1251 = vmatprep.mubr.f32.mxu0 0.0
      %1252 = vmatmul.mubr.f32.gmra.mrb[0].mxu0 %v968
      %v1253 = vpop.f32.mrb[0].mxu0
      %v1254 = vadd.f32 %v1020, %v1253
      %v1255 = vpop.f32.mrb[0].mxu0
      %1256 = vmatprep.mubr.f32.mxu0 0.0
      %1257 = vmatmul.mubr.f32.gmra.mrb[0].mxu0 %v969
      %v1258 = vpop.f32.mrb[0].mxu0
      %v1259 = vadd.f32 %v1020, %v1258
      %v1260 = vpop.f32.mrb[0].mxu0
      %1261 = vmatprep.mubr.f32.mxu0 0.0
      %1262 = vmatmul.mubr.f32.gmra.mrb[0].mxu0 %v970
      %v1263 = vpop.f32.mrb[0].mxu0
      %v1264 = vadd.f32 %v1020, %v1263
      %v1265 = vpop.f32.mrb[0].mxu0
      %1266 = vmatprep.mubr.f32.mxu0 0.0
      %1267 = vmatmul.mubr.f32.gmra.mrb[0].mxu0 %v971
      %v1268 = vpop.f32.mrb[0].mxu0
      %v1269 = vadd.f32 %v1020, %v1268
      %v1270 = vpop.f32.mrb[0].mxu0
      %1271 = vmatprep.mubr.f32.mxu0 0.0
      %1272 = vmatmul.mubr.f32.gmra.mrb[0].mxu0 %v972
      %v1273 = vpop.f32.mrb[0].mxu0
      %v1274 = vadd.f32 %v1020, %v1273
      %v1275 = vpop.f32.mrb[0].mxu0
      %1276 = vmatprep.mubr.f32.mxu0 0.0
      %1277 = vmatmul.mubr.f32.gmra.mrb[0].mxu0 %v973
      %v1278 = vpop.f32.mrb[0].mxu0
      %v1279 = vadd.f32 %v1020, %v1278
      %v1280 = vpop.f32.mrb[0].mxu0
      %1281 = vmatprep.mubr.f32.mxu0 0.0
      %1282 = vmatmul.mubr.f32.gmra.mrb[0].mxu0 %v974
      %v1283 = vpop.f32.mrb[0].mxu0
      %v1284 = vadd.f32 %v1020, %v1283
      %v1285 = vpop.f32.mrb[0].mxu0
      %1286 = vmatprep.mubr.f32.mxu0 0.0
      %1287 = vmatmul.mubr.f32.gmra.mrb[0].mxu0 %v975
      %v1288 = vpop.f32.mrb[0].mxu0
      %v1289 = vadd.f32 %v1020, %v1288
      %v1290 = vpop.f32.mrb[0].mxu0
      %1291 = vmatprep.mubr.f32.mxu0 0.0
      %1292 = vmatmul.mubr.f32.gmra.mrb[0].mxu0 %v976
      %v1293 = vpop.f32.mrb[0].mxu0
      %v1294 = vadd.f32 %v1020, %v1293
      %v1295 = vpop.f32.mrb[0].mxu0
      %1296 = vmatprep.mubr.f32.mxu0 0.0
      %1297 = vmatmul.mubr.f32.gmra.mrb[0].mxu0 %v977
      %v1298 = vpop.f32.mrb[0].mxu0
      %v1299 = vadd.f32 %v1020, %v1298
      %v1300 = vpop.f32.mrb[0].mxu0
      %1301 = vmatprep.mubr.f32.mxu0 0.0
      %1302 = vmatmul.mubr.f32.gmra.mrb[0].mxu0 %v978
      %v1303 = vpop.f32.mrb[0].mxu0
      %v1304 = vadd.f32 %v1020, %v1303
      %v1305 = vpop.f32.mrb[0].mxu0
      %1306 = vmatprep.mubr.f32.mxu0 0.0
      %1307 = vmatmul.mubr.f32.gmra.mrb[0].mxu0 %v979
      %v1308 = vpop.f32.mrb[0].mxu0
      %v1309 = vadd.f32 %v1020, %v1308
      %v1310 = vpop.f32.mrb[0].mxu0
      %1311 = vmatprep.mubr.f32.mxu0 0.0
      %1312 = vmatmul.mubr.f32.gmra.mrb[0].mxu0 %v980
      %v1313 = vpop.f32.mrb[0].mxu0
      %v1314 = vadd.f32 %v1020, %v1313
      %v1315 = vpop.f32.mrb[0].mxu0
      %1316 = vmatprep.mubr.f32.mxu0 0.0
      %1317 = vmatmul.mubr.f32.gmra.mrb[0].mxu0 %v981
      %v1318 = vpop.f32.mrb[0].mxu0
      %v1319 = vadd.f32 %v1020, %v1318
      %v1320 = vpop.f32.mrb[0].mxu0
      %1321 = vmatprep.mubr.f32.mxu0 0.0
      %1322 = vmatmul.mubr.f32.gmra.mrb[0].mxu0 %v982
      %v1323 = vpop.f32.mrb[0].mxu0
      %v1324 = vadd.f32 %v1020, %v1323
      %v1325 = vpop.f32.mrb[0].mxu0
      %1326 = vmatprep.mubr.f32.mxu0 0.0
      %1327 = vmatmul.mubr.f32.gmra.mrb[0].mxu0 %v983
      %v1328 = vpop.f32.mrb[0].mxu0
      %v1329 = vadd.f32 %v1020, %v1328
      %v1330 = vpop.f32.mrb[0].mxu0
      %1331 = vmatprep.mubr.f32.mxu0 0.0
      %1332 = vmatmul.mubr.f32.gmra.mrb[0].mxu0 %v984
      %v1333 = vpop.f32.mrb[0].mxu0
      %v1334 = vadd.f32 %v1020, %v1333
      %v1335 = vpop.f32.mrb[0].mxu0
      %1336 = vmatprep.mubr.f32.mxu0 0.0
      %1337 = vmatmul.mubr.f32.gmra.mrb[0].mxu0 %v985
      %v1338 = vpop.f32.mrb[0].mxu0
      %v1339 = vadd.f32 %v1020, %v1338
      %v1340 = vpop.f32.mrb[0].mxu0
      %1341 = vmatprep.mubr.f32.mxu0 0.0
      %1342 = vmatmul.mubr.f32.gmra.mrb[0].mxu0 %v986
      %v1343 = vpop.f32.mrb[0].mxu0
      %v1344 = vadd.f32 %v1020, %v1343
      %v1345 = vpop.f32.mrb[0].mxu0
      %1346 = vmatprep.mubr.f32.mxu0 0.0
      %1347 = vmatmul.mubr.f32.gmra.mrb[0].mxu0 %v987
      %v1348 = vpop.f32.mrb[0].mxu0
      %v1349 = vadd.f32 %v1020, %v1348
      %v1350 = vpop.f32.mrb[0].mxu0
      %1351 = vmatprep.mubr.f32.mxu0 0.0
      %1352 = vmatmul.mubr.f32.gmra.mrb[0].mxu0 %v988
      %v1353 = vpop.f32.mrb[0].mxu0
      %v1354 = vadd.f32 %v1020, %v1353
      %v1355 = vpop.f32.mrb[0].mxu0
      %1356 = vmatprep.mubr.f32.mxu0 0.0
      %1357 = vmatmul.mubr.f32.gmra.mrb[0].mxu0 %v989
      %v1358 = vpop.f32.mrb[0].mxu0
      %v1359 = vadd.f32 %v1020, %v1358
      %v1360 = vpop.f32.mrb[0].mxu0
      %1361 = vmatprep.mubr.f32.mxu0 0.0
      %1362 = vmatmul.mubr.f32.gmra.mrb[0].mxu0 %v990
      %v1363 = vpop.f32.mrb[0].mxu0
      %v1364 = vadd.f32 %v1020, %v1363
      %v1365 = vpop.f32.mrb[0].mxu0
      %1366 = vmatprep.mubr.f32.mxu0 0.0
      %1367 = vmatmul.mubr.f32.gmra.mrb[0].mxu0 %v991
      %v1368 = vpop.f32.mrb[0].mxu0
      %v1369 = vadd.f32 %v1020, %v1368
      %v1370 = vpop.f32.mrb[0].mxu0
      %1371 = vmatprep.mubr.f32.mxu0 0.0
      %1372 = vmatmul.mubr.f32.gmra.mrb[0].mxu0 %v992
      %v1373 = vpop.f32.mrb[0].mxu0
      %v1374 = vadd.f32 %v1020, %v1373
      %v1375 = vpop.f32.mrb[0].mxu0
      %1376 = vmatprep.mubr.f32.mxu0 0.0
      %1377 = vmatmul.mubr.f32.gmra.mrb[0].mxu0 %v993
      %v1378 = vpop.f32.mrb[0].mxu0
      %v1379 = vadd.f32 %v1020, %v1378
      %v1380 = vpop.f32.mrb[0].mxu0
      %1381 = vmatprep.mubr.f32.mxu0 0.0
      %1382 = vmatmul.mubr.f32.gmra.mrb[0].mxu0 %v994
      %v1383 = vpop.f32.mrb[0].mxu0
      %v1384 = vadd.f32 %v1020, %v1383
      %v1385 = vpop.f32.mrb[0].mxu0
      %1386 = vmatprep.mubr.f32.mxu0 0.0
      %1387 = vmatmul.mubr.f32.gmra.mrb[0].mxu0 %v995
      %v1388 = vpop.f32.mrb[0].mxu0
      %v1389 = vadd.f32 %v1020, %v1388
      %v1390 = vpop.f32.mrb[0].mxu0
      %1391 = vmatprep.mubr.f32.mxu0 0.0
      %1392 = vmatmul.mubr.f32.gmra.mrb[0].mxu0 %v996
      %v1393 = vpop.f32.mrb[0].mxu0
      %v1394 = vadd.f32 %v1020, %v1393
      %v1395 = vpop.f32.mrb[0].mxu0
      %1396 = vmatprep.mubr.f32.mxu0 0.0
      %1397 = vmatmul.mubr.f32.gmra.mrb[0].mxu0 %v997
      %v1398 = vpop.f32.mrb[0].mxu0
      %v1399 = vadd.f32 %v1020, %v1398
      %v1400 = vpop.f32.mrb[0].mxu0
      %1401 = vmatprep.mubr.f32.mxu0 0.0
      %1402 = vmatmul.mubr.f32.gmra.mrb[0].mxu0 %v998
      %v1403 = vpop.f32.mrb[0].mxu0
      %v1404 = vadd.f32 %v1020, %v1403
      %v1405 = vpop.f32.mrb[0].mxu0
      %1406 = vdwg.mxu0
      %v1407 = vmax.f32 %v1089, 0.0
      %v1408 = vmax.f32 %v1094, 0.0
      %v1409 = vmax.f32 %v1099, 0.0
      %v1410 = vmax.f32 %v1104, 0.0
      %v1411 = vmax.f32 %v1109, 0.0
      %v1412 = vmax.f32 %v1114, 0.0
      %v1413 = vmax.f32 %v1119, 0.0
      %v1414 = vmax.f32 %v1124, 0.0
      %v1415 = vmax.f32 %v1129, 0.0
      %v1416 = vmax.f32 %v1134, 0.0
      %v1417 = vmax.f32 %v1139, 0.0
      %v1418 = vmax.f32 %v1144, 0.0
      %v1419 = vmax.f32 %v1149, 0.0
      %v1420 = vmax.f32 %v1154, 0.0
      %v1421 = vmax.f32 %v1159, 0.0
      %v1422 = vmax.f32 %v1164, 0.0
      %v1423 = vmax.f32 %v1169, 0.0
      %v1424 = vmax.f32 %v1174, 0.0
      %v1425 = vmax.f32 %v1179, 0.0
      %v1426 = vmax.f32 %v1184, 0.0
      %v1427 = vmax.f32 %v1189, 0.0
      %v1428 = vmax.f32 %v1194, 0.0
      %v1429 = vmax.f32 %v1199, 0.0
      %v1430 = vmax.f32 %v1204, 0.0
      %v1431 = vmax.f32 %v1209, 0.0
      %v1432 = vmax.f32 %v1214, 0.0
      %v1433 = vmax.f32 %v1219, 0.0
      %v1434 = vmax.f32 %v1224, 0.0
      %v1435 = vmax.f32 %v1229, 0.0
      %v1436 = vmax.f32 %v1234, 0.0
      %v1437 = vmax.f32 %v1239, 0.0
      %v1438 = vmax.f32 %v1244, 0.0
      %v1439 = vmax.f32 %v1249, 0.0
      %v1440 = vmax.f32 %v1254, 0.0
      %v1441 = vmax.f32 %v1259, 0.0
      %v1442 = vmax.f32 %v1264, 0.0
      %v1443 = vmax.f32 %v1269, 0.0
      %v1444 = vmax.f32 %v1274, 0.0
      %v1445 = vmax.f32 %v1279, 0.0
      %v1446 = vmax.f32 %v1284, 0.0
      %v1447 = vmax.f32 %v1289, 0.0
      %v1448 = vmax.f32 %v1294, 0.0
      %v1449 = vmax.f32 %v1299, 0.0
      %v1450 = vmax.f32 %v1304, 0.0
      %v1451 = vmax.f32 %v1309, 0.0
      %v1452 = vmax.f32 %v1314, 0.0
      %v1453 = vmax.f32 %v1319, 0.0
      %v1454 = vmax.f32 %v1324, 0.0
      %v1455 = vmax.f32 %v1329, 0.0
      %v1456 = vmax.f32 %v1334, 0.0
      %v1457 = vmax.f32 %v1339, 0.0
      %v1458 = vmax.f32 %v1344, 0.0
      %v1459 = vmax.f32 %v1349, 0.0
      %v1460 = vmax.f32 %v1354, 0.0
      %v1461 = vmax.f32 %v1359, 0.0
      %v1462 = vmax.f32 %v1364, 0.0
      %v1463 = vmax.f32 %v1369, 0.0
      %v1464 = vmax.f32 %v1374, 0.0
      %v1465 = vmax.f32 %v1379, 0.0
      %v1466 = vmax.f32 %v1384, 0.0
      %v1467 = vmax.f32 %v1389, 0.0
      %v1468 = vmax.f32 %v1394, 0.0
      %v1469 = vmax.f32 %v1399, 0.0
      %v1470 = vmax.f32 %v1404, 0.0
      %v1471 = vld [vmem:[%s5] sm:$0xff]
      %v1472 = vld [vmem:[%s5 + $0x8] sm:$0xff]
      %v1473 = vld [vmem:[%s5 + $0x10] sm:$0xff]
      %v1474 = vld [vmem:[%s5 + $0x18] sm:$0xff]
      %v1475 = vld [vmem:[%s5 + $0x20] sm:$0xff]
      %v1476 = vld [vmem:[%s5 + $0x28] sm:$0xff]
      %v1477 = vld [vmem:[%s5 + $0x30] sm:$0xff]
      %v1478 = vld [vmem:[%s5 + $0x38] sm:$0xff]
      %v1479 = vld [vmem:[%s5 + $0x40] sm:$0xff]
      %v1480 = vld [vmem:[%s5 + $0x48] sm:$0xff]
      %v1481 = vld [vmem:[%s5 + $0x50] sm:$0xff]
      %v1482 = vld [vmem:[%s5 + $0x58] sm:$0xff]
      %v1483 = vld [vmem:[%s5 + $0x60] sm:$0xff]
      %v1484 = vld [vmem:[%s5 + $0x68] sm:$0xff]
      %v1485 = vld [vmem:[%s5 + $0x70] sm:$0xff]
      %v1486 = vld [vmem:[%s5 + $0x78] sm:$0xff]
      %v1487 = vld [vmem:[%s6] sm:$0x1]
      %v1489 = vlaneseq
      %v1490 = vshrl.u32 %v1489, 7
      %v1491 = vsub.s32 0, %v1490
      %v1492 = vrot.slane %v1487, %v1491
      %1494 = vmatprep.subr.mxu0 0.0
      %1495 = vmatpush1.msra.mxu0 %v1471
      %1496 = vmatprep.subr.mxu0 0.0
      %1497 = vmatpush1.msra.mxu0 %v1472
      %1498 = vmatprep.subr.mxu0 0.0
      %1499 = vmatpush1.msra.mxu0 %v1473
      %1500 = vmatprep.subr.mxu0 0.0
      %1501 = vmatpush1.msra.mxu0 %v1474
      %1502 = vmatprep.subr.mxu0 0.0
      %1503 = vmatpush1.msra.mxu0 %v1475
      %1504 = vmatprep.subr.mxu0 0.0
      %1505 = vmatpush1.msra.mxu0 %v1476
      %1506 = vmatprep.subr.mxu0 0.0
      %1507 = vmatpush1.msra.mxu0 %v1477
      %1508 = vmatprep.subr.mxu0 0.0
      %1509 = vmatpush1.msra.mxu0 %v1478
      %1510 = vmatprep.subr.mxu0 0.0
      %1511 = vmatpush1.msra.mxu0 %v1479
      %1512 = vmatprep.subr.mxu0 0.0
      %1513 = vmatpush1.msra.mxu0 %v1480
      %1514 = vmatprep.subr.mxu0 0.0
      %1515 = vmatpush1.msra.mxu0 %v1481
      %1516 = vmatprep.subr.mxu0 0.0
      %1517 = vmatpush1.msra.mxu0 %v1482
      %1518 = vmatprep.subr.mxu0 0.0
      %1519 = vmatpush1.msra.mxu0 %v1483
      %1520 = vmatprep.subr.mxu0 0.0
      %1521 = vmatpush1.msra.mxu0 %v1484
      %1522 = vmatprep.subr.mxu0 0.0
      %1523 = vmatpush1.msra.mxu0 %v1485
      %1524 = vmatprep.subr.mxu0 0.0
      %1525 = vmatpush1.msra.mxu0 %v1486
      %1526 = vmatprep.subr.mxu0 0.0
      %1527 = vmatpush1.msra.mxu0 0.0
      %1528 = vmatprep.subr.mxu0 0.0
      %1529 = vmatpush1.msra.mxu0 0.0
      %1530 = vmatprep.subr.mxu0 0.0
      %1531 = vmatpush1.msra.mxu0 0.0
      %1532 = vmatprep.subr.mxu0 0.0
      %1533 = vmatpush1.msra.mxu0 0.0
      %1534 = vmatprep.subr.mxu0 0.0
      %1535 = vmatpush1.msra.mxu0 0.0
      %1536 = vmatprep.subr.mxu0 0.0
      %1537 = vmatpush1.msra.mxu0 0.0
      %1538 = vmatprep.subr.mxu0 0.0
      %1539 = vmatpush1.msra.mxu0 0.0
      %1540 = vmatprep.subr.mxu0 0.0
      %1541 = vmatpush1.msra.mxu0 0.0
      %1542 = vmatprep.subr.mxu0 0.0
      %1543 = vmatpush1.msra.mxu0 0.0
      %1544 = vmatprep.subr.mxu0 0.0
      %1545 = vmatpush1.msra.mxu0 0.0
      %1546 = vmatprep.subr.mxu0 0.0
      %1547 = vmatpush1.msra.mxu0 0.0
      %1548 = vmatprep.subr.mxu0 0.0
      %1549 = vmatpush1.msra.mxu0 0.0
      %1550 = vmatprep.subr.mxu0 0.0
      %1551 = vmatpush1.msra.mxu0 0.0
      %1552 = vmatprep.subr.mxu0 0.0
      %1553 = vmatpush1.msra.mxu0 0.0
      %1554 = vmatprep.subr.mxu0 0.0
      %1555 = vmatpush1.msra.mxu0 0.0
      %1556 = vmatprep.subr.mxu0 0.0
      %1557 = vmatpush1.msra.mxu0 0.0
      %1558 = vmatprep.mubr.f32.mxu0 0.0
      %1559 = vmatmul.mubr.f32.gmra.mrb[0].mxu0 %v1407
      %v1560 = vpop.f32.mrb[0].mxu0
      %v1561 = vadd.f32 %v1492, %v1560
      %v1562 = vpop.f32.mrb[0].mxu0
      %1563 = vmatprep.mubr.f32.mxu0 0.0
      %1564 = vmatmul.mubr.f32.gmra.mrb[0].mxu0 %v1408
      %v1565 = vpop.f32.mrb[0].mxu0
      %v1566 = vadd.f32 %v1492, %v1565
      %v1567 = vpop.f32.mrb[0].mxu0
      %1568 = vmatprep.mubr.f32.mxu0 0.0
      %1569 = vmatmul.mubr.f32.gmra.mrb[0].mxu0 %v1409
      %v1570 = vpop.f32.mrb[0].mxu0
      %v1571 = vadd.f32 %v1492, %v1570
      %v1572 = vpop.f32.mrb[0].mxu0
      %1573 = vmatprep.mubr.f32.mxu0 0.0
      %1574 = vmatmul.mubr.f32.gmra.mrb[0].mxu0 %v1410
      %v1575 = vpop.f32.mrb[0].mxu0
      %v1576 = vadd.f32 %v1492, %v1575
      %v1577 = vpop.f32.mrb[0].mxu0
      %1578 = vmatprep.mubr.f32.mxu0 0.0
      %1579 = vmatmul.mubr.f32.gmra.mrb[0].mxu0 %v1411
      %v1580 = vpop.f32.mrb[0].mxu0
      %v1581 = vadd.f32 %v1492, %v1580
      %v1582 = vpop.f32.mrb[0].mxu0
      %1583 = vmatprep.mubr.f32.mxu0 0.0
      %1584 = vmatmul.mubr.f32.gmra.mrb[0].mxu0 %v1412
      %v1585 = vpop.f32.mrb[0].mxu0
      %v1586 = vadd.f32 %v1492, %v1585
      %v1587 = vpop.f32.mrb[0].mxu0
      %1588 = vmatprep.mubr.f32.mxu0 0.0
      %1589 = vmatmul.mubr.f32.gmra.mrb[0].mxu0 %v1413
      %v1590 = vpop.f32.mrb[0].mxu0
      %v1591 = vadd.f32 %v1492, %v1590
      %v1592 = vpop.f32.mrb[0].mxu0
      %1593 = vmatprep.mubr.f32.mxu0 0.0
      %1594 = vmatmul.mubr.f32.gmra.mrb[0].mxu0 %v1414
      %v1595 = vpop.f32.mrb[0].mxu0
      %v1596 = vadd.f32 %v1492, %v1595
      %v1597 = vpop.f32.mrb[0].mxu0
      %1598 = vmatprep.mubr.f32.mxu0 0.0
      %1599 = vmatmul.mubr.f32.gmra.mrb[0].mxu0 %v1415
      %v1600 = vpop.f32.mrb[0].mxu0
      %v1601 = vadd.f32 %v1492, %v1600
      %v1602 = vpop.f32.mrb[0].mxu0
      %1603 = vmatprep.mubr.f32.mxu0 0.0
      %1604 = vmatmul.mubr.f32.gmra.mrb[0].mxu0 %v1416
      %v1605 = vpop.f32.mrb[0].mxu0
      %v1606 = vadd.f32 %v1492, %v1605
      %v1607 = vpop.f32.mrb[0].mxu0
      %1608 = vmatprep.mubr.f32.mxu0 0.0
      %1609 = vmatmul.mubr.f32.gmra.mrb[0].mxu0 %v1417
      %v1610 = vpop.f32.mrb[0].mxu0
      %v1611 = vadd.f32 %v1492, %v1610
      %v1612 = vpop.f32.mrb[0].mxu0
      %1613 = vmatprep.mubr.f32.mxu0 0.0
      %1614 = vmatmul.mubr.f32.gmra.mrb[0].mxu0 %v1418
      %v1615 = vpop.f32.mrb[0].mxu0
      %v1616 = vadd.f32 %v1492, %v1615
      %v1617 = vpop.f32.mrb[0].mxu0
      %1618 = vmatprep.mubr.f32.mxu0 0.0
      %1619 = vmatmul.mubr.f32.gmra.mrb[0].mxu0 %v1419
      %v1620 = vpop.f32.mrb[0].mxu0
      %v1621 = vadd.f32 %v1492, %v1620
      %v1622 = vpop.f32.mrb[0].mxu0
      %1623 = vmatprep.mubr.f32.mxu0 0.0
      %1624 = vmatmul.mubr.f32.gmra.mrb[0].mxu0 %v1420
      %v1625 = vpop.f32.mrb[0].mxu0
      %v1626 = vadd.f32 %v1492, %v1625
      %v1627 = vpop.f32.mrb[0].mxu0
      %1628 = vmatprep.mubr.f32.mxu0 0.0
      %1629 = vmatmul.mubr.f32.gmra.mrb[0].mxu0 %v1421
      %v1630 = vpop.f32.mrb[0].mxu0
      %v1631 = vadd.f32 %v1492, %v1630
      %v1632 = vpop.f32.mrb[0].mxu0
      %1633 = vmatprep.mubr.f32.mxu0 0.0
      %1634 = vmatmul.mubr.f32.gmra.mrb[0].mxu0 %v1422
      %v1635 = vpop.f32.mrb[0].mxu0
      %v1636 = vadd.f32 %v1492, %v1635
      %v1637 = vpop.f32.mrb[0].mxu0
      %1638 = vmatprep.mubr.f32.mxu0 0.0
      %1639 = vmatmul.mubr.f32.gmra.mrb[0].mxu0 %v1423
      %v1640 = vpop.f32.mrb[0].mxu0
      %v1641 = vadd.f32 %v1492, %v1640
      %v1642 = vpop.f32.mrb[0].mxu0
      %1643 = vmatprep.mubr.f32.mxu0 0.0
      %1644 = vmatmul.mubr.f32.gmra.mrb[0].mxu0 %v1424
      %v1645 = vpop.f32.mrb[0].mxu0
      %v1646 = vadd.f32 %v1492, %v1645
      %v1647 = vpop.f32.mrb[0].mxu0
      %1648 = vmatprep.mubr.f32.mxu0 0.0
      %1649 = vmatmul.mubr.f32.gmra.mrb[0].mxu0 %v1425
      %v1650 = vpop.f32.mrb[0].mxu0
      %v1651 = vadd.f32 %v1492, %v1650
      %v1652 = vpop.f32.mrb[0].mxu0
      %1653 = vmatprep.mubr.f32.mxu0 0.0
      %1654 = vmatmul.mubr.f32.gmra.mrb[0].mxu0 %v1426
      %v1655 = vpop.f32.mrb[0].mxu0
      %v1656 = vadd.f32 %v1492, %v1655
      %v1657 = vpop.f32.mrb[0].mxu0
      %1658 = vmatprep.mubr.f32.mxu0 0.0
      %1659 = vmatmul.mubr.f32.gmra.mrb[0].mxu0 %v1427
      %v1660 = vpop.f32.mrb[0].mxu0
      %v1661 = vadd.f32 %v1492, %v1660
      %v1662 = vpop.f32.mrb[0].mxu0
      %1663 = vmatprep.mubr.f32.mxu0 0.0
      %1664 = vmatmul.mubr.f32.gmra.mrb[0].mxu0 %v1428
      %v1665 = vpop.f32.mrb[0].mxu0
      %v1666 = vadd.f32 %v1492, %v1665
      %v1667 = vpop.f32.mrb[0].mxu0
      %1668 = vmatprep.mubr.f32.mxu0 0.0
      %1669 = vmatmul.mubr.f32.gmra.mrb[0].mxu0 %v1429
      %v1670 = vpop.f32.mrb[0].mxu0
      %v1671 = vadd.f32 %v1492, %v1670
      %v1672 = vpop.f32.mrb[0].mxu0
      %1673 = vmatprep.mubr.f32.mxu0 0.0
      %1674 = vmatmul.mubr.f32.gmra.mrb[0].mxu0 %v1430
      %v1675 = vpop.f32.mrb[0].mxu0
      %v1676 = vadd.f32 %v1492, %v1675
      %v1677 = vpop.f32.mrb[0].mxu0
      %1678 = vmatprep.mubr.f32.mxu0 0.0
      %1679 = vmatmul.mubr.f32.gmra.mrb[0].mxu0 %v1431
      %v1680 = vpop.f32.mrb[0].mxu0
      %v1681 = vadd.f32 %v1492, %v1680
      %v1682 = vpop.f32.mrb[0].mxu0
      %1683 = vmatprep.mubr.f32.mxu0 0.0
      %1684 = vmatmul.mubr.f32.gmra.mrb[0].mxu0 %v1432
      %v1685 = vpop.f32.mrb[0].mxu0
      %v1686 = vadd.f32 %v1492, %v1685
      %v1687 = vpop.f32.mrb[0].mxu0
      %1688 = vmatprep.mubr.f32.mxu0 0.0
      %1689 = vmatmul.mubr.f32.gmra.mrb[0].mxu0 %v1433
      %v1690 = vpop.f32.mrb[0].mxu0
      %v1691 = vadd.f32 %v1492, %v1690
      %v1692 = vpop.f32.mrb[0].mxu0
      %1693 = vmatprep.mubr.f32.mxu0 0.0
      %1694 = vmatmul.mubr.f32.gmra.mrb[0].mxu0 %v1434
      %v1695 = vpop.f32.mrb[0].mxu0
      %v1696 = vadd.f32 %v1492, %v1695
      %v1697 = vpop.f32.mrb[0].mxu0
      %1698 = vmatprep.mubr.f32.mxu0 0.0
      %1699 = vmatmul.mubr.f32.gmra.mrb[0].mxu0 %v1435
      %v1700 = vpop.f32.mrb[0].mxu0
      %v1701 = vadd.f32 %v1492, %v1700
      %v1702 = vpop.f32.mrb[0].mxu0
      %1703 = vmatprep.mubr.f32.mxu0 0.0
      %1704 = vmatmul.mubr.f32.gmra.mrb[0].mxu0 %v1436
      %v1705 = vpop.f32.mrb[0].mxu0
      %v1706 = vadd.f32 %v1492, %v1705
      %v1707 = vpop.f32.mrb[0].mxu0
      %1708 = vmatprep.mubr.f32.mxu0 0.0
      %1709 = vmatmul.mubr.f32.gmra.mrb[0].mxu0 %v1437
      %v1710 = vpop.f32.mrb[0].mxu0
      %v1711 = vadd.f32 %v1492, %v1710
      %v1712 = vpop.f32.mrb[0].mxu0
      %1713 = vmatprep.mubr.f32.mxu0 0.0
      %1714 = vmatmul.mubr.f32.gmra.mrb[0].mxu0 %v1438
      %v1715 = vpop.f32.mrb[0].mxu0
      %v1716 = vadd.f32 %v1492, %v1715
      %v1717 = vpop.f32.mrb[0].mxu0
      %1718 = vmatprep.mubr.f32.mxu0 0.0
      %1719 = vmatmul.mubr.f32.gmra.mrb[0].mxu0 %v1439
      %v1720 = vpop.f32.mrb[0].mxu0
      %v1721 = vadd.f32 %v1492, %v1720
      %v1722 = vpop.f32.mrb[0].mxu0
      %1723 = vmatprep.mubr.f32.mxu0 0.0
      %1724 = vmatmul.mubr.f32.gmra.mrb[0].mxu0 %v1440
      %v1725 = vpop.f32.mrb[0].mxu0
      %v1726 = vadd.f32 %v1492, %v1725
      %v1727 = vpop.f32.mrb[0].mxu0
      %1728 = vmatprep.mubr.f32.mxu0 0.0
      %1729 = vmatmul.mubr.f32.gmra.mrb[0].mxu0 %v1441
      %v1730 = vpop.f32.mrb[0].mxu0
      %v1731 = vadd.f32 %v1492, %v1730
      %v1732 = vpop.f32.mrb[0].mxu0
      %1733 = vmatprep.mubr.f32.mxu0 0.0
      %1734 = vmatmul.mubr.f32.gmra.mrb[0].mxu0 %v1442
      %v1735 = vpop.f32.mrb[0].mxu0
      %v1736 = vadd.f32 %v1492, %v1735
      %v1737 = vpop.f32.mrb[0].mxu0
      %1738 = vmatprep.mubr.f32.mxu0 0.0
      %1739 = vmatmul.mubr.f32.gmra.mrb[0].mxu0 %v1443
      %v1740 = vpop.f32.mrb[0].mxu0
      %v1741 = vadd.f32 %v1492, %v1740
      %v1742 = vpop.f32.mrb[0].mxu0
      %1743 = vmatprep.mubr.f32.mxu0 0.0
      %1744 = vmatmul.mubr.f32.gmra.mrb[0].mxu0 %v1444
      %v1745 = vpop.f32.mrb[0].mxu0
      %v1746 = vadd.f32 %v1492, %v1745
      %v1747 = vpop.f32.mrb[0].mxu0
      %1748 = vmatprep.mubr.f32.mxu0 0.0
      %1749 = vmatmul.mubr.f32.gmra.mrb[0].mxu0 %v1445
      %v1750 = vpop.f32.mrb[0].mxu0
      %v1751 = vadd.f32 %v1492, %v1750
      %v1752 = vpop.f32.mrb[0].mxu0
      %1753 = vmatprep.mubr.f32.mxu0 0.0
      %1754 = vmatmul.mubr.f32.gmra.mrb[0].mxu0 %v1446
      %v1755 = vpop.f32.mrb[0].mxu0
      %v1756 = vadd.f32 %v1492, %v1755
      %v1757 = vpop.f32.mrb[0].mxu0
      %1758 = vmatprep.mubr.f32.mxu0 0.0
      %1759 = vmatmul.mubr.f32.gmra.mrb[0].mxu0 %v1447
      %v1760 = vpop.f32.mrb[0].mxu0
      %v1761 = vadd.f32 %v1492, %v1760
      %v1762 = vpop.f32.mrb[0].mxu0
      %1763 = vmatprep.mubr.f32.mxu0 0.0
      %1764 = vmatmul.mubr.f32.gmra.mrb[0].mxu0 %v1448
      %v1765 = vpop.f32.mrb[0].mxu0
      %v1766 = vadd.f32 %v1492, %v1765
      %v1767 = vpop.f32.mrb[0].mxu0
      %1768 = vmatprep.mubr.f32.mxu0 0.0
      %1769 = vmatmul.mubr.f32.gmra.mrb[0].mxu0 %v1449
      %v1770 = vpop.f32.mrb[0].mxu0
      %v1771 = vadd.f32 %v1492, %v1770
      %v1772 = vpop.f32.mrb[0].mxu0
      %1773 = vmatprep.mubr.f32.mxu0 0.0
      %1774 = vmatmul.mubr.f32.gmra.mrb[0].mxu0 %v1450
      %v1775 = vpop.f32.mrb[0].mxu0
      %v1776 = vadd.f32 %v1492, %v1775
      %v1777 = vpop.f32.mrb[0].mxu0
      %1778 = vmatprep.mubr.f32.mxu0 0.0
      %1779 = vmatmul.mubr.f32.gmra.mrb[0].mxu0 %v1451
      %v1780 = vpop.f32.mrb[0].mxu0
      %v1781 = vadd.f32 %v1492, %v1780
      %v1782 = vpop.f32.mrb[0].mxu0
      %1783 = vmatprep.mubr.f32.mxu0 0.0
      %1784 = vmatmul.mubr.f32.gmra.mrb[0].mxu0 %v1452
      %v1785 = vpop.f32.mrb[0].mxu0
      %v1786 = vadd.f32 %v1492, %v1785
      %v1787 = vpop.f32.mrb[0].mxu0
      %1788 = vmatprep.mubr.f32.mxu0 0.0
      %1789 = vmatmul.mubr.f32.gmra.mrb[0].mxu0 %v1453
      %v1790 = vpop.f32.mrb[0].mxu0
      %v1791 = vadd.f32 %v1492, %v1790
      %v1792 = vpop.f32.mrb[0].mxu0
      %1793 = vmatprep.mubr.f32.mxu0 0.0
      %1794 = vmatmul.mubr.f32.gmra.mrb[0].mxu0 %v1454
      %v1795 = vpop.f32.mrb[0].mxu0
      %v1796 = vadd.f32 %v1492, %v1795
      %v1797 = vpop.f32.mrb[0].mxu0
      %1798 = vmatprep.mubr.f32.mxu0 0.0
      %1799 = vmatmul.mubr.f32.gmra.mrb[0].mxu0 %v1455
      %v1800 = vpop.f32.mrb[0].mxu0
      %v1801 = vadd.f32 %v1492, %v1800
      %v1802 = vpop.f32.mrb[0].mxu0
      %1803 = vmatprep.mubr.f32.mxu0 0.0
      %1804 = vmatmul.mubr.f32.gmra.mrb[0].mxu0 %v1456
      %v1805 = vpop.f32.mrb[0].mxu0
      %v1806 = vadd.f32 %v1492, %v1805
      %v1807 = vpop.f32.mrb[0].mxu0
      %1808 = vmatprep.mubr.f32.mxu0 0.0
      %1809 = vmatmul.mubr.f32.gmra.mrb[0].mxu0 %v1457
      %v1810 = vpop.f32.mrb[0].mxu0
      %v1811 = vadd.f32 %v1492, %v1810
      %v1812 = vpop.f32.mrb[0].mxu0
      %1813 = vmatprep.mubr.f32.mxu0 0.0
      %1814 = vmatmul.mubr.f32.gmra.mrb[0].mxu0 %v1458
      %v1815 = vpop.f32.mrb[0].mxu0
      %v1816 = vadd.f32 %v1492, %v1815
      %v1817 = vpop.f32.mrb[0].mxu0
      %1818 = vmatprep.mubr.f32.mxu0 0.0
      %1819 = vmatmul.mubr.f32.gmra.mrb[0].mxu0 %v1459
      %v1820 = vpop.f32.mrb[0].mxu0
      %v1821 = vadd.f32 %v1492, %v1820
      %v1822 = vpop.f32.mrb[0].mxu0
      %1823 = vmatprep.mubr.f32.mxu0 0.0
      %1824 = vmatmul.mubr.f32.gmra.mrb[0].mxu0 %v1460
      %v1825 = vpop.f32.mrb[0].mxu0
      %v1826 = vadd.f32 %v1492, %v1825
      %v1827 = vpop.f32.mrb[0].mxu0
      %1828 = vmatprep.mubr.f32.mxu0 0.0
      %1829 = vmatmul.mubr.f32.gmra.mrb[0].mxu0 %v1461
      %v1830 = vpop.f32.mrb[0].mxu0
      %v1831 = vadd.f32 %v1492, %v1830
      %v1832 = vpop.f32.mrb[0].mxu0
      %1833 = vmatprep.mubr.f32.mxu0 0.0
      %1834 = vmatmul.mubr.f32.gmra.mrb[0].mxu0 %v1462
      %v1835 = vpop.f32.mrb[0].mxu0
      %v1836 = vadd.f32 %v1492, %v1835
      %v1837 = vpop.f32.mrb[0].mxu0
      %1838 = vmatprep.mubr.f32.mxu0 0.0
      %1839 = vmatmul.mubr.f32.gmra.mrb[0].mxu0 %v1463
      %v1840 = vpop.f32.mrb[0].mxu0
      %v1841 = vadd.f32 %v1492, %v1840
      %v1842 = vpop.f32.mrb[0].mxu0
      %1843 = vmatprep.mubr.f32.mxu0 0.0
      %1844 = vmatmul.mubr.f32.gmra.mrb[0].mxu0 %v1464
      %v1845 = vpop.f32.mrb[0].mxu0
      %v1846 = vadd.f32 %v1492, %v1845
      %v1847 = vpop.f32.mrb[0].mxu0
      %1848 = vmatprep.mubr.f32.mxu0 0.0
      %1849 = vmatmul.mubr.f32.gmra.mrb[0].mxu0 %v1465
      %v1850 = vpop.f32.mrb[0].mxu0
      %v1851 = vadd.f32 %v1492, %v1850
      %v1852 = vpop.f32.mrb[0].mxu0
      %1853 = vmatprep.mubr.f32.mxu0 0.0
      %1854 = vmatmul.mubr.f32.gmra.mrb[0].mxu0 %v1466
      %v1855 = vpop.f32.mrb[0].mxu0
      %v1856 = vadd.f32 %v1492, %v1855
      %v1857 = vpop.f32.mrb[0].mxu0
      %1858 = vmatprep.mubr.f32.mxu0 0.0
      %1859 = vmatmul.mubr.f32.gmra.mrb[0].mxu0 %v1467
      %v1860 = vpop.f32.mrb[0].mxu0
      %v1861 = vadd.f32 %v1492, %v1860
      %v1862 = vpop.f32.mrb[0].mxu0
      %1863 = vmatprep.mubr.f32.mxu0 0.0
      %1864 = vmatmul.mubr.f32.gmra.mrb[0].mxu0 %v1468
      %v1865 = vpop.f32.mrb[0].mxu0
      %v1866 = vadd.f32 %v1492, %v1865
      %v1867 = vpop.f32.mrb[0].mxu0
      %1868 = vmatprep.mubr.f32.mxu0 0.0
      %1869 = vmatmul.mubr.f32.gmra.mrb[0].mxu0 %v1469
      %v1870 = vpop.f32.mrb[0].mxu0
      %v1871 = vadd.f32 %v1492, %v1870
      %v1872 = vpop.f32.mrb[0].mxu0
      %1873 = vmatprep.mubr.f32.mxu0 0.0
      %1874 = vmatmul.mubr.f32.gmra.mrb[0].mxu0 %v1470
      %v1875 = vpop.f32.mrb[0].mxu0
      %v1876 = vadd.f32 %v1492, %v1875
      %v1877 = vpop.f32.mrb[0].mxu0
      %1878 = vdwg.mxu0
      %vm1879 = vcmask 130048
      %1880 = vst.msk [vmem:[%s280] sm:$0xff] %vm1879, %v1561
      %1881 = vst.msk [vmem:[%s280 + $0x8] sm:$0xff] %vm1879, %v1566
      %1882 = vst.msk [vmem:[%s280 + $0x10] sm:$0xff] %vm1879, %v1571
      %1883 = vst.msk [vmem:[%s280 + $0x18] sm:$0xff] %vm1879, %v1576
      %1884 = vst.msk [vmem:[%s280 + $0x20] sm:$0xff] %vm1879, %v1581
      %1885 = vst.msk [vmem:[%s280 + $0x28] sm:$0xff] %vm1879, %v1586
      %1886 = vst.msk [vmem:[%s280 + $0x30] sm:$0xff] %vm1879, %v1591
      %1887 = vst.msk [vmem:[%s280 + $0x38] sm:$0xff] %vm1879, %v1596
      %1888 = vst.msk [vmem:[%s280 + $0x40] sm:$0xff] %vm1879, %v1601
      %1889 = vst.msk [vmem:[%s280 + $0x48] sm:$0xff] %vm1879, %v1606
      %1890 = vst.msk [vmem:[%s280 + $0x50] sm:$0xff] %vm1879, %v1611
      %1891 = vst.msk [vmem:[%s280 + $0x58] sm:$0xff] %vm1879, %v1616
      %1892 = vst.msk [vmem:[%s280 + $0x60] sm:$0xff] %vm1879, %v1621
      %1893 = vst.msk [vmem:[%s280 + $0x68] sm:$0xff] %vm1879, %v1626
      %1894 = vst.msk [vmem:[%s280 + $0x70] sm:$0xff] %vm1879, %v1631
      %1895 = vst.msk [vmem:[%s280 + $0x78] sm:$0xff] %vm1879, %v1636
      %1896 = vst.msk [vmem:[%s280 + $0x80] sm:$0xff] %vm1879, %v1641
      %1897 = vst.msk [vmem:[%s280 + $0x88] sm:$0xff] %vm1879, %v1646
      %1898 = vst.msk [vmem:[%s280 + $0x90] sm:$0xff] %vm1879, %v1651
      %1899 = vst.msk [vmem:[%s280 + $0x98] sm:$0xff] %vm1879, %v1656
      %1900 = vst.msk [vmem:[%s280 + $0xa0] sm:$0xff] %vm1879, %v1661
      %1901 = vst.msk [vmem:[%s280 + $0xa8] sm:$0xff] %vm1879, %v1666
      %1902 = vst.msk [vmem:[%s280 + $0xb0] sm:$0xff] %vm1879, %v1671
      %1903 = vst.msk [vmem:[%s280 + $0xb8] sm:$0xff] %vm1879, %v1676
      %1904 = vst.msk [vmem:[%s280 + $0xc0] sm:$0xff] %vm1879, %v1681
      %1905 = vst.msk [vmem:[%s280 + $0xc8] sm:$0xff] %vm1879, %v1686
      %1906 = vst.msk [vmem:[%s280 + $0xd0] sm:$0xff] %vm1879, %v1691
      %1907 = vst.msk [vmem:[%s280 + $0xd8] sm:$0xff] %vm1879, %v1696
      %1908 = vst.msk [vmem:[%s280 + $0xe0] sm:$0xff] %vm1879, %v1701
      %1909 = vst.msk [vmem:[%s280 + $0xe8] sm:$0xff] %vm1879, %v1706
      %1910 = vst.msk [vmem:[%s280 + $0xf0] sm:$0xff] %vm1879, %v1711
      %1911 = vst.msk [vmem:[%s280 + $0xf8] sm:$0xff] %vm1879, %v1716
      %1912 = vst.msk [vmem:[%s280 + $0x100] sm:$0xff] %vm1879, %v1721
      %1913 = vst.msk [vmem:[%s280 + $0x108] sm:$0xff] %vm1879, %v1726
      %1914 = vst.msk [vmem:[%s280 + $0x110] sm:$0xff] %vm1879, %v1731
      %1915 = vst.msk [vmem:[%s280 + $0x118] sm:$0xff] %vm1879, %v1736
      %1916 = vst.msk [vmem:[%s280 + $0x120] sm:$0xff] %vm1879, %v1741
      %1917 = vst.msk [vmem:[%s280 + $0x128] sm:$0xff] %vm1879, %v1746
      %1918 = vst.msk [vmem:[%s280 + $0x130] sm:$0xff] %vm1879, %v1751
      %1919 = vst.msk [vmem:[%s280 + $0x138] sm:$0xff] %vm1879, %v1756
      %1920 = vst.msk [vmem:[%s280 + $0x140] sm:$0xff] %vm1879, %v1761
      %1921 = vst.msk [vmem:[%s280 + $0x148] sm:$0xff] %vm1879, %v1766
      %1922 = vst.msk [vmem:[%s280 + $0x150] sm:$0xff] %vm1879, %v1771
      %1923 = vst.msk [vmem:[%s280 + $0x158] sm:$0xff] %vm1879, %v1776
      %1924 = vst.msk [vmem:[%s280 + $0x160] sm:$0xff] %vm1879, %v1781
      %1925 = vst.msk [vmem:[%s280 + $0x168] sm:$0xff] %vm1879, %v1786
      %1926 = vst.msk [vmem:[%s280 + $0x170] sm:$0xff] %vm1879, %v1791
      %1927 = vst.msk [vmem:[%s280 + $0x178] sm:$0xff] %vm1879, %v1796
      %1928 = vst.msk [vmem:[%s280 + $0x180] sm:$0xff] %vm1879, %v1801
      %1929 = vst.msk [vmem:[%s280 + $0x188] sm:$0xff] %vm1879, %v1806
      %1930 = vst.msk [vmem:[%s280 + $0x190] sm:$0xff] %vm1879, %v1811
      %1931 = vst.msk [vmem:[%s280 + $0x198] sm:$0xff] %vm1879, %v1816
      %1932 = vst.msk [vmem:[%s280 + $0x1a0] sm:$0xff] %vm1879, %v1821
      %1933 = vst.msk [vmem:[%s280 + $0x1a8] sm:$0xff] %vm1879, %v1826
      %1934 = vst.msk [vmem:[%s280 + $0x1b0] sm:$0xff] %vm1879, %v1831
      %1935 = vst.msk [vmem:[%s280 + $0x1b8] sm:$0xff] %vm1879, %v1836
      %1936 = vst.msk [vmem:[%s280 + $0x1c0] sm:$0xff] %vm1879, %v1841
      %1937 = vst.msk [vmem:[%s280 + $0x1c8] sm:$0xff] %vm1879, %v1846
      %1938 = vst.msk [vmem:[%s280 + $0x1d0] sm:$0xff] %vm1879, %v1851
      %1939 = vst.msk [vmem:[%s280 + $0x1d8] sm:$0xff] %vm1879, %v1856
      %1940 = vst.msk [vmem:[%s280 + $0x1e0] sm:$0xff] %vm1879, %v1861
      %1941 = vst.msk [vmem:[%s280 + $0x1e8] sm:$0xff] %vm1879, %v1866
      %1942 = vst.msk [vmem:[%s280 + $0x1f0] sm:$0xff] %vm1879, %v1871
      %1943 = vst.msk [vmem:[%s280 + $0x1f8] sm:$0xff] %vm1879, %v1876
      %s1944 = smul.u32 64, %s18
      %p1945 = scmp.lt.s32.totalorder %s1944, 255
      %s1946 = scalar_select %p1945, %s1944, 255
      %s1947 = smul.addr %s1946, 8
      %s1948 = scalar_lea.vmem %s7, %s1947
      // Predicated region
      $region49: #{tpu_custom_call.1} parent=47 // pred_check
        %p1949 = pneg %p188
      $region50: #{tpu_custom_call.1} parent=47 // pred_check_branch
        %1951 = sbr.rel (%p1949) target = $region52
      $region51: #{tpu_custom_call.1} parent=47 // pred_region
        %s1952 = smul.u32 64, %s18
      $region52: #{tpu_custom_call.1} parent=47 // pred_fallthru
        _
    $region48: #{tpu_custom_call.1} parent=5 // pred_fallthru
      _
    %p1953 = scmp.le.s32.totalorder 2, %s13
    // Predicated region
    $region53: #{tpu_custom_call.1} parent=5 // pred_check
      %p1954 = pneg %p1953
    $region54: #{tpu_custom_call.1} parent=5 // pred_check_branch
      %1956 = sbr.rel (%p1954) target = $region56
    $region55: #{tpu_custom_call.1} parent=5 // pred_region
      %s1957 = ssub.s32 %s13, 2
      // Predicated region
      $region57: #{tpu_custom_call.1} parent=55 // pred_check
        %p1958 = pneg %p194
      $region58: #{tpu_custom_call.1} parent=55 // pred_check_branch
        %1960 = sbr.rel (%p1958) target = $region60
      $region59: #{tpu_custom_call.1} parent=55 // pred_region
        %s1961 = smul.u32 64, %s19
        %p1962 = scmp.lt.s32.totalorder %s1961, 255
        %s1963 = scalar_select %p1962, %s1961, 255
        %s1964 = smul.addr %s1963, 8
        %s1965 = scalar_lea.vmem %s7, %s1964
      $region60: #{tpu_custom_call.1} parent=55 // pred_fallthru
        _
    $region56: #{tpu_custom_call.1} parent=5 // pred_fallthru
      _
  $region6: #{tpu_custom_call.1} parent=0 // loop_footer
    %s17 = sadd.s32 1, %s13
  $region7: #{tpu_custom_call.1} parent=0 // loop_footer_branch
    %12 = sbr.rel target = $region3
  $region8: #{tpu_custom_call.1} parent=0 // loop_exit
    _

</llo_original>
